<compile_context>
chip_gen: v7x
topology: tpu7x:2x2x1
jax: 0.10.0
libtpu: 0.0.40
codegen_flags: <defaults>
</compile_context>

<pallas_src>
from functools import partial

import jax
import jax.numpy as jnp
from jax.experimental import pallas as pl
from jax.experimental.pallas import tpu as pltpu


def mlsa_kernel(x_ref, pos_ref, wtok_ref, wqkv_ref, wp_ref, wout_ref, o_ref,
                *, num_layers, num_heads, head_dim):
    """One grid step processes a whole (bb, T, V) batch block.

    Weight layouts (pre-transposed / pre-scaled / pre-cast in the wrapper):
      x_ref   : (bb, T, V)       float32 input block
      pos_ref : (T, E)           positional embeddings (natural shape)
      wtok_ref: (V, E)           token embedding^T        * V**-0.5
      wqkv_ref: (L, 3H, E, Dh)   fused per-head Q|K|V proj (Q also * Dh**-0.5)
      wp_ref  : (L, H, Dh, E)    per-head output proj     * inner**-0.5
      wout_ref: (E, V)           readout^T                * E**-0.5
    """
    bb, T, V = x_ref.shape
    E = pos_ref.shape[-1]
    H, Dh = num_heads, head_dim
    f32 = jnp.float32
    wdt = wtok_ref.dtype            # bf16 on the fast path, f32 on the check path

    # ---- token embedding: fold the batch into the matmul M (sublane) dim ----
    x = x_ref[...].reshape(bb * T, V).astype(wdt)
    h = jnp.dot(x, wtok_ref[...], preferred_element_type=f32)        # (bb*T, E) f32
    # positional embedding broadcast over the batch block; bb*T -> (bb, T) is an
    # 8-aligned sublane split, so the reshapes are layout-preserving.
    h = (h.reshape(bb, T, E) + pos_ref[...][None]).reshape(bb * T, E)

    for l in range(num_layers):
        # ---- fused Q/K/V projection: one batched dot over a (3H,) batch dim ----
        hb = jnp.broadcast_to(h.astype(wdt)[None], (3 * H, bb * T, E))
        qkv = jax.lax.dot_general(hb, wqkv_ref[l],
                                  (((2,), (1,)), ((0,), (0,))),
                                  preferred_element_type=f32)        # (3H, bb*T, Dh)
        # slicing the leading batch dim is free (no lane/sublane shuffle);
        # (H, bb*T, Dh) -> (H*bb, T, Dh) is an 8-aligned sublane split.
        q = qkv[0:H].reshape(H * bb, T, Dh)
        k = qkv[H:2 * H].reshape(H * bb, T, Dh)
        v = qkv[2 * H:3 * H].reshape(H * bb, T, Dh)

        # ---- attention, batched over (head, batch); kept in f32 ----
        s = jax.lax.dot_general(q, k, (((2,), (2,)), ((0,), (0,))),
                                preferred_element_type=f32)          # (H*bb, T, T)
        s = s - jnp.max(s, axis=-1, keepdims=True)
        p = jnp.exp(s)
        p = p / jnp.sum(p, axis=-1, keepdims=True)                   # exact softmax
        a = jax.lax.dot_general(p, v, (((2,), (1,)), ((0,), (0,))),
                                preferred_element_type=f32)          # (H*bb, T, Dh)

        # ---- head merge + output projection (no lane shuffles) ----
        # TODO(synk): a single dot_general contracting (head, Dh) jointly
        # (dimension_numbers=(((0, 2), (0, 1)), ((), ()))) would fold the head
        # reduction into the MXU accumulator, but multi-contracting-dim dots do
        # not lower reliably in Mosaic; keep the batched per-head projection
        # plus a cheap (H-1)-add reduction instead.
        a = a.reshape(H, bb * T, Dh).astype(wdt)
        part = jax.lax.dot_general(a, wp_ref[l], (((2,), (1,)), ((0,), (0,))),
                                   preferred_element_type=f32)       # (H, bb*T, E)
        h = jnp.sum(part, axis=0)                                    # (bb*T, E)

    logits = jnp.dot(h.astype(wdt), wout_ref[...], preferred_element_type=f32)
    # TODO(synk): V=32 (<128 lanes) keeps this a masked store; padding V to 128
    # (or writing a (bb, T*V) slab) only becomes worthwhile at larger sizes.
    o_ref[...] = logits.reshape(bb, T, V).astype(o_ref.dtype)


def _default_batch_block(B):
    """B//2 on v7x (feed both TensorCores via the parallel grid axis), else B."""
    try:
        kind = jax.devices()[0].device_kind.lower()
    except Exception:
        return B
    if ("v7" in kind or "7x" in kind) and B % 2 == 0 and B >= 2:
        return B // 2
    return B


def mlsa_forward(x, params, num_heads, *, batch_block=None,
                 weight_dtype=jnp.bfloat16):
    B, T, V = x.shape
    E = params["wtok"].shape[0]
    L, inner, _ = params["wk"].shape
    H = num_heads
    Dh = inner // H

    bb = _default_batch_block(B) if batch_block is None else batch_block
    assert B % bb == 0, "batch_block must divide B"
    num_blocks = B // bb

    # ---- grid-invariant weight preprocessing (scales folded, cast once) ----
    f32 = jnp.float32
    scale_e = E ** -0.5
    wtok_s = (params["wtok"].T.astype(f32) * (V ** -0.5)).astype(weight_dtype)  # (V, E)
    pos_t = params["pos"][:T].astype(f32)                                        # (T, E)

    def per_head(w, scale):
        # (L, inner, E) -> (L, H, Dh, E) -> (L, H, E, Dh), scaled
        return jnp.transpose(w.astype(f32).reshape(L, H, Dh, E), (0, 1, 3, 2)) * scale

    wq_h = per_head(params["wq"], scale_e * (Dh ** -0.5))    # Dh**-0.5 folded into Q
    wk_h = per_head(params["wk"], scale_e)
    wv_h = per_head(params["wv"], scale_e)
    # fused QKV weight: (L, 3H, E, Dh) with q heads first, then k, then v
    wqkv = jnp.concatenate([wq_h, wk_h, wv_h], axis=1).astype(weight_dtype)
    # (L, E, inner) -> (L, E, H, Dh) -> (L, H, Dh, E), scaled by inner**-0.5
    wp_h = (jnp.transpose(params["wp"].astype(f32).reshape(L, E, H, Dh), (0, 2, 3, 1))
            * (inner ** -0.5)).astype(weight_dtype)
    wout_s = (params["wout"].T.astype(f32) * scale_e).astype(weight_dtype)       # (E, V)

    kernel = partial(mlsa_kernel, num_layers=L, num_heads=H, head_dim=Dh)

    def invariant(shape):
        n = len(shape)
        # TODO(synk): pipeline_mode=pl.Buffered(1) would single-buffer these
        # grid-invariant blocks; omitted for lowering portability.  At realistic
        # (non-toy) L/E the layer axis should move onto the grid (or a manual
        # per-layer DMA) instead of keeping all layers resident in VMEM.
        return pl.BlockSpec(shape, lambda g, n=n: (0,) * n)

    return pl.pallas_call(
        kernel,
        out_shape=jax.ShapeDtypeStruct((B, T, V), x.dtype),
        grid_spec=pltpu.PrefetchScalarGridSpec(
            num_scalar_prefetch=0,
            grid=(num_blocks,),
            in_specs=[
                pl.BlockSpec((bb, T, V), lambda g: (g, 0, 0)),   # x
                invariant((T, E)),                               # pos
                invariant((V, E)),                               # wtok^T * V**-0.5
                invariant((L, 3 * H, E, Dh)),                    # fused QKV weights
                invariant((L, H, Dh, E)),                        # wp
                invariant((E, V)),                               # wout^T * E**-0.5
            ],
            out_specs=pl.BlockSpec((bb, T, V), lambda g: (g, 0, 0)),
        ),
        compiler_params=pltpu.CompilerParams(
            dimension_semantics=("parallel",),
            vmem_limit_bytes=32 * 1024 * 1024,   # explicit; safe on v5e/v6e/v7x
        ),
    )(x, pos_t, wtok_s, wqkv, wp_h, wout_s)


def mlsa_reference(x, params, num_heads):
    """Pure-JAX reference reproducing the PyTorch forward exactly (f32, exact softmax)."""
    B, T, V = x.shape
    E = params["wtok"].shape[0]
    L, inner, _ = params["wk"].shape
    Dh = inner // num_heads

    h = x @ params["wtok"].T * (V ** -0.5) + params["pos"][:T]
    for l in range(L):
        scale = E ** -0.5

        def split(w):
            y = (h @ w.T) * scale
            return y.reshape(B, T, num_heads, Dh).transpose(0, 2, 1, 3)

        q = split(params["wq"][l])
        k = split(params["wk"][l])
        v = split(params["wv"][l])
        w = jnp.einsum("bhtd,bhsd->bhts", q, k) * (Dh ** -0.5)
        w = jax.nn.softmax(w, axis=-1)
        out = jnp.einsum("bhts,bhsd->bhtd", w, v)
        out = out.transpose(0, 2, 1, 3).reshape(B, T, inner)
        h = out @ params["wp"][l].T * (inner ** -0.5)
    return h @ params["wout"].T * (E ** -0.5)


if __name__ == "__main__":
    # Small configuration consistent with the module.
    vocab_size = 32
    block_size = 16
    embedding_dim = 32
    num_heads = 4
    num_layers = 2
    B, T = 2, 8
    inner = embedding_dim  # head_dim * num_heads

    key = jax.random.PRNGKey(0)
    ks = jax.random.split(key, 8)
    params = {
        "wtok": jax.random.normal(ks[0], (embedding_dim, vocab_size), jnp.float32),
        "pos":  jax.random.normal(ks[1], (block_size, embedding_dim), jnp.float32),
        "wk":   jax.random.normal(ks[2], (num_layers, inner, embedding_dim), jnp.float32),
        "wq":   jax.random.normal(ks[3], (num_layers, inner, embedding_dim), jnp.float32),
        "wv":   jax.random.normal(ks[4], (num_layers, inner, embedding_dim), jnp.float32),
        "wp":   jax.random.normal(ks[5], (num_layers, embedding_dim, inner), jnp.float32),
        "wout": jax.random.normal(ks[6], (vocab_size, embedding_dim), jnp.float32),
    }
    x = jax.random.normal(ks[7], (B, T, vocab_size), jnp.float32)

    ref = mlsa_reference(x, params, num_heads)

    # 1) f32-weight path: validates the kernel logic (exact softmax, f32 matmuls).
    out_f32 = jax.block_until_ready(
        mlsa_forward(x, params, num_heads, weight_dtype=jnp.float32))
    assert out_f32.shape == (B, T, vocab_size)
    assert jnp.allclose(out_f32, ref, rtol=1e-2, atol=1e-2), (
        f"f32 path max abs diff {jnp.max(jnp.abs(out_f32 - ref))}")

    # 2) bf16-weight fast path: looser tolerance covers bf16 weight/operand
    #    quantization of the MXU inputs (accumulation stays f32).
    out_bf16 = jax.block_until_ready(mlsa_forward(x, params, num_heads))
    assert out_bf16.shape == (B, T, vocab_size)
    assert jnp.allclose(out_bf16, ref, rtol=1e-1, atol=1e-1), (
        f"bf16 path max abs diff {jnp.max(jnp.abs(out_bf16 - ref))}")

    print("KERNEL_OK")
</pallas_src>

<mosaic_0001>
module attributes {stable_mosaic.version = 11 : i64} {
  func.func @mlsa_kernel(%arg0: i32, %arg1: memref<2x8x32xf32, #tpu.memory_space<vmem>>, %arg2: memref<8x32xf32, #tpu.memory_space<vmem>>, %arg3: memref<32x32xf32, #tpu.memory_space<vmem>>, %arg4: memref<2x12x32x8xf32, #tpu.memory_space<vmem>>, %arg5: memref<2x4x8x32xf32, #tpu.memory_space<vmem>>, %arg6: memref<32x32xf32, #tpu.memory_space<vmem>>, %arg7: memref<2x8x32xf32, #tpu.memory_space<vmem>>) attributes {dimension_semantics = [#tpu.dimension_semantics<parallel>], iteration_bounds = array<i64: 1>, scalar_prefetch = 0 : i64, scratch_operands = 0 : i64, tpu.core_type = #tpu.core_type<tc>, window_params = [{transform_indices = @transform_0, window_bounds = array<i64: 2, 8, 32>}, {pipeline_mode = #tpu.pipeline_mode<synchronous>, transform_indices = @transform_1, window_bounds = array<i64: 8, 32>}, {pipeline_mode = #tpu.pipeline_mode<synchronous>, transform_indices = @transform_2, window_bounds = array<i64: 32, 32>}, {pipeline_mode = #tpu.pipeline_mode<synchronous>, transform_indices = @transform_3, window_bounds = array<i64: 2, 12, 32, 8>}, {pipeline_mode = #tpu.pipeline_mode<synchronous>, transform_indices = @transform_4, window_bounds = array<i64: 2, 4, 8, 32>}, {pipeline_mode = #tpu.pipeline_mode<synchronous>, transform_indices = @transform_5, window_bounds = array<i64: 32, 32>}, {transform_indices = @transform_6, window_bounds = array<i64: 2, 8, 32>}]} {
    %c0 = arith.constant 0 : index
    %c0_0 = arith.constant 0 : index
    %c0_1 = arith.constant 0 : index
    %0 = vector.load %arg1[%c0, %c0_0, %c0_1] : memref<2x8x32xf32, #tpu.memory_space<vmem>>, vector<2x8x32xf32>
    %1 = vector.shape_cast %0 : vector<2x8x32xf32> to vector<16x32xf32>
    %c0_2 = arith.constant 0 : index
    %c0_3 = arith.constant 0 : index
    %2 = vector.load %arg3[%c0_2, %c0_3] : memref<32x32xf32, #tpu.memory_space<vmem>>, vector<32x32xf32>
    %cst = arith.constant dense<0.000000e+00> : vector<16x32xf32>
    %3 = tpu.matmul %1, %2, %cst {dimension_numbers = #tpu.dot_dimension_numbers<[1], [0], [0], [1], [0, 0, 1, 1], [], []>} : vector<16x32xf32>, vector<32x32xf32>, vector<16x32xf32> -> vector<16x32xf32>
    %4 = vector.shape_cast %3 : vector<16x32xf32> to vector<2x8x32xf32>
    %c0_4 = arith.constant 0 : index
    %c0_5 = arith.constant 0 : index
    %5 = vector.load %arg2[%c0_4, %c0_5] : memref<8x32xf32, #tpu.memory_space<vmem>>, vector<8x32xf32>
    %6 = vector.shape_cast %5 : vector<8x32xf32> to vector<1x8x32xf32>
    %7 = vector.broadcast %6 : vector<1x8x32xf32> to vector<2x8x32xf32>
    %8 = arith.addf %4, %7 : vector<2x8x32xf32>
    %9 = vector.shape_cast %8 : vector<2x8x32xf32> to vector<16x32xf32>
    %10 = vector.shape_cast %9 : vector<16x32xf32> to vector<1x16x32xf32>
    %11 = vector.shape_cast %10 : vector<1x16x32xf32> to vector<1x16x32xf32>
    %12 = vector.broadcast %11 : vector<1x16x32xf32> to vector<12x16x32xf32>
    %c0_6 = arith.constant 0 : index
    %c0_7 = arith.constant 0 : index
    %c0_8 = arith.constant 0 : index
    %c0_9 = arith.constant 0 : index
    %13 = vector.load %arg4[%c0_6, %c0_7, %c0_8, %c0_9] : memref<2x12x32x8xf32, #tpu.memory_space<vmem>>, vector<1x12x32x8xf32>
    %14 = vector.shape_cast %13 : vector<1x12x32x8xf32> to vector<12x32x8xf32>
    %cst_10 = arith.constant dense<0.000000e+00> : vector<12x16x8xf32>
    %15 = tpu.matmul %12, %14, %cst_10 {dimension_numbers = #tpu.dot_dimension_numbers<[2], [1], [1], [2], [0, 0, 0, 1, 1, 2], [0], [0]>} : vector<12x16x32xf32>, vector<12x32x8xf32>, vector<12x16x8xf32> -> vector<12x16x8xf32>
    %16 = vector.extract_strided_slice %15 {offsets = [0, 0, 0], sizes = [4, 16, 8], strides = [1, 1, 1]} : vector<12x16x8xf32> to vector<4x16x8xf32>
    %17 = vector.shape_cast %16 : vector<4x16x8xf32> to vector<8x8x8xf32>
    %18 = vector.extract_strided_slice %15 {offsets = [4, 0, 0], sizes = [4, 16, 8], strides = [1, 1, 1]} : vector<12x16x8xf32> to vector<4x16x8xf32>
    %19 = vector.shape_cast %18 : vector<4x16x8xf32> to vector<8x8x8xf32>
    %20 = vector.extract_strided_slice %15 {offsets = [8, 0, 0], sizes = [4, 16, 8], strides = [1, 1, 1]} : vector<12x16x8xf32> to vector<4x16x8xf32>
    %21 = vector.shape_cast %20 : vector<4x16x8xf32> to vector<8x8x8xf32>
    %cst_11 = arith.constant dense<0.000000e+00> : vector<8x8x8xf32>
    %22 = tpu.matmul %17, %19, %cst_11 {dimension_numbers = #tpu.dot_dimension_numbers<[2], [2], [1], [1], [0, 0, 0, 1, 1, 1], [0], [0]>} : vector<8x8x8xf32>, vector<8x8x8xf32>, vector<8x8x8xf32> -> vector<8x8x8xf32>
    %cst_12 = arith.constant dense<0xFF800000> : vector<8x8xf32>
    %23 = vector.multi_reduction <maximumf>, %22, %cst_12 [2] : vector<8x8x8xf32> to vector<8x8xf32>
    %24 = vector.shape_cast %23 : vector<8x8xf32> to vector<8x8x1xf32>
    %25 = vector.broadcast %24 : vector<8x8x1xf32> to vector<8x8x8xf32>
    %26 = arith.subf %22, %25 : vector<8x8x8xf32>
    %27 = math.exp %26 : vector<8x8x8xf32>
    %cst_13 = arith.constant dense<0.000000e+00> : vector<8x8xf32>
    %28 = vector.multi_reduction <add>, %27, %cst_13 [2] : vector<8x8x8xf32> to vector<8x8xf32>
    %29 = vector.shape_cast %28 : vector<8x8xf32> to vector<8x8x1xf32>
    %30 = vector.broadcast %29 : vector<8x8x1xf32> to vector<8x8x8xf32>
    %31 = arith.divf %27, %30 : vector<8x8x8xf32>
    %cst_14 = arith.constant dense<0.000000e+00> : vector<8x8x8xf32>
    %32 = tpu.matmul %31, %21, %cst_14 {dimension_numbers = #tpu.dot_dimension_numbers<[2], [1], [1], [2], [0, 0, 0, 1, 1, 2], [0], [0]>} : vector<8x8x8xf32>, vector<8x8x8xf32>, vector<8x8x8xf32> -> vector<8x8x8xf32>
    %33 = vector.shape_cast %32 : vector<8x8x8xf32> to vector<4x16x8xf32>
    %c0_15 = arith.constant 0 : index
    %c0_16 = arith.constant 0 : index
    %c0_17 = arith.constant 0 : index
    %c0_18 = arith.constant 0 : index
    %34 = vector.load %arg5[%c0_15, %c0_16, %c0_17, %c0_18] : memref<2x4x8x32xf32, #tpu.memory_space<vmem>>, vector<1x4x8x32xf32>
    %35 = vector.shape_cast %34 : vector<1x4x8x32xf32> to vector<4x8x32xf32>
    %cst_19 = arith.constant dense<0.000000e+00> : vector<4x16x32xf32>
    %36 = tpu.matmul %33, %35, %cst_19 {dimension_numbers = #tpu.dot_dimension_numbers<[2], [1], [1], [2], [0, 0, 0, 1, 1, 2], [0], [0]>} : vector<4x16x8xf32>, vector<4x8x32xf32>, vector<4x16x32xf32> -> vector<4x16x32xf32>
    %cst_20 = arith.constant dense<0.000000e+00> : vector<16x32xf32>
    %37 = vector.multi_reduction <add>, %36, %cst_20 [0] : vector<4x16x32xf32> to vector<16x32xf32>
    %38 = vector.shape_cast %37 : vector<16x32xf32> to vector<1x16x32xf32>
    %39 = vector.shape_cast %38 : vector<1x16x32xf32> to vector<1x16x32xf32>
    %40 = vector.broadcast %39 : vector<1x16x32xf32> to vector<12x16x32xf32>
    %c1 = arith.constant 1 : index
    %c0_21 = arith.constant 0 : index
    %c0_22 = arith.constant 0 : index
    %c0_23 = arith.constant 0 : index
    %41 = vector.load %arg4[%c1, %c0_21, %c0_22, %c0_23] : memref<2x12x32x8xf32, #tpu.memory_space<vmem>>, vector<1x12x32x8xf32>
    %42 = vector.shape_cast %41 : vector<1x12x32x8xf32> to vector<12x32x8xf32>
    %cst_24 = arith.constant dense<0.000000e+00> : vector<12x16x8xf32>
    %43 = tpu.matmul %40, %42, %cst_24 {dimension_numbers = #tpu.dot_dimension_numbers<[2], [1], [1], [2], [0, 0, 0, 1, 1, 2], [0], [0]>} : vector<12x16x32xf32>, vector<12x32x8xf32>, vector<12x16x8xf32> -> vector<12x16x8xf32>
    %44 = vector.extract_strided_slice %43 {offsets = [0, 0, 0], sizes = [4, 16, 8], strides = [1, 1, 1]} : vector<12x16x8xf32> to vector<4x16x8xf32>
    %45 = vector.shape_cast %44 : vector<4x16x8xf32> to vector<8x8x8xf32>
    %46 = vector.extract_strided_slice %43 {offsets = [4, 0, 0], sizes = [4, 16, 8], strides = [1, 1, 1]} : vector<12x16x8xf32> to vector<4x16x8xf32>
    %47 = vector.shape_cast %46 : vector<4x16x8xf32> to vector<8x8x8xf32>
    %48 = vector.extract_strided_slice %43 {offsets = [8, 0, 0], sizes = [4, 16, 8], strides = [1, 1, 1]} : vector<12x16x8xf32> to vector<4x16x8xf32>
    %49 = vector.shape_cast %48 : vector<4x16x8xf32> to vector<8x8x8xf32>
    %cst_25 = arith.constant dense<0.000000e+00> : vector<8x8x8xf32>
    %50 = tpu.matmul %45, %47, %cst_25 {dimension_numbers = #tpu.dot_dimension_numbers<[2], [2], [1], [1], [0, 0, 0, 1, 1, 1], [0], [0]>} : vector<8x8x8xf32>, vector<8x8x8xf32>, vector<8x8x8xf32> -> vector<8x8x8xf32>
    %cst_26 = arith.constant dense<0xFF800000> : vector<8x8xf32>
    %51 = vector.multi_reduction <maximumf>, %50, %cst_26 [2] : vector<8x8x8xf32> to vector<8x8xf32>
    %52 = vector.shape_cast %51 : vector<8x8xf32> to vector<8x8x1xf32>
    %53 = vector.broadcast %52 : vector<8x8x1xf32> to vector<8x8x8xf32>
    %54 = arith.subf %50, %53 : vector<8x8x8xf32>
    %55 = math.exp %54 : vector<8x8x8xf32>
    %cst_27 = arith.constant dense<0.000000e+00> : vector<8x8xf32>
    %56 = vector.multi_reduction <add>, %55, %cst_27 [2] : vector<8x8x8xf32> to vector<8x8xf32>
    %57 = vector.shape_cast %56 : vector<8x8xf32> to vector<8x8x1xf32>
    %58 = vector.broadcast %57 : vector<8x8x1xf32> to vector<8x8x8xf32>
    %59 = arith.divf %55, %58 : vector<8x8x8xf32>
    %cst_28 = arith.constant dense<0.000000e+00> : vector<8x8x8xf32>
    %60 = tpu.matmul %59, %49, %cst_28 {dimension_numbers = #tpu.dot_dimension_numbers<[2], [1], [1], [2], [0, 0, 0, 1, 1, 2], [0], [0]>} : vector<8x8x8xf32>, vector<8x8x8xf32>, vector<8x8x8xf32> -> vector<8x8x8xf32>
    %61 = vector.shape_cast %60 : vector<8x8x8xf32> to vector<4x16x8xf32>
    %c1_29 = arith.constant 1 : index
    %c0_30 = arith.constant 0 : index
    %c0_31 = arith.constant 0 : index
    %c0_32 = arith.constant 0 : index
    %62 = vector.load %arg5[%c1_29, %c0_30, %c0_31, %c0_32] : memref<2x4x8x32xf32, #tpu.memory_space<vmem>>, vector<1x4x8x32xf32>
    %63 = vector.shape_cast %62 : vector<1x4x8x32xf32> to vector<4x8x32xf32>
    %cst_33 = arith.constant dense<0.000000e+00> : vector<4x16x32xf32>
    %64 = tpu.matmul %61, %63, %cst_33 {dimension_numbers = #tpu.dot_dimension_numbers<[2], [1], [1], [2], [0, 0, 0, 1, 1, 2], [0], [0]>} : vector<4x16x8xf32>, vector<4x8x32xf32>, vector<4x16x32xf32> -> vector<4x16x32xf32>
    %cst_34 = arith.constant dense<0.000000e+00> : vector<16x32xf32>
    %65 = vector.multi_reduction <add>, %64, %cst_34 [0] : vector<4x16x32xf32> to vector<16x32xf32>
    %c0_35 = arith.constant 0 : index
    %c0_36 = arith.constant 0 : index
    %66 = vector.load %arg6[%c0_35, %c0_36] : memref<32x32xf32, #tpu.memory_space<vmem>>, vector<32x32xf32>
    %cst_37 = arith.constant dense<0.000000e+00> : vector<16x32xf32>
    %67 = tpu.matmul %65, %66, %cst_37 {dimension_numbers = #tpu.dot_dimension_numbers<[1], [0], [0], [1], [0, 0, 1, 1], [], []>} : vector<16x32xf32>, vector<32x32xf32>, vector<16x32xf32> -> vector<16x32xf32>
    %68 = vector.shape_cast %67 : vector<16x32xf32> to vector<2x8x32xf32>
    %c0_38 = arith.constant 0 : index
    %c0_39 = arith.constant 0 : index
    %c0_40 = arith.constant 0 : index
    %69 = vector.load %arg7[%c0_38, %c0_39, %c0_40] : memref<2x8x32xf32, #tpu.memory_space<vmem>>, vector<2x8x32xf32>
    tpu.vector_store %arg7[%c0_38, %c0_39, %c0_40], %68 {strides = array<i32>} : memref<2x8x32xf32, #tpu.memory_space<vmem>>, vector<2x8x32xf32>,
    return
  }
  func.func @transform_0(%arg0: i32) -> (i32, i32, i32) {
    %c0_i32 = arith.constant 0 : i32
    %c0_i32_0 = arith.constant 0 : i32
    %c0_i32_1 = arith.constant 0 : i32
    return %arg0, %c0_i32, %c0_i32_0 : i32, i32, i32
  }
  func.func @transform_1(%arg0: i32) -> (i32, i32) {
    %c0_i32 = arith.constant 0 : i32
    %c0_i32_0 = arith.constant 0 : i32
    %c0_i32_1 = arith.constant 0 : i32
    return %c0_i32, %c0_i32_0 : i32, i32
  }
  func.func @transform_2(%arg0: i32) -> (i32, i32) {
    %c0_i32 = arith.constant 0 : i32
    %c0_i32_0 = arith.constant 0 : i32
    %c0_i32_1 = arith.constant 0 : i32
    return %c0_i32, %c0_i32_0 : i32, i32
  }
  func.func @transform_3(%arg0: i32) -> (i32, i32, i32, i32) {
    %c0_i32 = arith.constant 0 : i32
    %c0_i32_0 = arith.constant 0 : i32
    %c0_i32_1 = arith.constant 0 : i32
    %c0_i32_2 = arith.constant 0 : i32
    %c0_i32_3 = arith.constant 0 : i32
    return %c0_i32, %c0_i32_0, %c0_i32_1, %c0_i32_2 : i32, i32, i32, i32
  }
  func.func @transform_4(%arg0: i32) -> (i32, i32, i32, i32) {
    %c0_i32 = arith.constant 0 : i32
    %c0_i32_0 = arith.constant 0 : i32
    %c0_i32_1 = arith.constant 0 : i32
    %c0_i32_2 = arith.constant 0 : i32
    %c0_i32_3 = arith.constant 0 : i32
    return %c0_i32, %c0_i32_0, %c0_i32_1, %c0_i32_2 : i32, i32, i32, i32
  }
  func.func @transform_5(%arg0: i32) -> (i32, i32) {
    %c0_i32 = arith.constant 0 : i32
    %c0_i32_0 = arith.constant 0 : i32
    %c0_i32_1 = arith.constant 0 : i32
    return %c0_i32, %c0_i32_0 : i32, i32
  }
  func.func @transform_6(%arg0: i32) -> (i32, i32, i32) {
    %c0_i32 = arith.constant 0 : i32
    %c0_i32_0 = arith.constant 0 : i32
    %c0_i32_1 = arith.constant 0 : i32
    return %arg0, %c0_i32, %c0_i32_0 : i32, i32, i32
  }
}

</mosaic_0001>

<llo_original>
// kernel: tpu_custom_call.1
$region0: #{tpu_custom_call.1}
  #allocation0 [shape = 'u32[]', space=smem, size = 0x4, offset = 0x4, fixed_abs, tag = 'smem constant byte address 0x4 - core index']
  #allocation1 [shape = 'u32[144,128]{1,0:T(1,128)}', space=vmem, size = 0x12000, scoped, tag = 'internal scratch']
  %s0 = inlined_call_operand.vmem [shape: f32[2,8,32], index: 0, kind: input, shape index: {}]
  %s1 = inlined_call_operand.vmem [shape: f32[8,32], index: 1, kind: input, shape index: {}]
  %s2 = inlined_call_operand.vmem [shape: f32[32,32], index: 2, kind: input, shape index: {}]
  %s3 = inlined_call_operand.vmem [shape: f32[2,12,32,8], index: 3, kind: input, shape index: {}]
  %s4 = inlined_call_operand.vmem [shape: f32[2,4,8,32], index: 4, kind: input, shape index: {}]
  %s5 = inlined_call_operand.vmem [shape: f32[32,32], index: 5, kind: input, shape index: {}]
  %s6 = inlined_call_operand.hbm [shape: f32[2,8,32], index: 6, kind: output, shape index: {}]
  %s7 = sld [smem:[#allocation0]]
  $region34: #{tpu_custom_call.1} parent=0
    _
  %s9 = ssub.s32 1, %s7
  %s10 = scalar_select 0, %s9, %s7
  $region1: #{tpu_custom_call.1} parent=0
    #allocation2 [shape = 'u8[8192]{0}', space=vmem, size = 0x2000, scoped, tag = 'output window, operand 0, single buffered']
    #allocation3 [shape = 's32[1]{0}', space=sflag, size = 0x4, scoped, tag = 'scoped memory for tpu_custom_call.1']
    %11 = vsyncpa [#allocation3], 0
    // Predicated region
    $region2: #{tpu_custom_call.1} parent=1 // pred_check
      _
    $region3: #{tpu_custom_call.1} parent=1 // pred_check_branch
      %13 = sbr.rel (0) target = $region5
    $region4: #{tpu_custom_call.1} parent=1 // pred_region
      _
    $region5: #{tpu_custom_call.1} parent=1 // pred_fallthru
      _
    // Predicated region
    $region6: #{tpu_custom_call.1} parent=1 // pred_check
      _
    $region7: #{tpu_custom_call.1} parent=1 // pred_check_branch
      %15 = sbr.rel (0) target = $region9
    $region8: #{tpu_custom_call.1} parent=1 // pred_region
      _
    $region9: #{tpu_custom_call.1} parent=1 // pred_fallthru
      _
    // Predicated region
    $region10: #{tpu_custom_call.1} parent=1 // pred_check
      _
    $region11: #{tpu_custom_call.1} parent=1 // pred_check_branch
      %17 = sbr.rel (0) target = $region13
    $region12: #{tpu_custom_call.1} parent=1 // pred_region
      _
    $region13: #{tpu_custom_call.1} parent=1 // pred_fallthru
      _
    // Predicated region
    $region14: #{tpu_custom_call.1} parent=1 // pred_check
      _
    $region15: #{tpu_custom_call.1} parent=1 // pred_check_branch
      %19 = sbr.rel (0) target = $region17
    $region16: #{tpu_custom_call.1} parent=1 // pred_region
      _
    $region17: #{tpu_custom_call.1} parent=1 // pred_fallthru
      _
    // Predicated region
    $region18: #{tpu_custom_call.1} parent=1 // pred_check
      _
    $region19: #{tpu_custom_call.1} parent=1 // pred_check_branch
      %21 = sbr.rel (0) target = $region21
    $region20: #{tpu_custom_call.1} parent=1 // pred_region
      _
    $region21: #{tpu_custom_call.1} parent=1 // pred_fallthru
      _
    // Predicated region
    $region22: #{tpu_custom_call.1} parent=1 // pred_check
      _
    $region23: #{tpu_custom_call.1} parent=1 // pred_check_branch
      %23 = sbr.rel (0) target = $region25
    $region24: #{tpu_custom_call.1} parent=1 // pred_region
      _
    $region25: #{tpu_custom_call.1} parent=1 // pred_fallthru
      _
    %v24 = vld [vmem:[%s0] sm:$0xff]
    %v25 = vld [vmem:[%s0 + $0x8] sm:$0xff]
    %v26 = vld [vmem:[%s2] sm:$0xff]
    %v27 = vld [vmem:[%s2 + $0x8] sm:$0xff]
    %v28 = vld [vmem:[%s2 + $0x10] sm:$0xff]
    %v29 = vld [vmem:[%s2 + $0x18] sm:$0xff]
    %vm30 = vcmask 261120
    %v32 = vsel %vm30, %v24, 0
    %v35 = vsel %vm30, %v25, 0
    %37 = vmatprep.subr.mxu0 0.0
    %38 = vmatpush1.msra.mxu0 %v26
    %39 = vmatprep.subr.mxu0 0.0
    %40 = vmatpush1.msra.mxu0 %v27
    %41 = vmatprep.subr.mxu0 0.0
    %42 = vmatpush1.msra.mxu0 %v28
    %43 = vmatprep.subr.mxu0 0.0
    %44 = vmatpush1.msra.mxu0 %v29
    %45 = vmatprep.subr.mxu0 0.0
    %46 = vmatpush1.msra.mxu0 0.0
    %47 = vmatprep.subr.mxu0 0.0
    %48 = vmatpush1.msra.mxu0 0.0
    %49 = vmatprep.subr.mxu0 0.0
    %50 = vmatpush1.msra.mxu0 0.0
    %51 = vmatprep.subr.mxu0 0.0
    %52 = vmatpush1.msra.mxu0 0.0
    %53 = vmatprep.subr.mxu0 0.0
    %54 = vmatpush1.msra.mxu0 0.0
    %55 = vmatprep.subr.mxu0 0.0
    %56 = vmatpush1.msra.mxu0 0.0
    %57 = vmatprep.subr.mxu0 0.0
    %58 = vmatpush1.msra.mxu0 0.0
    %59 = vmatprep.subr.mxu0 0.0
    %60 = vmatpush1.msra.mxu0 0.0
    %61 = vmatprep.subr.mxu0 0.0
    %62 = vmatpush1.msra.mxu0 0.0
    %63 = vmatprep.subr.mxu0 0.0
    %64 = vmatpush1.msra.mxu0 0.0
    %65 = vmatprep.subr.mxu0 0.0
    %66 = vmatpush1.msra.mxu0 0.0
    %67 = vmatprep.subr.mxu0 0.0
    %68 = vmatpush1.msra.mxu0 0.0
    %69 = vmatprep.subr.mxu0 0.0
    %70 = vmatpush1.msra.mxu0 0.0
    %71 = vmatprep.subr.mxu0 0.0
    %72 = vmatpush1.msra.mxu0 0.0
    %73 = vmatprep.subr.mxu0 0.0
    %74 = vmatpush1.msra.mxu0 0.0
    %75 = vmatprep.subr.mxu0 0.0
    %76 = vmatpush1.msra.mxu0 0.0
    %77 = vmatprep.subr.mxu0 0.0
    %78 = vmatpush1.msra.mxu0 0.0
    %79 = vmatprep.subr.mxu0 0.0
    %80 = vmatpush1.msra.mxu0 0.0
    %81 = vmatprep.subr.mxu0 0.0
    %82 = vmatpush1.msra.mxu0 0.0
    %83 = vmatprep.subr.mxu0 0.0
    %84 = vmatpush1.msra.mxu0 0.0
    %85 = vmatprep.subr.mxu0 0.0
    %86 = vmatpush1.msra.mxu0 0.0
    %87 = vmatprep.subr.mxu0 0.0
    %88 = vmatpush1.msra.mxu0 0.0
    %89 = vmatprep.subr.mxu0 0.0
    %90 = vmatpush1.msra.mxu0 0.0
    %91 = vmatprep.subr.mxu0 0.0
    %92 = vmatpush1.msra.mxu0 0.0
    %93 = vmatprep.subr.mxu0 0.0
    %94 = vmatpush1.msra.mxu0 0.0
    %95 = vmatprep.subr.mxu0 0.0
    %96 = vmatpush1.msra.mxu0 0.0
    %97 = vmatprep.subr.mxu0 0.0
    %98 = vmatpush1.msra.mxu0 0.0
    %99 = vmatprep.subr.mxu0 0.0
    %100 = vmatpush1.msra.mxu0 0.0
    %101 = vmatprep.mubr.f32.mxu0 0.0
    %102 = vmatmul.mubr.f32.gmra.mrb[0].mxu0 %v32
    %v103 = vpop.f32.mrb[0].mxu0
    %v104 = vadd.f32 0.0, %v103
    %v105 = vpop.f32.mrb[0].mxu0
    %106 = vmatprep.mubr.f32.mxu0 0.0
    %107 = vmatmul.mubr.f32.gmra.mrb[0].mxu0 %v35
    %v108 = vpop.f32.mrb[0].mxu0
    %v109 = vadd.f32 0.0, %v108
    %v110 = vpop.f32.mrb[0].mxu0
    %111 = vdwg.mxu0
    %v112 = vld [vmem:[%s1] sm:$0xff]
    %v113 = vadd.f32 %v104, %v112
    %v114 = vadd.f32 %v109, %v112
    %v115 = vld [vmem:[%s3] sm:$0xff]
    %v116 = vld [vmem:[%s3 + $0x8] sm:$0xff]
    %v117 = vld [vmem:[%s3 + $0x10] sm:$0xff]
    %v118 = vld [vmem:[%s3 + $0x18] sm:$0xff]
    %v119 = vld [vmem:[%s3 + $0x20] sm:$0xff]
    %v120 = vld [vmem:[%s3 + $0x28] sm:$0xff]
    %v121 = vld [vmem:[%s3 + $0x30] sm:$0xff]
    %v122 = vld [vmem:[%s3 + $0x38] sm:$0xff]
    %v123 = vld [vmem:[%s3 + $0x40] sm:$0xff]
    %v124 = vld [vmem:[%s3 + $0x48] sm:$0xff]
    %v125 = vld [vmem:[%s3 + $0x50] sm:$0xff]
    %v126 = vld [vmem:[%s3 + $0x58] sm:$0xff]
    %v127 = vld [vmem:[%s3 + $0x60] sm:$0xff]
    %v128 = vld [vmem:[%s3 + $0x68] sm:$0xff]
    %v129 = vld [vmem:[%s3 + $0x70] sm:$0xff]
    %v130 = vld [vmem:[%s3 + $0x78] sm:$0xff]
    %v131 = vld [vmem:[%s3 + $0x80] sm:$0xff]
    %v132 = vld [vmem:[%s3 + $0x88] sm:$0xff]
    %v133 = vld [vmem:[%s3 + $0x90] sm:$0xff]
    %v134 = vld [vmem:[%s3 + $0x98] sm:$0xff]
    %v135 = vld [vmem:[%s3 + $0xa0] sm:$0xff]
    %v136 = vld [vmem:[%s3 + $0xa8] sm:$0xff]
    %v137 = vld [vmem:[%s3 + $0xb0] sm:$0xff]
    %v138 = vld [vmem:[%s3 + $0xb8] sm:$0xff]
    %v139 = vld [vmem:[%s3 + $0xc0] sm:$0xff]
    %v140 = vld [vmem:[%s3 + $0xc8] sm:$0xff]
    %v141 = vld [vmem:[%s3 + $0xd0] sm:$0xff]
    %v142 = vld [vmem:[%s3 + $0xd8] sm:$0xff]
    %v143 = vld [vmem:[%s3 + $0xe0] sm:$0xff]
    %v144 = vld [vmem:[%s3 + $0xe8] sm:$0xff]
    %v145 = vld [vmem:[%s3 + $0xf0] sm:$0xff]
    %v146 = vld [vmem:[%s3 + $0xf8] sm:$0xff]
    %v147 = vld [vmem:[%s3 + $0x100] sm:$0xff]
    %v148 = vld [vmem:[%s3 + $0x108] sm:$0xff]
    %v149 = vld [vmem:[%s3 + $0x110] sm:$0xff]
    %v150 = vld [vmem:[%s3 + $0x118] sm:$0xff]
    %v151 = vld [vmem:[%s3 + $0x120] sm:$0xff]
    %v152 = vld [vmem:[%s3 + $0x128] sm:$0xff]
    %v153 = vld [vmem:[%s3 + $0x130] sm:$0xff]
    %v154 = vld [vmem:[%s3 + $0x138] sm:$0xff]
    %v155 = vld [vmem:[%s3 + $0x140] sm:$0xff]
    %v156 = vld [vmem:[%s3 + $0x148] sm:$0xff]
    %v157 = vld [vmem:[%s3 + $0x150] sm:$0xff]
    %v158 = vld [vmem:[%s3 + $0x158] sm:$0xff]
    %v159 = vld [vmem:[%s3 + $0x160] sm:$0xff]
    %v160 = vld [vmem:[%s3 + $0x168] sm:$0xff]
    %v161 = vld [vmem:[%s3 + $0x170] sm:$0xff]
    %v162 = vld [vmem:[%s3 + $0x178] sm:$0xff]
    %v164 = vsel %vm30, %v113, 0
    %v167 = vsel %vm30, %v114, 0
    %169 = vmatprep.subr.mxu0 0.0
    %170 = vmatpush1.msra.mxu0 %v115
    %171 = vmatprep.subr.mxu0 0.0
    %172 = vmatpush1.msra.mxu0 %v116
    %173 = vmatprep.subr.mxu0 0.0
    %174 = vmatpush1.msra.mxu0 %v117
    %175 = vmatprep.subr.mxu0 0.0
    %176 = vmatpush1.msra.mxu0 %v118
    %177 = vmatprep.subr.mxu0 0.0
    %178 = vmatpush1.msra.mxu0 0.0
    %179 = vmatprep.subr.mxu0 0.0
    %180 = vmatpush1.msra.mxu0 0.0
    %181 = vmatprep.subr.mxu0 0.0
    %182 = vmatpush1.msra.mxu0 0.0
    %183 = vmatprep.subr.mxu0 0.0
    %184 = vmatpush1.msra.mxu0 0.0
    %185 = vmatprep.subr.mxu0 0.0
    %186 = vmatpush1.msra.mxu0 0.0
    %187 = vmatprep.subr.mxu0 0.0
    %188 = vmatpush1.msra.mxu0 0.0
    %189 = vmatprep.subr.mxu0 0.0
    %190 = vmatpush1.msra.mxu0 0.0
    %191 = vmatprep.subr.mxu0 0.0
    %192 = vmatpush1.msra.mxu0 0.0
    %193 = vmatprep.subr.mxu0 0.0
    %194 = vmatpush1.msra.mxu0 0.0
    %195 = vmatprep.subr.mxu0 0.0
    %196 = vmatpush1.msra.mxu0 0.0
    %197 = vmatprep.subr.mxu0 0.0
    %198 = vmatpush1.msra.mxu0 0.0
    %199 = vmatprep.subr.mxu0 0.0
    %200 = vmatpush1.msra.mxu0 0.0
    %201 = vmatprep.subr.mxu0 0.0
    %202 = vmatpush1.msra.mxu0 0.0
    %203 = vmatprep.subr.mxu0 0.0
    %204 = vmatpush1.msra.mxu0 0.0
    %205 = vmatprep.subr.mxu0 0.0
    %206 = vmatpush1.msra.mxu0 0.0
    %207 = vmatprep.subr.mxu0 0.0
    %208 = vmatpush1.msra.mxu0 0.0
    %209 = vmatprep.subr.mxu0 0.0
    %210 = vmatpush1.msra.mxu0 0.0
    %211 = vmatprep.subr.mxu0 0.0
    %212 = vmatpush1.msra.mxu0 0.0
    %213 = vmatprep.subr.mxu0 0.0
    %214 = vmatpush1.msra.mxu0 0.0
    %215 = vmatprep.subr.mxu0 0.0
    %216 = vmatpush1.msra.mxu0 0.0
    %217 = vmatprep.subr.mxu0 0.0
    %218 = vmatpush1.msra.mxu0 0.0
    %219 = vmatprep.subr.mxu0 0.0
    %220 = vmatpush1.msra.mxu0 0.0
    %221 = vmatprep.subr.mxu0 0.0
    %222 = vmatpush1.msra.mxu0 0.0
    %223 = vmatprep.subr.mxu0 0.0
    %224 = vmatpush1.msra.mxu0 0.0
    %225 = vmatprep.subr.mxu0 0.0
    %226 = vmatpush1.msra.mxu0 0.0
    %227 = vmatprep.subr.mxu0 0.0
    %228 = vmatpush1.msra.mxu0 0.0
    %229 = vmatprep.subr.mxu0 0.0
    %230 = vmatpush1.msra.mxu0 0.0
    %231 = vmatprep.subr.mxu0 0.0
    %232 = vmatpush1.msra.mxu0 0.0
    %233 = vmatprep.mubr.f32.mxu0 0.0
    %234 = vmatmul.mubr.f32.gmra.mrb[0].mxu0 %v164
    %v235 = vpop.f32.mrb[0].mxu0
    %v236 = vadd.f32 0.0, %v235
    %v237 = vpop.f32.mrb[0].mxu0
    %238 = vmatprep.mubr.f32.mxu0 0.0
    %239 = vmatmul.mubr.f32.gmra.mrb[0].mxu0 %v167
    %v240 = vpop.f32.mrb[0].mxu0
    %v241 = vadd.f32 0.0, %v240
    %v242 = vpop.f32.mrb[0].mxu0
    %243 = vdwg.mxu0
    %244 = vmatprep.subr.mxu0 0.0
    %245 = vmatpush1.msra.mxu0 %v119
    %246 = vmatprep.subr.mxu0 0.0
    %247 = vmatpush1.msra.mxu0 %v120
    %248 = vmatprep.subr.mxu0 0.0
    %249 = vmatpush1.msra.mxu0 %v121
    %250 = vmatprep.subr.mxu0 0.0
    %251 = vmatpush1.msra.mxu0 %v122
    %252 = vmatprep.subr.mxu0 0.0
    %253 = vmatpush1.msra.mxu0 0.0
    %254 = vmatprep.subr.mxu0 0.0
    %255 = vmatpush1.msra.mxu0 0.0
    %256 = vmatprep.subr.mxu0 0.0
    %257 = vmatpush1.msra.mxu0 0.0
    %258 = vmatprep.subr.mxu0 0.0
    %259 = vmatpush1.msra.mxu0 0.0
    %260 = vmatprep.subr.mxu0 0.0
    %261 = vmatpush1.msra.mxu0 0.0
    %262 = vmatprep.subr.mxu0 0.0
    %263 = vmatpush1.msra.mxu0 0.0
    %264 = vmatprep.subr.mxu0 0.0
    %265 = vmatpush1.msra.mxu0 0.0
    %266 = vmatprep.subr.mxu0 0.0
    %267 = vmatpush1.msra.mxu0 0.0
    %268 = vmatprep.subr.mxu0 0.0
    %269 = vmatpush1.msra.mxu0 0.0
    %270 = vmatprep.subr.mxu0 0.0
    %271 = vmatpush1.msra.mxu0 0.0
    %272 = vmatprep.subr.mxu0 0.0
    %273 = vmatpush1.msra.mxu0 0.0
    %274 = vmatprep.subr.mxu0 0.0
    %275 = vmatpush1.msra.mxu0 0.0
    %276 = vmatprep.subr.mxu0 0.0
    %277 = vmatpush1.msra.mxu0 0.0
    %278 = vmatprep.subr.mxu0 0.0
    %279 = vmatpush1.msra.mxu0 0.0
    %280 = vmatprep.subr.mxu0 0.0
    %281 = vmatpush1.msra.mxu0 0.0
    %282 = vmatprep.subr.mxu0 0.0
    %283 = vmatpush1.msra.mxu0 0.0
    %284 = vmatprep.subr.mxu0 0.0
    %285 = vmatpush1.msra.mxu0 0.0
    %286 = vmatprep.subr.mxu0 0.0
    %287 = vmatpush1.msra.mxu0 0.0
    %288 = vmatprep.subr.mxu0 0.0
    %289 = vmatpush1.msra.mxu0 0.0
    %290 = vmatprep.subr.mxu0 0.0
    %291 = vmatpush1.msra.mxu0 0.0
    %292 = vmatprep.subr.mxu0 0.0
    %293 = vmatpush1.msra.mxu0 0.0
    %294 = vmatprep.subr.mxu0 0.0
    %295 = vmatpush1.msra.mxu0 0.0
    %296 = vmatprep.subr.mxu0 0.0
    %297 = vmatpush1.msra.mxu0 0.0
    %298 = vmatprep.subr.mxu0 0.0
    %299 = vmatpush1.msra.mxu0 0.0
    %300 = vmatprep.subr.mxu0 0.0
    %301 = vmatpush1.msra.mxu0 0.0
    %302 = vmatprep.subr.mxu0 0.0
    %303 = vmatpush1.msra.mxu0 0.0
    %304 = vmatprep.subr.mxu0 0.0
    %305 = vmatpush1.msra.mxu0 0.0
    %306 = vmatprep.subr.mxu0 0.0
    %307 = vmatpush1.msra.mxu0 0.0
    %308 = vmatprep.mubr.f32.mxu0 0.0
    %309 = vmatmul.mubr.f32.gmra.mrb[0].mxu0 %v164
    %v310 = vpop.f32.mrb[0].mxu0
    %v311 = vadd.f32 0.0, %v310
    %v312 = vpop.f32.mrb[0].mxu0
    %313 = vmatprep.mubr.f32.mxu0 0.0
    %314 = vmatmul.mubr.f32.gmra.mrb[0].mxu0 %v167
    %v315 = vpop.f32.mrb[0].mxu0
    %v316 = vadd.f32 0.0, %v315
    %v317 = vpop.f32.mrb[0].mxu0
    %318 = vdwg.mxu0
    %319 = vmatprep.subr.mxu0 0.0
    %320 = vmatpush1.msra.mxu0 %v123
    %321 = vmatprep.subr.mxu0 0.0
    %322 = vmatpush1.msra.mxu0 %v124
    %323 = vmatprep.subr.mxu0 0.0
    %324 = vmatpush1.msra.mxu0 %v125
    %325 = vmatprep.subr.mxu0 0.0
    %326 = vmatpush1.msra.mxu0 %v126
    %327 = vmatprep.subr.mxu0 0.0
    %328 = vmatpush1.msra.mxu0 0.0
    %329 = vmatprep.subr.mxu0 0.0
    %330 = vmatpush1.msra.mxu0 0.0
    %331 = vmatprep.subr.mxu0 0.0
    %332 = vmatpush1.msra.mxu0 0.0
    %333 = vmatprep.subr.mxu0 0.0
    %334 = vmatpush1.msra.mxu0 0.0
    %335 = vmatprep.subr.mxu0 0.0
    %336 = vmatpush1.msra.mxu0 0.0
    %337 = vmatprep.subr.mxu0 0.0
    %338 = vmatpush1.msra.mxu0 0.0
    %339 = vmatprep.subr.mxu0 0.0
    %340 = vmatpush1.msra.mxu0 0.0
    %341 = vmatprep.subr.mxu0 0.0
    %342 = vmatpush1.msra.mxu0 0.0
    %343 = vmatprep.subr.mxu0 0.0
    %344 = vmatpush1.msra.mxu0 0.0
    %345 = vmatprep.subr.mxu0 0.0
    %346 = vmatpush1.msra.mxu0 0.0
    %347 = vmatprep.subr.mxu0 0.0
    %348 = vmatpush1.msra.mxu0 0.0
    %349 = vmatprep.subr.mxu0 0.0
    %350 = vmatpush1.msra.mxu0 0.0
    %351 = vmatprep.subr.mxu0 0.0
    %352 = vmatpush1.msra.mxu0 0.0
    %353 = vmatprep.subr.mxu0 0.0
    %354 = vmatpush1.msra.mxu0 0.0
    %355 = vmatprep.subr.mxu0 0.0
    %356 = vmatpush1.msra.mxu0 0.0
    %357 = vmatprep.subr.mxu0 0.0
    %358 = vmatpush1.msra.mxu0 0.0
    %359 = vmatprep.subr.mxu0 0.0
    %360 = vmatpush1.msra.mxu0 0.0
    %361 = vmatprep.subr.mxu0 0.0
    %362 = vmatpush1.msra.mxu0 0.0
    %363 = vmatprep.subr.mxu0 0.0
    %364 = vmatpush1.msra.mxu0 0.0
    %365 = vmatprep.subr.mxu0 0.0
    %366 = vmatpush1.msra.mxu0 0.0
    %367 = vmatprep.subr.mxu0 0.0
    %368 = vmatpush1.msra.mxu0 0.0
    %369 = vmatprep.subr.mxu0 0.0
    %370 = vmatpush1.msra.mxu0 0.0
    %371 = vmatprep.subr.mxu0 0.0
    %372 = vmatpush1.msra.mxu0 0.0
    %373 = vmatprep.subr.mxu0 0.0
    %374 = vmatpush1.msra.mxu0 0.0
    %375 = vmatprep.subr.mxu0 0.0
    %376 = vmatpush1.msra.mxu0 0.0
    %377 = vmatprep.subr.mxu0 0.0
    %378 = vmatpush1.msra.mxu0 0.0
    %379 = vmatprep.subr.mxu0 0.0
    %380 = vmatpush1.msra.mxu0 0.0
    %381 = vmatprep.subr.mxu0 0.0
    %382 = vmatpush1.msra.mxu0 0.0
    %383 = vmatprep.mubr.f32.mxu0 0.0
    %384 = vmatmul.mubr.f32.gmra.mrb[0].mxu0 %v164
    %v385 = vpop.f32.mrb[0].mxu0
    %v386 = vadd.f32 0.0, %v385
    %v387 = vpop.f32.mrb[0].mxu0
    %388 = vmatprep.mubr.f32.mxu0 0.0
    %389 = vmatmul.mubr.f32.gmra.mrb[0].mxu0 %v167
    %v390 = vpop.f32.mrb[0].mxu0
    %v391 = vadd.f32 0.0, %v390
    %v392 = vpop.f32.mrb[0].mxu0
    %393 = vdwg.mxu0
    %394 = vmatprep.subr.mxu0 0.0
    %395 = vmatpush1.msra.mxu0 %v127
    %396 = vmatprep.subr.mxu0 0.0
    %397 = vmatpush1.msra.mxu0 %v128
    %398 = vmatprep.subr.mxu0 0.0
    %399 = vmatpush1.msra.mxu0 %v129
    %400 = vmatprep.subr.mxu0 0.0
    %401 = vmatpush1.msra.mxu0 %v130
    %402 = vmatprep.subr.mxu0 0.0
    %403 = vmatpush1.msra.mxu0 0.0
    %404 = vmatprep.subr.mxu0 0.0
    %405 = vmatpush1.msra.mxu0 0.0
    %406 = vmatprep.subr.mxu0 0.0
    %407 = vmatpush1.msra.mxu0 0.0
    %408 = vmatprep.subr.mxu0 0.0
    %409 = vmatpush1.msra.mxu0 0.0
    %410 = vmatprep.subr.mxu0 0.0
    %411 = vmatpush1.msra.mxu0 0.0
    %412 = vmatprep.subr.mxu0 0.0
    %413 = vmatpush1.msra.mxu0 0.0
    %414 = vmatprep.subr.mxu0 0.0
    %415 = vmatpush1.msra.mxu0 0.0
    %416 = vmatprep.subr.mxu0 0.0
    %417 = vmatpush1.msra.mxu0 0.0
    %418 = vmatprep.subr.mxu0 0.0
    %419 = vmatpush1.msra.mxu0 0.0
    %420 = vmatprep.subr.mxu0 0.0
    %421 = vmatpush1.msra.mxu0 0.0
    %422 = vmatprep.subr.mxu0 0.0
    %423 = vmatpush1.msra.mxu0 0.0
    %424 = vmatprep.subr.mxu0 0.0
    %425 = vmatpush1.msra.mxu0 0.0
    %426 = vmatprep.subr.mxu0 0.0
    %427 = vmatpush1.msra.mxu0 0.0
    %428 = vmatprep.subr.mxu0 0.0
    %429 = vmatpush1.msra.mxu0 0.0
    %430 = vmatprep.subr.mxu0 0.0
    %431 = vmatpush1.msra.mxu0 0.0
    %432 = vmatprep.subr.mxu0 0.0
    %433 = vmatpush1.msra.mxu0 0.0
    %434 = vmatprep.subr.mxu0 0.0
    %435 = vmatpush1.msra.mxu0 0.0
    %436 = vmatprep.subr.mxu0 0.0
    %437 = vmatpush1.msra.mxu0 0.0
    %438 = vmatprep.subr.mxu0 0.0
    %439 = vmatpush1.msra.mxu0 0.0
    %440 = vmatprep.subr.mxu0 0.0
    %441 = vmatpush1.msra.mxu0 0.0
    %442 = vmatprep.subr.mxu0 0.0
    %443 = vmatpush1.msra.mxu0 0.0
    %444 = vmatprep.subr.mxu0 0.0
    %445 = vmatpush1.msra.mxu0 0.0
    %446 = vmatprep.subr.mxu0 0.0
    %447 = vmatpush1.msra.mxu0 0.0
    %448 = vmatprep.subr.mxu0 0.0
    %449 = vmatpush1.msra.mxu0 0.0
    %450 = vmatprep.subr.mxu0 0.0
    %451 = vmatpush1.msra.mxu0 0.0
    %452 = vmatprep.subr.mxu0 0.0
    %453 = vmatpush1.msra.mxu0 0.0
    %454 = vmatprep.subr.mxu0 0.0
    %455 = vmatpush1.msra.mxu0 0.0
    %456 = vmatprep.subr.mxu0 0.0
    %457 = vmatpush1.msra.mxu0 0.0
    %458 = vmatprep.mubr.f32.mxu0 0.0
    %459 = vmatmul.mubr.f32.gmra.mrb[0].mxu0 %v164
    %v460 = vpop.f32.mrb[0].mxu0
    %v461 = vadd.f32 0.0, %v460
    %v462 = vpop.f32.mrb[0].mxu0
    %463 = vmatprep.mubr.f32.mxu0 0.0
    %464 = vmatmul.mubr.f32.gmra.mrb[0].mxu0 %v167
    %v465 = vpop.f32.mrb[0].mxu0
    %v466 = vadd.f32 0.0, %v465
    %v467 = vpop.f32.mrb[0].mxu0
    %468 = vdwg.mxu0
    %469 = vmatprep.subr.mxu0 0.0
    %470 = vmatpush1.msra.mxu0 %v131
    %471 = vmatprep.subr.mxu0 0.0
    %472 = vmatpush1.msra.mxu0 %v132
    %473 = vmatprep.subr.mxu0 0.0
    %474 = vmatpush1.msra.mxu0 %v133
    %475 = vmatprep.subr.mxu0 0.0
    %476 = vmatpush1.msra.mxu0 %v134
    %477 = vmatprep.subr.mxu0 0.0
    %478 = vmatpush1.msra.mxu0 0.0
    %479 = vmatprep.subr.mxu0 0.0
    %480 = vmatpush1.msra.mxu0 0.0
    %481 = vmatprep.subr.mxu0 0.0
    %482 = vmatpush1.msra.mxu0 0.0
    %483 = vmatprep.subr.mxu0 0.0
    %484 = vmatpush1.msra.mxu0 0.0
    %485 = vmatprep.subr.mxu0 0.0
    %486 = vmatpush1.msra.mxu0 0.0
    %487 = vmatprep.subr.mxu0 0.0
    %488 = vmatpush1.msra.mxu0 0.0
    %489 = vmatprep.subr.mxu0 0.0
    %490 = vmatpush1.msra.mxu0 0.0
    %491 = vmatprep.subr.mxu0 0.0
    %492 = vmatpush1.msra.mxu0 0.0
    %493 = vmatprep.subr.mxu0 0.0
    %494 = vmatpush1.msra.mxu0 0.0
    %495 = vmatprep.subr.mxu0 0.0
    %496 = vmatpush1.msra.mxu0 0.0
    %497 = vmatprep.subr.mxu0 0.0
    %498 = vmatpush1.msra.mxu0 0.0
    %499 = vmatprep.subr.mxu0 0.0
    %500 = vmatpush1.msra.mxu0 0.0
    %501 = vmatprep.subr.mxu0 0.0
    %502 = vmatpush1.msra.mxu0 0.0
    %503 = vmatprep.subr.mxu0 0.0
    %504 = vmatpush1.msra.mxu0 0.0
    %505 = vmatprep.subr.mxu0 0.0
    %506 = vmatpush1.msra.mxu0 0.0
    %507 = vmatprep.subr.mxu0 0.0
    %508 = vmatpush1.msra.mxu0 0.0
    %509 = vmatprep.subr.mxu0 0.0
    %510 = vmatpush1.msra.mxu0 0.0
    %511 = vmatprep.subr.mxu0 0.0
    %512 = vmatpush1.msra.mxu0 0.0
    %513 = vmatprep.subr.mxu0 0.0
    %514 = vmatpush1.msra.mxu0 0.0
    %515 = vmatprep.subr.mxu0 0.0
    %516 = vmatpush1.msra.mxu0 0.0
    %517 = vmatprep.subr.mxu0 0.0
    %518 = vmatpush1.msra.mxu0 0.0
    %519 = vmatprep.subr.mxu0 0.0
    %520 = vmatpush1.msra.mxu0 0.0
    %521 = vmatprep.subr.mxu0 0.0
    %522 = vmatpush1.msra.mxu0 0.0
    %523 = vmatprep.subr.mxu0 0.0
    %524 = vmatpush1.msra.mxu0 0.0
    %525 = vmatprep.subr.mxu0 0.0
    %526 = vmatpush1.msra.mxu0 0.0
    %527 = vmatprep.subr.mxu0 0.0
    %528 = vmatpush1.msra.mxu0 0.0
    %529 = vmatprep.subr.mxu0 0.0
    %530 = vmatpush1.msra.mxu0 0.0
    %531 = vmatprep.subr.mxu0 0.0
    %532 = vmatpush1.msra.mxu0 0.0
    %533 = vmatprep.mubr.f32.mxu0 0.0
    %534 = vmatmul.mubr.f32.gmra.mrb[0].mxu0 %v164
    %v535 = vpop.f32.mrb[0].mxu0
    %v536 = vadd.f32 0.0, %v535
    %v537 = vpop.f32.mrb[0].mxu0
    %538 = vmatprep.mubr.f32.mxu0 0.0
    %539 = vmatmul.mubr.f32.gmra.mrb[0].mxu0 %v167
    %v540 = vpop.f32.mrb[0].mxu0
    %v541 = vadd.f32 0.0, %v540
    %v542 = vpop.f32.mrb[0].mxu0
    %543 = vdwg.mxu0
    %544 = vmatprep.subr.mxu0 0.0
    %545 = vmatpush1.msra.mxu0 %v135
    %546 = vmatprep.subr.mxu0 0.0
    %547 = vmatpush1.msra.mxu0 %v136
    %548 = vmatprep.subr.mxu0 0.0
    %549 = vmatpush1.msra.mxu0 %v137
    %550 = vmatprep.subr.mxu0 0.0
    %551 = vmatpush1.msra.mxu0 %v138
    %552 = vmatprep.subr.mxu0 0.0
    %553 = vmatpush1.msra.mxu0 0.0
    %554 = vmatprep.subr.mxu0 0.0
    %555 = vmatpush1.msra.mxu0 0.0
    %556 = vmatprep.subr.mxu0 0.0
    %557 = vmatpush1.msra.mxu0 0.0
    %558 = vmatprep.subr.mxu0 0.0
    %559 = vmatpush1.msra.mxu0 0.0
    %560 = vmatprep.subr.mxu0 0.0
    %561 = vmatpush1.msra.mxu0 0.0
    %562 = vmatprep.subr.mxu0 0.0
    %563 = vmatpush1.msra.mxu0 0.0
    %564 = vmatprep.subr.mxu0 0.0
    %565 = vmatpush1.msra.mxu0 0.0
    %566 = vmatprep.subr.mxu0 0.0
    %567 = vmatpush1.msra.mxu0 0.0
    %568 = vmatprep.subr.mxu0 0.0
    %569 = vmatpush1.msra.mxu0 0.0
    %570 = vmatprep.subr.mxu0 0.0
    %571 = vmatpush1.msra.mxu0 0.0
    %572 = vmatprep.subr.mxu0 0.0
    %573 = vmatpush1.msra.mxu0 0.0
    %574 = vmatprep.subr.mxu0 0.0
    %575 = vmatpush1.msra.mxu0 0.0
    %576 = vmatprep.subr.mxu0 0.0
    %577 = vmatpush1.msra.mxu0 0.0
    %578 = vmatprep.subr.mxu0 0.0
    %579 = vmatpush1.msra.mxu0 0.0
    %580 = vmatprep.subr.mxu0 0.0
    %581 = vmatpush1.msra.mxu0 0.0
    %582 = vmatprep.subr.mxu0 0.0
    %583 = vmatpush1.msra.mxu0 0.0
    %584 = vmatprep.subr.mxu0 0.0
    %585 = vmatpush1.msra.mxu0 0.0
    %586 = vmatprep.subr.mxu0 0.0
    %587 = vmatpush1.msra.mxu0 0.0
    %588 = vmatprep.subr.mxu0 0.0
    %589 = vmatpush1.msra.mxu0 0.0
    %590 = vmatprep.subr.mxu0 0.0
    %591 = vmatpush1.msra.mxu0 0.0
    %592 = vmatprep.subr.mxu0 0.0
    %593 = vmatpush1.msra.mxu0 0.0
    %594 = vmatprep.subr.mxu0 0.0
    %595 = vmatpush1.msra.mxu0 0.0
    %596 = vmatprep.subr.mxu0 0.0
    %597 = vmatpush1.msra.mxu0 0.0
    %598 = vmatprep.subr.mxu0 0.0
    %599 = vmatpush1.msra.mxu0 0.0
    %600 = vmatprep.subr.mxu0 0.0
    %601 = vmatpush1.msra.mxu0 0.0
    %602 = vmatprep.subr.mxu0 0.0
    %603 = vmatpush1.msra.mxu0 0.0
    %604 = vmatprep.subr.mxu0 0.0
    %605 = vmatpush1.msra.mxu0 0.0
    %606 = vmatprep.subr.mxu0 0.0
    %607 = vmatpush1.msra.mxu0 0.0
    %608 = vmatprep.mubr.f32.mxu0 0.0
    %609 = vmatmul.mubr.f32.gmra.mrb[0].mxu0 %v164
    %v610 = vpop.f32.mrb[0].mxu0
    %v611 = vadd.f32 0.0, %v610
    %v612 = vpop.f32.mrb[0].mxu0
    %613 = vmatprep.mubr.f32.mxu0 0.0
    %614 = vmatmul.mubr.f32.gmra.mrb[0].mxu0 %v167
    %v615 = vpop.f32.mrb[0].mxu0
    %v616 = vadd.f32 0.0, %v615
    %v617 = vpop.f32.mrb[0].mxu0
    %618 = vdwg.mxu0
    %619 = vmatprep.subr.mxu0 0.0
    %620 = vmatpush1.msra.mxu0 %v139
    %621 = vmatprep.subr.mxu0 0.0
    %622 = vmatpush1.msra.mxu0 %v140
    %623 = vmatprep.subr.mxu0 0.0
    %624 = vmatpush1.msra.mxu0 %v141
    %625 = vmatprep.subr.mxu0 0.0
    %626 = vmatpush1.msra.mxu0 %v142
    %627 = vmatprep.subr.mxu0 0.0
    %628 = vmatpush1.msra.mxu0 0.0
    %629 = vmatprep.subr.mxu0 0.0
    %630 = vmatpush1.msra.mxu0 0.0
    %631 = vmatprep.subr.mxu0 0.0
    %632 = vmatpush1.msra.mxu0 0.0
    %633 = vmatprep.subr.mxu0 0.0
    %634 = vmatpush1.msra.mxu0 0.0
    %635 = vmatprep.subr.mxu0 0.0
    %636 = vmatpush1.msra.mxu0 0.0
    %637 = vmatprep.subr.mxu0 0.0
    %638 = vmatpush1.msra.mxu0 0.0
    %639 = vmatprep.subr.mxu0 0.0
    %640 = vmatpush1.msra.mxu0 0.0
    %641 = vmatprep.subr.mxu0 0.0
    %642 = vmatpush1.msra.mxu0 0.0
    %643 = vmatprep.subr.mxu0 0.0
    %644 = vmatpush1.msra.mxu0 0.0
    %645 = vmatprep.subr.mxu0 0.0
    %646 = vmatpush1.msra.mxu0 0.0
    %647 = vmatprep.subr.mxu0 0.0
    %648 = vmatpush1.msra.mxu0 0.0
    %649 = vmatprep.subr.mxu0 0.0
    %650 = vmatpush1.msra.mxu0 0.0
    %651 = vmatprep.subr.mxu0 0.0
    %652 = vmatpush1.msra.mxu0 0.0
    %653 = vmatprep.subr.mxu0 0.0
    %654 = vmatpush1.msra.mxu0 0.0
    %655 = vmatprep.subr.mxu0 0.0
    %656 = vmatpush1.msra.mxu0 0.0
    %657 = vmatprep.subr.mxu0 0.0
    %658 = vmatpush1.msra.mxu0 0.0
    %659 = vmatprep.subr.mxu0 0.0
    %660 = vmatpush1.msra.mxu0 0.0
    %661 = vmatprep.subr.mxu0 0.0
    %662 = vmatpush1.msra.mxu0 0.0
    %663 = vmatprep.subr.mxu0 0.0
    %664 = vmatpush1.msra.mxu0 0.0
    %665 = vmatprep.subr.mxu0 0.0
    %666 = vmatpush1.msra.mxu0 0.0
    %667 = vmatprep.subr.mxu0 0.0
    %668 = vmatpush1.msra.mxu0 0.0
    %669 = vmatprep.subr.mxu0 0.0
    %670 = vmatpush1.msra.mxu0 0.0
    %671 = vmatprep.subr.mxu0 0.0
    %672 = vmatpush1.msra.mxu0 0.0
    %673 = vmatprep.subr.mxu0 0.0
    %674 = vmatpush1.msra.mxu0 0.0
    %675 = vmatprep.subr.mxu0 0.0
    %676 = vmatpush1.msra.mxu0 0.0
    %677 = vmatprep.subr.mxu0 0.0
    %678 = vmatpush1.msra.mxu0 0.0
    %679 = vmatprep.subr.mxu0 0.0
    %680 = vmatpush1.msra.mxu0 0.0
    %681 = vmatprep.subr.mxu0 0.0
    %682 = vmatpush1.msra.mxu0 0.0
    %683 = vmatprep.mubr.f32.mxu0 0.0
    %684 = vmatmul.mubr.f32.gmra.mrb[0].mxu0 %v164
    %v685 = vpop.f32.mrb[0].mxu0
    %v686 = vadd.f32 0.0, %v685
    %v687 = vpop.f32.mrb[0].mxu0
    %688 = vmatprep.mubr.f32.mxu0 0.0
    %689 = vmatmul.mubr.f32.gmra.mrb[0].mxu0 %v167
    %v690 = vpop.f32.mrb[0].mxu0
    %v691 = vadd.f32 0.0, %v690
    %v692 = vpop.f32.mrb[0].mxu0
    %693 = vdwg.mxu0
    %694 = vmatprep.subr.mxu0 0.0
    %695 = vmatpush1.msra.mxu0 %v143
    %696 = vmatprep.subr.mxu0 0.0
    %697 = vmatpush1.msra.mxu0 %v144
    %698 = vmatprep.subr.mxu0 0.0
    %699 = vmatpush1.msra.mxu0 %v145
    %700 = vmatprep.subr.mxu0 0.0
    %701 = vmatpush1.msra.mxu0 %v146
    %702 = vmatprep.subr.mxu0 0.0
    %703 = vmatpush1.msra.mxu0 0.0
    %704 = vmatprep.subr.mxu0 0.0
    %705 = vmatpush1.msra.mxu0 0.0
    %706 = vmatprep.subr.mxu0 0.0
    %707 = vmatpush1.msra.mxu0 0.0
    %708 = vmatprep.subr.mxu0 0.0
    %709 = vmatpush1.msra.mxu0 0.0
    %710 = vmatprep.subr.mxu0 0.0
    %711 = vmatpush1.msra.mxu0 0.0
    %712 = vmatprep.subr.mxu0 0.0
    %713 = vmatpush1.msra.mxu0 0.0
    %714 = vmatprep.subr.mxu0 0.0
    %715 = vmatpush1.msra.mxu0 0.0
    %716 = vmatprep.subr.mxu0 0.0
    %717 = vmatpush1.msra.mxu0 0.0
    %718 = vmatprep.subr.mxu0 0.0
    %719 = vmatpush1.msra.mxu0 0.0
    %720 = vmatprep.subr.mxu0 0.0
    %721 = vmatpush1.msra.mxu0 0.0
    %722 = vmatprep.subr.mxu0 0.0
    %723 = vmatpush1.msra.mxu0 0.0
    %724 = vmatprep.subr.mxu0 0.0
    %725 = vmatpush1.msra.mxu0 0.0
    %726 = vmatprep.subr.mxu0 0.0
    %727 = vmatpush1.msra.mxu0 0.0
    %728 = vmatprep.subr.mxu0 0.0
    %729 = vmatpush1.msra.mxu0 0.0
    %730 = vmatprep.subr.mxu0 0.0
    %731 = vmatpush1.msra.mxu0 0.0
    %732 = vmatprep.subr.mxu0 0.0
    %733 = vmatpush1.msra.mxu0 0.0
    %734 = vmatprep.subr.mxu0 0.0
    %735 = vmatpush1.msra.mxu0 0.0
    %736 = vmatprep.subr.mxu0 0.0
    %737 = vmatpush1.msra.mxu0 0.0
    %738 = vmatprep.subr.mxu0 0.0
    %739 = vmatpush1.msra.mxu0 0.0
    %740 = vmatprep.subr.mxu0 0.0
    %741 = vmatpush1.msra.mxu0 0.0
    %742 = vmatprep.subr.mxu0 0.0
    %743 = vmatpush1.msra.mxu0 0.0
    %744 = vmatprep.subr.mxu0 0.0
    %745 = vmatpush1.msra.mxu0 0.0
    %746 = vmatprep.subr.mxu0 0.0
    %747 = vmatpush1.msra.mxu0 0.0
    %748 = vmatprep.subr.mxu0 0.0
    %749 = vmatpush1.msra.mxu0 0.0
    %750 = vmatprep.subr.mxu0 0.0
    %751 = vmatpush1.msra.mxu0 0.0
    %752 = vmatprep.subr.mxu0 0.0
    %753 = vmatpush1.msra.mxu0 0.0
    %754 = vmatprep.subr.mxu0 0.0
    %755 = vmatpush1.msra.mxu0 0.0
    %756 = vmatprep.subr.mxu0 0.0
    %757 = vmatpush1.msra.mxu0 0.0
    %758 = vmatprep.mubr.f32.mxu0 0.0
    %759 = vmatmul.mubr.f32.gmra.mrb[0].mxu0 %v164
    %v760 = vpop.f32.mrb[0].mxu0
    %v761 = vadd.f32 0.0, %v760
    %v762 = vpop.f32.mrb[0].mxu0
    %763 = vmatprep.mubr.f32.mxu0 0.0
    %764 = vmatmul.mubr.f32.gmra.mrb[0].mxu0 %v167
    %v765 = vpop.f32.mrb[0].mxu0
    %v766 = vadd.f32 0.0, %v765
    %v767 = vpop.f32.mrb[0].mxu0
    %768 = vdwg.mxu0
    %769 = vmatprep.subr.mxu0 0.0
    %770 = vmatpush1.msra.mxu0 %v147
    %771 = vmatprep.subr.mxu0 0.0
    %772 = vmatpush1.msra.mxu0 %v148
    %773 = vmatprep.subr.mxu0 0.0
    %774 = vmatpush1.msra.mxu0 %v149
    %775 = vmatprep.subr.mxu0 0.0
    %776 = vmatpush1.msra.mxu0 %v150
    %777 = vmatprep.subr.mxu0 0.0
    %778 = vmatpush1.msra.mxu0 0.0
    %779 = vmatprep.subr.mxu0 0.0
    %780 = vmatpush1.msra.mxu0 0.0
    %781 = vmatprep.subr.mxu0 0.0
    %782 = vmatpush1.msra.mxu0 0.0
    %783 = vmatprep.subr.mxu0 0.0
    %784 = vmatpush1.msra.mxu0 0.0
    %785 = vmatprep.subr.mxu0 0.0
    %786 = vmatpush1.msra.mxu0 0.0
    %787 = vmatprep.subr.mxu0 0.0
    %788 = vmatpush1.msra.mxu0 0.0
    %789 = vmatprep.subr.mxu0 0.0
    %790 = vmatpush1.msra.mxu0 0.0
    %791 = vmatprep.subr.mxu0 0.0
    %792 = vmatpush1.msra.mxu0 0.0
    %793 = vmatprep.subr.mxu0 0.0
    %794 = vmatpush1.msra.mxu0 0.0
    %795 = vmatprep.subr.mxu0 0.0
    %796 = vmatpush1.msra.mxu0 0.0
    %797 = vmatprep.subr.mxu0 0.0
    %798 = vmatpush1.msra.mxu0 0.0
    %799 = vmatprep.subr.mxu0 0.0
    %800 = vmatpush1.msra.mxu0 0.0
    %801 = vmatprep.subr.mxu0 0.0
    %802 = vmatpush1.msra.mxu0 0.0
    %803 = vmatprep.subr.mxu0 0.0
    %804 = vmatpush1.msra.mxu0 0.0
    %805 = vmatprep.subr.mxu0 0.0
    %806 = vmatpush1.msra.mxu0 0.0
    %807 = vmatprep.subr.mxu0 0.0
    %808 = vmatpush1.msra.mxu0 0.0
    %809 = vmatprep.subr.mxu0 0.0
    %810 = vmatpush1.msra.mxu0 0.0
    %811 = vmatprep.subr.mxu0 0.0
    %812 = vmatpush1.msra.mxu0 0.0
    %813 = vmatprep.subr.mxu0 0.0
    %814 = vmatpush1.msra.mxu0 0.0
    %815 = vmatprep.subr.mxu0 0.0
    %816 = vmatpush1.msra.mxu0 0.0
    %817 = vmatprep.subr.mxu0 0.0
    %818 = vmatpush1.msra.mxu0 0.0
    %819 = vmatprep.subr.mxu0 0.0
    %820 = vmatpush1.msra.mxu0 0.0
    %821 = vmatprep.subr.mxu0 0.0
    %822 = vmatpush1.msra.mxu0 0.0
    %823 = vmatprep.subr.mxu0 0.0
    %824 = vmatpush1.msra.mxu0 0.0
    %825 = vmatprep.subr.mxu0 0.0
    %826 = vmatpush1.msra.mxu0 0.0
    %827 = vmatprep.subr.mxu0 0.0
    %828 = vmatpush1.msra.mxu0 0.0
    %829 = vmatprep.subr.mxu0 0.0
    %830 = vmatpush1.msra.mxu0 0.0
    %831 = vmatprep.subr.mxu0 0.0
    %832 = vmatpush1.msra.mxu0 0.0
    %833 = vmatprep.mubr.f32.mxu0 0.0
    %834 = vmatmul.mubr.f32.gmra.mrb[0].mxu0 %v164
    %v835 = vpop.f32.mrb[0].mxu0
    %v836 = vadd.f32 0.0, %v835
    %v837 = vpop.f32.mrb[0].mxu0
    %838 = vmatprep.mubr.f32.mxu0 0.0
    %839 = vmatmul.mubr.f32.gmra.mrb[0].mxu0 %v167
    %v840 = vpop.f32.mrb[0].mxu0
    %v841 = vadd.f32 0.0, %v840
    %v842 = vpop.f32.mrb[0].mxu0
    %843 = vdwg.mxu0
    %844 = vmatprep.subr.mxu0 0.0
    %845 = vmatpush1.msra.mxu0 %v151
    %846 = vmatprep.subr.mxu0 0.0
    %847 = vmatpush1.msra.mxu0 %v152
    %848 = vmatprep.subr.mxu0 0.0
    %849 = vmatpush1.msra.mxu0 %v153
    %850 = vmatprep.subr.mxu0 0.0
    %851 = vmatpush1.msra.mxu0 %v154
    %852 = vmatprep.subr.mxu0 0.0
    %853 = vmatpush1.msra.mxu0 0.0
    %854 = vmatprep.subr.mxu0 0.0
    %855 = vmatpush1.msra.mxu0 0.0
    %856 = vmatprep.subr.mxu0 0.0
    %857 = vmatpush1.msra.mxu0 0.0
    %858 = vmatprep.subr.mxu0 0.0
    %859 = vmatpush1.msra.mxu0 0.0
    %860 = vmatprep.subr.mxu0 0.0
    %861 = vmatpush1.msra.mxu0 0.0
    %862 = vmatprep.subr.mxu0 0.0
    %863 = vmatpush1.msra.mxu0 0.0
    %864 = vmatprep.subr.mxu0 0.0
    %865 = vmatpush1.msra.mxu0 0.0
    %866 = vmatprep.subr.mxu0 0.0
    %867 = vmatpush1.msra.mxu0 0.0
    %868 = vmatprep.subr.mxu0 0.0
    %869 = vmatpush1.msra.mxu0 0.0
    %870 = vmatprep.subr.mxu0 0.0
    %871 = vmatpush1.msra.mxu0 0.0
    %872 = vmatprep.subr.mxu0 0.0
    %873 = vmatpush1.msra.mxu0 0.0
    %874 = vmatprep.subr.mxu0 0.0
    %875 = vmatpush1.msra.mxu0 0.0
    %876 = vmatprep.subr.mxu0 0.0
    %877 = vmatpush1.msra.mxu0 0.0
    %878 = vmatprep.subr.mxu0 0.0
    %879 = vmatpush1.msra.mxu0 0.0
    %880 = vmatprep.subr.mxu0 0.0
    %881 = vmatpush1.msra.mxu0 0.0
    %882 = vmatprep.subr.mxu0 0.0
    %883 = vmatpush1.msra.mxu0 0.0
    %884 = vmatprep.subr.mxu0 0.0
    %885 = vmatpush1.msra.mxu0 0.0
    %886 = vmatprep.subr.mxu0 0.0
    %887 = vmatpush1.msra.mxu0 0.0
    %888 = vmatprep.subr.mxu0 0.0
    %889 = vmatpush1.msra.mxu0 0.0
    %890 = vmatprep.subr.mxu0 0.0
    %891 = vmatpush1.msra.mxu0 0.0
    %892 = vmatprep.subr.mxu0 0.0
    %893 = vmatpush1.msra.mxu0 0.0
    %894 = vmatprep.subr.mxu0 0.0
    %895 = vmatpush1.msra.mxu0 0.0
    %896 = vmatprep.subr.mxu0 0.0
    %897 = vmatpush1.msra.mxu0 0.0
    %898 = vmatprep.subr.mxu0 0.0
    %899 = vmatpush1.msra.mxu0 0.0
    %900 = vmatprep.subr.mxu0 0.0
    %901 = vmatpush1.msra.mxu0 0.0
    %902 = vmatprep.subr.mxu0 0.0
    %903 = vmatpush1.msra.mxu0 0.0
    %904 = vmatprep.subr.mxu0 0.0
    %905 = vmatpush1.msra.mxu0 0.0
    %906 = vmatprep.subr.mxu0 0.0
    %907 = vmatpush1.msra.mxu0 0.0
    %908 = vmatprep.mubr.f32.mxu0 0.0
    %909 = vmatmul.mubr.f32.gmra.mrb[0].mxu0 %v164
    %v910 = vpop.f32.mrb[0].mxu0
    %v911 = vadd.f32 0.0, %v910
    %v912 = vpop.f32.mrb[0].mxu0
    %913 = vmatprep.mubr.f32.mxu0 0.0
    %914 = vmatmul.mubr.f32.gmra.mrb[0].mxu0 %v167
    %v915 = vpop.f32.mrb[0].mxu0
    %v916 = vadd.f32 0.0, %v915
    %v917 = vpop.f32.mrb[0].mxu0
    %918 = vdwg.mxu0
    %919 = vmatprep.subr.mxu0 0.0
    %920 = vmatpush1.msra.mxu0 %v155
    %921 = vmatprep.subr.mxu0 0.0
    %922 = vmatpush1.msra.mxu0 %v156
    %923 = vmatprep.subr.mxu0 0.0
    %924 = vmatpush1.msra.mxu0 %v157
    %925 = vmatprep.subr.mxu0 0.0
    %926 = vmatpush1.msra.mxu0 %v158
    %927 = vmatprep.subr.mxu0 0.0
    %928 = vmatpush1.msra.mxu0 0.0
    %929 = vmatprep.subr.mxu0 0.0
    %930 = vmatpush1.msra.mxu0 0.0
    %931 = vmatprep.subr.mxu0 0.0
    %932 = vmatpush1.msra.mxu0 0.0
    %933 = vmatprep.subr.mxu0 0.0
    %934 = vmatpush1.msra.mxu0 0.0
    %935 = vmatprep.subr.mxu0 0.0
    %936 = vmatpush1.msra.mxu0 0.0
    %937 = vmatprep.subr.mxu0 0.0
    %938 = vmatpush1.msra.mxu0 0.0
    %939 = vmatprep.subr.mxu0 0.0
    %940 = vmatpush1.msra.mxu0 0.0
    %941 = vmatprep.subr.mxu0 0.0
    %942 = vmatpush1.msra.mxu0 0.0
    %943 = vmatprep.subr.mxu0 0.0
    %944 = vmatpush1.msra.mxu0 0.0
    %945 = vmatprep.subr.mxu0 0.0
    %946 = vmatpush1.msra.mxu0 0.0
    %947 = vmatprep.subr.mxu0 0.0
    %948 = vmatpush1.msra.mxu0 0.0
    %949 = vmatprep.subr.mxu0 0.0
    %950 = vmatpush1.msra.mxu0 0.0
    %951 = vmatprep.subr.mxu0 0.0
    %952 = vmatpush1.msra.mxu0 0.0
    %953 = vmatprep.subr.mxu0 0.0
    %954 = vmatpush1.msra.mxu0 0.0
    %955 = vmatprep.subr.mxu0 0.0
    %956 = vmatpush1.msra.mxu0 0.0
    %957 = vmatprep.subr.mxu0 0.0
    %958 = vmatpush1.msra.mxu0 0.0
    %959 = vmatprep.subr.mxu0 0.0
    %960 = vmatpush1.msra.mxu0 0.0
    %961 = vmatprep.subr.mxu0 0.0
    %962 = vmatpush1.msra.mxu0 0.0
    %963 = vmatprep.subr.mxu0 0.0
    %964 = vmatpush1.msra.mxu0 0.0
    %965 = vmatprep.subr.mxu0 0.0
    %966 = vmatpush1.msra.mxu0 0.0
    %967 = vmatprep.subr.mxu0 0.0
    %968 = vmatpush1.msra.mxu0 0.0
    %969 = vmatprep.subr.mxu0 0.0
    %970 = vmatpush1.msra.mxu0 0.0
    %971 = vmatprep.subr.mxu0 0.0
    %972 = vmatpush1.msra.mxu0 0.0
    %973 = vmatprep.subr.mxu0 0.0
    %974 = vmatpush1.msra.mxu0 0.0
    %975 = vmatprep.subr.mxu0 0.0
    %976 = vmatpush1.msra.mxu0 0.0
    %977 = vmatprep.subr.mxu0 0.0
    %978 = vmatpush1.msra.mxu0 0.0
    %979 = vmatprep.subr.mxu0 0.0
    %980 = vmatpush1.msra.mxu0 0.0
    %981 = vmatprep.subr.mxu0 0.0
    %982 = vmatpush1.msra.mxu0 0.0
    %983 = vmatprep.mubr.f32.mxu0 0.0
    %984 = vmatmul.mubr.f32.gmra.mrb[0].mxu0 %v164
    %v985 = vpop.f32.mrb[0].mxu0
    %v986 = vadd.f32 0.0, %v985
    %v987 = vpop.f32.mrb[0].mxu0
    %988 = vmatprep.mubr.f32.mxu0 0.0
    %989 = vmatmul.mubr.f32.gmra.mrb[0].mxu0 %v167
    %v990 = vpop.f32.mrb[0].mxu0
    %v991 = vadd.f32 0.0, %v990
    %v992 = vpop.f32.mrb[0].mxu0
    %993 = vdwg.mxu0
    %994 = vmatprep.subr.mxu0 0.0
    %995 = vmatpush1.msra.mxu0 %v159
    %996 = vmatprep.subr.mxu0 0.0
    %997 = vmatpush1.msra.mxu0 %v160
    %998 = vmatprep.subr.mxu0 0.0
    %999 = vmatpush1.msra.mxu0 %v161
    %1000 = vmatprep.subr.mxu0 0.0
    %1001 = vmatpush1.msra.mxu0 %v162
    %1002 = vmatprep.subr.mxu0 0.0
    %1003 = vmatpush1.msra.mxu0 0.0
    %1004 = vmatprep.subr.mxu0 0.0
    %1005 = vmatpush1.msra.mxu0 0.0
    %1006 = vmatprep.subr.mxu0 0.0
    %1007 = vmatpush1.msra.mxu0 0.0
    %1008 = vmatprep.subr.mxu0 0.0
    %1009 = vmatpush1.msra.mxu0 0.0
    %1010 = vmatprep.subr.mxu0 0.0
    %1011 = vmatpush1.msra.mxu0 0.0
    %1012 = vmatprep.subr.mxu0 0.0
    %1013 = vmatpush1.msra.mxu0 0.0
    %1014 = vmatprep.subr.mxu0 0.0
    %1015 = vmatpush1.msra.mxu0 0.0
    %1016 = vmatprep.subr.mxu0 0.0
    %1017 = vmatpush1.msra.mxu0 0.0
    %1018 = vmatprep.subr.mxu0 0.0
    %1019 = vmatpush1.msra.mxu0 0.0
    %1020 = vmatprep.subr.mxu0 0.0
    %1021 = vmatpush1.msra.mxu0 0.0
    %1022 = vmatprep.subr.mxu0 0.0
    %1023 = vmatpush1.msra.mxu0 0.0
    %1024 = vmatprep.subr.mxu0 0.0
    %1025 = vmatpush1.msra.mxu0 0.0
    %1026 = vmatprep.subr.mxu0 0.0
    %1027 = vmatpush1.msra.mxu0 0.0
    %1028 = vmatprep.subr.mxu0 0.0
    %1029 = vmatpush1.msra.mxu0 0.0
    %1030 = vmatprep.subr.mxu0 0.0
    %1031 = vmatpush1.msra.mxu0 0.0
    %1032 = vmatprep.subr.mxu0 0.0
    %1033 = vmatpush1.msra.mxu0 0.0
    %1034 = vmatprep.subr.mxu0 0.0
    %1035 = vmatpush1.msra.mxu0 0.0
    %1036 = vmatprep.subr.mxu0 0.0
    %1037 = vmatpush1.msra.mxu0 0.0
    %1038 = vmatprep.subr.mxu0 0.0
    %1039 = vmatpush1.msra.mxu0 0.0
    %1040 = vmatprep.subr.mxu0 0.0
    %1041 = vmatpush1.msra.mxu0 0.0
    %1042 = vmatprep.subr.mxu0 0.0
    %1043 = vmatpush1.msra.mxu0 0.0
    %1044 = vmatprep.subr.mxu0 0.0
    %1045 = vmatpush1.msra.mxu0 0.0
    %1046 = vmatprep.subr.mxu0 0.0
    %1047 = vmatpush1.msra.mxu0 0.0
    %1048 = vmatprep.subr.mxu0 0.0
    %1049 = vmatpush1.msra.mxu0 0.0
    %1050 = vmatprep.subr.mxu0 0.0
    %1051 = vmatpush1.msra.mxu0 0.0
    %1052 = vmatprep.subr.mxu0 0.0
    %1053 = vmatpush1.msra.mxu0 0.0
    %1054 = vmatprep.subr.mxu0 0.0
    %1055 = vmatpush1.msra.mxu0 0.0
    %1056 = vmatprep.subr.mxu0 0.0
    %1057 = vmatpush1.msra.mxu0 0.0
    %1058 = vmatprep.mubr.f32.mxu0 0.0
    %1059 = vmatmul.mubr.f32.gmra.mrb[0].mxu0 %v164
    %v1060 = vpop.f32.mrb[0].mxu0
    %v1061 = vadd.f32 0.0, %v1060
    %v1062 = vpop.f32.mrb[0].mxu0
    %1063 = vmatprep.mubr.f32.mxu0 0.0
    %1064 = vmatmul.mubr.f32.gmra.mrb[0].mxu0 %v167
    %v1065 = vpop.f32.mrb[0].mxu0
    %v1066 = vadd.f32 0.0, %v1065
    %v1067 = vpop.f32.mrb[0].mxu0
    %1068 = vdwg.mxu0
    %vm1069 = vcmask 64512
    %v1071 = vsel %vm1069, %v236, 0
    %v1074 = vsel %vm1069, %v536, 0
    %1076 = vmatprep.subr.mxu0 0.0
    %1077 = vmatpush1.xpose.msra.mxu0 %v1074
    %1078 = vmatprep.subr.mxu0 0.0
    %1079 = vmatpush1.xpose.msra.mxu0 0.0
    %1080 = vmatprep.subr.mxu0 0.0
    %1081 = vmatpush1.xpose.msra.mxu0 0.0
    %1082 = vmatprep.subr.mxu0 0.0
    %1083 = vmatpush1.xpose.msra.mxu0 0.0
    %1084 = vmatprep.subr.mxu0 0.0
    %1085 = vmatpush1.xpose.msra.mxu0 0.0
    %1086 = vmatprep.subr.mxu0 0.0
    %1087 = vmatpush1.xpose.msra.mxu0 0.0
    %1088 = vmatprep.subr.mxu0 0.0
    %1089 = vmatpush1.xpose.msra.mxu0 0.0
    %1090 = vmatprep.subr.mxu0 0.0
    %1091 = vmatpush1.xpose.msra.mxu0 0.0
    %1092 = vmatprep.subr.mxu0 0.0
    %1093 = vmatpush1.xpose.msra.mxu0 0.0
    %1094 = vmatprep.subr.mxu0 0.0
    %1095 = vmatpush1.xpose.msra.mxu0 0.0
    %1096 = vmatprep.subr.mxu0 0.0
    %1097 = vmatpush1.xpose.msra.mxu0 0.0
    %1098 = vmatprep.subr.mxu0 0.0
    %1099 = vmatpush1.xpose.msra.mxu0 0.0
    %1100 = vmatprep.subr.mxu0 0.0
    %1101 = vmatpush1.xpose.msra.mxu0 0.0
    %1102 = vmatprep.subr.mxu0 0.0
    %1103 = vmatpush1.xpose.msra.mxu0 0.0
    %1104 = vmatprep.subr.mxu0 0.0
    %1105 = vmatpush1.xpose.msra.mxu0 0.0
    %1106 = vmatprep.subr.mxu0 0.0
    %1107 = vmatpush1.xpose.msra.mxu0 0.0
    %1108 = vmatprep.subr.mxu0 0.0
    %1109 = vmatpush1.xpose.msra.mxu0 0.0
    %1110 = vmatprep.subr.mxu0 0.0
    %1111 = vmatpush1.xpose.msra.mxu0 0.0
    %1112 = vmatprep.subr.mxu0 0.0
    %1113 = vmatpush1.xpose.msra.mxu0 0.0
    %1114 = vmatprep.subr.mxu0 0.0
    %1115 = vmatpush1.xpose.msra.mxu0 0.0
    %1116 = vmatprep.subr.mxu0 0.0
    %1117 = vmatpush1.xpose.msra.mxu0 0.0
    %1118 = vmatprep.subr.mxu0 0.0
    %1119 = vmatpush1.xpose.msra.mxu0 0.0
    %1120 = vmatprep.subr.mxu0 0.0
    %1121 = vmatpush1.xpose.msra.mxu0 0.0
    %1122 = vmatprep.subr.mxu0 0.0
    %1123 = vmatpush1.xpose.msra.mxu0 0.0
    %1124 = vmatprep.subr.mxu0 0.0
    %1125 = vmatpush1.xpose.msra.mxu0 0.0
    %1126 = vmatprep.subr.mxu0 0.0
    %1127 = vmatpush1.xpose.msra.mxu0 0.0
    %1128 = vmatprep.subr.mxu0 0.0
    %1129 = vmatpush1.xpose.msra.mxu0 0.0
    %1130 = vmatprep.subr.mxu0 0.0
    %1131 = vmatpush1.xpose.msra.mxu0 0.0
    %1132 = vmatprep.subr.mxu0 0.0
    %1133 = vmatpush1.xpose.msra.mxu0 0.0
    %1134 = vmatprep.subr.mxu0 0.0
    %1135 = vmatpush1.xpose.msra.mxu0 0.0
    %1136 = vmatprep.subr.mxu0 0.0
    %1137 = vmatpush1.xpose.msra.mxu0 0.0
    %1138 = vmatprep.subr.mxu0 0.0
    %1139 = vmatpush1.xpose.msra.mxu0 0.0
    %1140 = vmatprep.mubr.f32.mxu0 0.0
    %1141 = vmatmul.mubr.f32.gmra.mrb[0].mxu0 %v1071
    %v1142 = vpop.f32.mrb[0].mxu0
    %v1143 = vadd.f32 0.0, %v1142
    %v1144 = vpop.f32.mrb[0].mxu0
    %1145 = vdwg.mxu0
    %v1147 = vsel %vm1069, %v241, 0
    %v1150 = vsel %vm1069, %v541, 0
    %1152 = vmatprep.subr.mxu0 0.0
    %1153 = vmatpush1.xpose.msra.mxu0 %v1150
    %1154 = vmatprep.subr.mxu0 0.0
    %1155 = vmatpush1.xpose.msra.mxu0 0.0
    %1156 = vmatprep.subr.mxu0 0.0
    %1157 = vmatpush1.xpose.msra.mxu0 0.0
    %1158 = vmatprep.subr.mxu0 0.0
    %1159 = vmatpush1.xpose.msra.mxu0 0.0
    %1160 = vmatprep.subr.mxu0 0.0
    %1161 = vmatpush1.xpose.msra.mxu0 0.0
    %1162 = vmatprep.subr.mxu0 0.0
    %1163 = vmatpush1.xpose.msra.mxu0 0.0
    %1164 = vmatprep.subr.mxu0 0.0
    %1165 = vmatpush1.xpose.msra.mxu0 0.0
    %1166 = vmatprep.subr.mxu0 0.0
    %1167 = vmatpush1.xpose.msra.mxu0 0.0
    %1168 = vmatprep.subr.mxu0 0.0
    %1169 = vmatpush1.xpose.msra.mxu0 0.0
    %1170 = vmatprep.subr.mxu0 0.0
    %1171 = vmatpush1.xpose.msra.mxu0 0.0
    %1172 = vmatprep.subr.mxu0 0.0
    %1173 = vmatpush1.xpose.msra.mxu0 0.0
    %1174 = vmatprep.subr.mxu0 0.0
    %1175 = vmatpush1.xpose.msra.mxu0 0.0
    %1176 = vmatprep.subr.mxu0 0.0
    %1177 = vmatpush1.xpose.msra.mxu0 0.0
    %1178 = vmatprep.subr.mxu0 0.0
    %1179 = vmatpush1.xpose.msra.mxu0 0.0
    %1180 = vmatprep.subr.mxu0 0.0
    %1181 = vmatpush1.xpose.msra.mxu0 0.0
    %1182 = vmatprep.subr.mxu0 0.0
    %1183 = vmatpush1.xpose.msra.mxu0 0.0
    %1184 = vmatprep.subr.mxu0 0.0
    %1185 = vmatpush1.xpose.msra.mxu0 0.0
    %1186 = vmatprep.subr.mxu0 0.0
    %1187 = vmatpush1.xpose.msra.mxu0 0.0
    %1188 = vmatprep.subr.mxu0 0.0
    %1189 = vmatpush1.xpose.msra.mxu0 0.0
    %1190 = vmatprep.subr.mxu0 0.0
    %1191 = vmatpush1.xpose.msra.mxu0 0.0
    %1192 = vmatprep.subr.mxu0 0.0
    %1193 = vmatpush1.xpose.msra.mxu0 0.0
    %1194 = vmatprep.subr.mxu0 0.0
    %1195 = vmatpush1.xpose.msra.mxu0 0.0
    %1196 = vmatprep.subr.mxu0 0.0
    %1197 = vmatpush1.xpose.msra.mxu0 0.0
    %1198 = vmatprep.subr.mxu0 0.0
    %1199 = vmatpush1.xpose.msra.mxu0 0.0
    %1200 = vmatprep.subr.mxu0 0.0
    %1201 = vmatpush1.xpose.msra.mxu0 0.0
    %1202 = vmatprep.subr.mxu0 0.0
    %1203 = vmatpush1.xpose.msra.mxu0 0.0
    %1204 = vmatprep.subr.mxu0 0.0
    %1205 = vmatpush1.xpose.msra.mxu0 0.0
    %1206 = vmatprep.subr.mxu0 0.0
    %1207 = vmatpush1.xpose.msra.mxu0 0.0
    %1208 = vmatprep.subr.mxu0 0.0
    %1209 = vmatpush1.xpose.msra.mxu0 0.0
    %1210 = vmatprep.subr.mxu0 0.0
    %1211 = vmatpush1.xpose.msra.mxu0 0.0
    %1212 = vmatprep.subr.mxu0 0.0
    %1213 = vmatpush1.xpose.msra.mxu0 0.0
    %1214 = vmatprep.subr.mxu0 0.0
    %1215 = vmatpush1.xpose.msra.mxu0 0.0
    %1216 = vmatprep.mubr.f32.mxu0 0.0
    %1217 = vmatmul.mubr.f32.gmra.mrb[0].mxu0 %v1147
    %v1218 = vpop.f32.mrb[0].mxu0
    %v1219 = vadd.f32 0.0, %v1218
    %v1220 = vpop.f32.mrb[0].mxu0
    %1221 = vdwg.mxu0
    %v1223 = vsel %vm1069, %v311, 0
    %v1226 = vsel %vm1069, %v611, 0
    %1228 = vmatprep.subr.mxu0 0.0
    %1229 = vmatpush1.xpose.msra.mxu0 %v1226
    %1230 = vmatprep.subr.mxu0 0.0
    %1231 = vmatpush1.xpose.msra.mxu0 0.0
    %1232 = vmatprep.subr.mxu0 0.0
    %1233 = vmatpush1.xpose.msra.mxu0 0.0
    %1234 = vmatprep.subr.mxu0 0.0
    %1235 = vmatpush1.xpose.msra.mxu0 0.0
    %1236 = vmatprep.subr.mxu0 0.0
    %1237 = vmatpush1.xpose.msra.mxu0 0.0
    %1238 = vmatprep.subr.mxu0 0.0
    %1239 = vmatpush1.xpose.msra.mxu0 0.0
    %1240 = vmatprep.subr.mxu0 0.0
    %1241 = vmatpush1.xpose.msra.mxu0 0.0
    %1242 = vmatprep.subr.mxu0 0.0
    %1243 = vmatpush1.xpose.msra.mxu0 0.0
    %1244 = vmatprep.subr.mxu0 0.0
    %1245 = vmatpush1.xpose.msra.mxu0 0.0
    %1246 = vmatprep.subr.mxu0 0.0
    %1247 = vmatpush1.xpose.msra.mxu0 0.0
    %1248 = vmatprep.subr.mxu0 0.0
    %1249 = vmatpush1.xpose.msra.mxu0 0.0
    %1250 = vmatprep.subr.mxu0 0.0
    %1251 = vmatpush1.xpose.msra.mxu0 0.0
    %1252 = vmatprep.subr.mxu0 0.0
    %1253 = vmatpush1.xpose.msra.mxu0 0.0
    %1254 = vmatprep.subr.mxu0 0.0
    %1255 = vmatpush1.xpose.msra.mxu0 0.0
    %1256 = vmatprep.subr.mxu0 0.0
    %1257 = vmatpush1.xpose.msra.mxu0 0.0
    %1258 = vmatprep.subr.mxu0 0.0
    %1259 = vmatpush1.xpose.msra.mxu0 0.0
    %1260 = vmatprep.subr.mxu0 0.0
    %1261 = vmatpush1.xpose.msra.mxu0 0.0
    %1262 = vmatprep.subr.mxu0 0.0
    %1263 = vmatpush1.xpose.msra.mxu0 0.0
    %1264 = vmatprep.subr.mxu0 0.0
    %1265 = vmatpush1.xpose.msra.mxu0 0.0
    %1266 = vmatprep.subr.mxu0 0.0
    %1267 = vmatpush1.xpose.msra.mxu0 0.0
    %1268 = vmatprep.subr.mxu0 0.0
    %1269 = vmatpush1.xpose.msra.mxu0 0.0
    %1270 = vmatprep.subr.mxu0 0.0
    %1271 = vmatpush1.xpose.msra.mxu0 0.0
    %1272 = vmatprep.subr.mxu0 0.0
    %1273 = vmatpush1.xpose.msra.mxu0 0.0
    %1274 = vmatprep.subr.mxu0 0.0
    %1275 = vmatpush1.xpose.msra.mxu0 0.0
    %1276 = vmatprep.subr.mxu0 0.0
    %1277 = vmatpush1.xpose.msra.mxu0 0.0
    %1278 = vmatprep.subr.mxu0 0.0
    %1279 = vmatpush1.xpose.msra.mxu0 0.0
    %1280 = vmatprep.subr.mxu0 0.0
    %1281 = vmatpush1.xpose.msra.mxu0 0.0
    %1282 = vmatprep.subr.mxu0 0.0
    %1283 = vmatpush1.xpose.msra.mxu0 0.0
    %1284 = vmatprep.subr.mxu0 0.0
    %1285 = vmatpush1.xpose.msra.mxu0 0.0
    %1286 = vmatprep.subr.mxu0 0.0
    %1287 = vmatpush1.xpose.msra.mxu0 0.0
    %1288 = vmatprep.subr.mxu0 0.0
    %1289 = vmatpush1.xpose.msra.mxu0 0.0
    %1290 = vmatprep.subr.mxu0 0.0
    %1291 = vmatpush1.xpose.msra.mxu0 0.0
    %1292 = vmatprep.mubr.f32.mxu0 0.0
    %1293 = vmatmul.mubr.f32.gmra.mrb[0].mxu0 %v1223
    %v1294 = vpop.f32.mrb[0].mxu0
    %v1295 = vadd.f32 0.0, %v1294
    %v1296 = vpop.f32.mrb[0].mxu0
    %1297 = vdwg.mxu0
    %v1299 = vsel %vm1069, %v316, 0
    %v1302 = vsel %vm1069, %v616, 0
    %1304 = vmatprep.subr.mxu0 0.0
    %1305 = vmatpush1.xpose.msra.mxu0 %v1302
    %1306 = vmatprep.subr.mxu0 0.0
    %1307 = vmatpush1.xpose.msra.mxu0 0.0
    %1308 = vmatprep.subr.mxu0 0.0
    %1309 = vmatpush1.xpose.msra.mxu0 0.0
    %1310 = vmatprep.subr.mxu0 0.0
    %1311 = vmatpush1.xpose.msra.mxu0 0.0
    %1312 = vmatprep.subr.mxu0 0.0
    %1313 = vmatpush1.xpose.msra.mxu0 0.0
    %1314 = vmatprep.subr.mxu0 0.0
    %1315 = vmatpush1.xpose.msra.mxu0 0.0
    %1316 = vmatprep.subr.mxu0 0.0
    %1317 = vmatpush1.xpose.msra.mxu0 0.0
    %1318 = vmatprep.subr.mxu0 0.0
    %1319 = vmatpush1.xpose.msra.mxu0 0.0
    %1320 = vmatprep.subr.mxu0 0.0
    %1321 = vmatpush1.xpose.msra.mxu0 0.0
    %1322 = vmatprep.subr.mxu0 0.0
    %1323 = vmatpush1.xpose.msra.mxu0 0.0
    %1324 = vmatprep.subr.mxu0 0.0
    %1325 = vmatpush1.xpose.msra.mxu0 0.0
    %1326 = vmatprep.subr.mxu0 0.0
    %1327 = vmatpush1.xpose.msra.mxu0 0.0
    %1328 = vmatprep.subr.mxu0 0.0
    %1329 = vmatpush1.xpose.msra.mxu0 0.0
    %1330 = vmatprep.subr.mxu0 0.0
    %1331 = vmatpush1.xpose.msra.mxu0 0.0
    %1332 = vmatprep.subr.mxu0 0.0
    %1333 = vmatpush1.xpose.msra.mxu0 0.0
    %1334 = vmatprep.subr.mxu0 0.0
    %1335 = vmatpush1.xpose.msra.mxu0 0.0
    %1336 = vmatprep.subr.mxu0 0.0
    %1337 = vmatpush1.xpose.msra.mxu0 0.0
    %1338 = vmatprep.subr.mxu0 0.0
    %1339 = vmatpush1.xpose.msra.mxu0 0.0
    %1340 = vmatprep.subr.mxu0 0.0
    %1341 = vmatpush1.xpose.msra.mxu0 0.0
    %1342 = vmatprep.subr.mxu0 0.0
    %1343 = vmatpush1.xpose.msra.mxu0 0.0
    %1344 = vmatprep.subr.mxu0 0.0
    %1345 = vmatpush1.xpose.msra.mxu0 0.0
    %1346 = vmatprep.subr.mxu0 0.0
    %1347 = vmatpush1.xpose.msra.mxu0 0.0
    %1348 = vmatprep.subr.mxu0 0.0
    %1349 = vmatpush1.xpose.msra.mxu0 0.0
    %1350 = vmatprep.subr.mxu0 0.0
    %1351 = vmatpush1.xpose.msra.mxu0 0.0
    %1352 = vmatprep.subr.mxu0 0.0
    %1353 = vmatpush1.xpose.msra.mxu0 0.0
    %1354 = vmatprep.subr.mxu0 0.0
    %1355 = vmatpush1.xpose.msra.mxu0 0.0
    %1356 = vmatprep.subr.mxu0 0.0
    %1357 = vmatpush1.xpose.msra.mxu0 0.0
    %1358 = vmatprep.subr.mxu0 0.0
    %1359 = vmatpush1.xpose.msra.mxu0 0.0
    %1360 = vmatprep.subr.mxu0 0.0
    %1361 = vmatpush1.xpose.msra.mxu0 0.0
    %1362 = vmatprep.subr.mxu0 0.0
    %1363 = vmatpush1.xpose.msra.mxu0 0.0
    %1364 = vmatprep.subr.mxu0 0.0
    %1365 = vmatpush1.xpose.msra.mxu0 0.0
    %1366 = vmatprep.subr.mxu0 0.0
    %1367 = vmatpush1.xpose.msra.mxu0 0.0
    %1368 = vmatprep.mubr.f32.mxu0 0.0
    %1369 = vmatmul.mubr.f32.gmra.mrb[0].mxu0 %v1299
    %v1370 = vpop.f32.mrb[0].mxu0
    %v1371 = vadd.f32 0.0, %v1370
    %v1372 = vpop.f32.mrb[0].mxu0
    %1373 = vdwg.mxu0
    %v1375 = vsel %vm1069, %v386, 0
    %v1378 = vsel %vm1069, %v686, 0
    %1380 = vmatprep.subr.mxu0 0.0
    %1381 = vmatpush1.xpose.msra.mxu0 %v1378
    %1382 = vmatprep.subr.mxu0 0.0
    %1383 = vmatpush1.xpose.msra.mxu0 0.0
    %1384 = vmatprep.subr.mxu0 0.0
    %1385 = vmatpush1.xpose.msra.mxu0 0.0
    %1386 = vmatprep.subr.mxu0 0.0
    %1387 = vmatpush1.xpose.msra.mxu0 0.0
    %1388 = vmatprep.subr.mxu0 0.0
    %1389 = vmatpush1.xpose.msra.mxu0 0.0
    %1390 = vmatprep.subr.mxu0 0.0
    %1391 = vmatpush1.xpose.msra.mxu0 0.0
    %1392 = vmatprep.subr.mxu0 0.0
    %1393 = vmatpush1.xpose.msra.mxu0 0.0
    %1394 = vmatprep.subr.mxu0 0.0
    %1395 = vmatpush1.xpose.msra.mxu0 0.0
    %1396 = vmatprep.subr.mxu0 0.0
    %1397 = vmatpush1.xpose.msra.mxu0 0.0
    %1398 = vmatprep.subr.mxu0 0.0
    %1399 = vmatpush1.xpose.msra.mxu0 0.0
    %1400 = vmatprep.subr.mxu0 0.0
    %1401 = vmatpush1.xpose.msra.mxu0 0.0
    %1402 = vmatprep.subr.mxu0 0.0
    %1403 = vmatpush1.xpose.msra.mxu0 0.0
    %1404 = vmatprep.subr.mxu0 0.0
    %1405 = vmatpush1.xpose.msra.mxu0 0.0
    %1406 = vmatprep.subr.mxu0 0.0
    %1407 = vmatpush1.xpose.msra.mxu0 0.0
    %1408 = vmatprep.subr.mxu0 0.0
    %1409 = vmatpush1.xpose.msra.mxu0 0.0
    %1410 = vmatprep.subr.mxu0 0.0
    %1411 = vmatpush1.xpose.msra.mxu0 0.0
    %1412 = vmatprep.subr.mxu0 0.0
    %1413 = vmatpush1.xpose.msra.mxu0 0.0
    %1414 = vmatprep.subr.mxu0 0.0
    %1415 = vmatpush1.xpose.msra.mxu0 0.0
    %1416 = vmatprep.subr.mxu0 0.0
    %1417 = vmatpush1.xpose.msra.mxu0 0.0
    %1418 = vmatprep.subr.mxu0 0.0
    %1419 = vmatpush1.xpose.msra.mxu0 0.0
    %1420 = vmatprep.subr.mxu0 0.0
    %1421 = vmatpush1.xpose.msra.mxu0 0.0
    %1422 = vmatprep.subr.mxu0 0.0
    %1423 = vmatpush1.xpose.msra.mxu0 0.0
    %1424 = vmatprep.subr.mxu0 0.0
    %1425 = vmatpush1.xpose.msra.mxu0 0.0
    %1426 = vmatprep.subr.mxu0 0.0
    %1427 = vmatpush1.xpose.msra.mxu0 0.0
    %1428 = vmatprep.subr.mxu0 0.0
    %1429 = vmatpush1.xpose.msra.mxu0 0.0
    %1430 = vmatprep.subr.mxu0 0.0
    %1431 = vmatpush1.xpose.msra.mxu0 0.0
    %1432 = vmatprep.subr.mxu0 0.0
    %1433 = vmatpush1.xpose.msra.mxu0 0.0
    %1434 = vmatprep.subr.mxu0 0.0
    %1435 = vmatpush1.xpose.msra.mxu0 0.0
    %1436 = vmatprep.subr.mxu0 0.0
    %1437 = vmatpush1.xpose.msra.mxu0 0.0
    %1438 = vmatprep.subr.mxu0 0.0
    %1439 = vmatpush1.xpose.msra.mxu0 0.0
    %1440 = vmatprep.subr.mxu0 0.0
    %1441 = vmatpush1.xpose.msra.mxu0 0.0
    %1442 = vmatprep.subr.mxu0 0.0
    %1443 = vmatpush1.xpose.msra.mxu0 0.0
    %1444 = vmatprep.mubr.f32.mxu0 0.0
    %1445 = vmatmul.mubr.f32.gmra.mrb[0].mxu0 %v1375
    %v1446 = vpop.f32.mrb[0].mxu0
    %v1447 = vadd.f32 0.0, %v1446
    %v1448 = vpop.f32.mrb[0].mxu0
    %1449 = vdwg.mxu0
    %v1451 = vsel %vm1069, %v391, 0
    %v1454 = vsel %vm1069, %v691, 0
    %1456 = vmatprep.subr.mxu0 0.0
    %1457 = vmatpush1.xpose.msra.mxu0 %v1454
    %1458 = vmatprep.subr.mxu0 0.0
    %1459 = vmatpush1.xpose.msra.mxu0 0.0
    %1460 = vmatprep.subr.mxu0 0.0
    %1461 = vmatpush1.xpose.msra.mxu0 0.0
    %1462 = vmatprep.subr.mxu0 0.0
    %1463 = vmatpush1.xpose.msra.mxu0 0.0
    %1464 = vmatprep.subr.mxu0 0.0
    %1465 = vmatpush1.xpose.msra.mxu0 0.0
    %1466 = vmatprep.subr.mxu0 0.0
    %1467 = vmatpush1.xpose.msra.mxu0 0.0
    %1468 = vmatprep.subr.mxu0 0.0
    %1469 = vmatpush1.xpose.msra.mxu0 0.0
    %1470 = vmatprep.subr.mxu0 0.0
    %1471 = vmatpush1.xpose.msra.mxu0 0.0
    %1472 = vmatprep.subr.mxu0 0.0
    %1473 = vmatpush1.xpose.msra.mxu0 0.0
    %1474 = vmatprep.subr.mxu0 0.0
    %1475 = vmatpush1.xpose.msra.mxu0 0.0
    %1476 = vmatprep.subr.mxu0 0.0
    %1477 = vmatpush1.xpose.msra.mxu0 0.0
    %1478 = vmatprep.subr.mxu0 0.0
    %1479 = vmatpush1.xpose.msra.mxu0 0.0
    %1480 = vmatprep.subr.mxu0 0.0
    %1481 = vmatpush1.xpose.msra.mxu0 0.0
    %1482 = vmatprep.subr.mxu0 0.0
    %1483 = vmatpush1.xpose.msra.mxu0 0.0
    %1484 = vmatprep.subr.mxu0 0.0
    %1485 = vmatpush1.xpose.msra.mxu0 0.0
    %1486 = vmatprep.subr.mxu0 0.0
    %1487 = vmatpush1.xpose.msra.mxu0 0.0
    %1488 = vmatprep.subr.mxu0 0.0
    %1489 = vmatpush1.xpose.msra.mxu0 0.0
    %1490 = vmatprep.subr.mxu0 0.0
    %1491 = vmatpush1.xpose.msra.mxu0 0.0
    %1492 = vmatprep.subr.mxu0 0.0
    %1493 = vmatpush1.xpose.msra.mxu0 0.0
    %1494 = vmatprep.subr.mxu0 0.0
    %1495 = vmatpush1.xpose.msra.mxu0 0.0
    %1496 = vmatprep.subr.mxu0 0.0
    %1497 = vmatpush1.xpose.msra.mxu0 0.0
    %1498 = vmatprep.subr.mxu0 0.0
    %1499 = vmatpush1.xpose.msra.mxu0 0.0
    %1500 = vmatprep.subr.mxu0 0.0
    %1501 = vmatpush1.xpose.msra.mxu0 0.0
    %1502 = vmatprep.subr.mxu0 0.0
    %1503 = vmatpush1.xpose.msra.mxu0 0.0
    %1504 = vmatprep.subr.mxu0 0.0
    %1505 = vmatpush1.xpose.msra.mxu0 0.0
    %1506 = vmatprep.subr.mxu0 0.0
    %1507 = vmatpush1.xpose.msra.mxu0 0.0
    %1508 = vmatprep.subr.mxu0 0.0
    %1509 = vmatpush1.xpose.msra.mxu0 0.0
    %1510 = vmatprep.subr.mxu0 0.0
    %1511 = vmatpush1.xpose.msra.mxu0 0.0
    %1512 = vmatprep.subr.mxu0 0.0
    %1513 = vmatpush1.xpose.msra.mxu0 0.0
    %1514 = vmatprep.subr.mxu0 0.0
    %1515 = vmatpush1.xpose.msra.mxu0 0.0
    %1516 = vmatprep.subr.mxu0 0.0
    %1517 = vmatpush1.xpose.msra.mxu0 0.0
    %1518 = vmatprep.subr.mxu0 0.0
    %1519 = vmatpush1.xpose.msra.mxu0 0.0
    %1520 = vmatprep.mubr.f32.mxu0 0.0
    %1521 = vmatmul.mubr.f32.gmra.mrb[0].mxu0 %v1451
    %v1522 = vpop.f32.mrb[0].mxu0
    %v1523 = vadd.f32 0.0, %v1522
    %v1524 = vpop.f32.mrb[0].mxu0
    %1525 = vdwg.mxu0
    %v1527 = vsel %vm1069, %v461, 0
    %v1530 = vsel %vm1069, %v761, 0
    %1532 = vmatprep.subr.mxu0 0.0
    %1533 = vmatpush1.xpose.msra.mxu0 %v1530
    %1534 = vmatprep.subr.mxu0 0.0
    %1535 = vmatpush1.xpose.msra.mxu0 0.0
    %1536 = vmatprep.subr.mxu0 0.0
    %1537 = vmatpush1.xpose.msra.mxu0 0.0
    %1538 = vmatprep.subr.mxu0 0.0
    %1539 = vmatpush1.xpose.msra.mxu0 0.0
    %1540 = vmatprep.subr.mxu0 0.0
    %1541 = vmatpush1.xpose.msra.mxu0 0.0
    %1542 = vmatprep.subr.mxu0 0.0
    %1543 = vmatpush1.xpose.msra.mxu0 0.0
    %1544 = vmatprep.subr.mxu0 0.0
    %1545 = vmatpush1.xpose.msra.mxu0 0.0
    %1546 = vmatprep.subr.mxu0 0.0
    %1547 = vmatpush1.xpose.msra.mxu0 0.0
    %1548 = vmatprep.subr.mxu0 0.0
    %1549 = vmatpush1.xpose.msra.mxu0 0.0
    %1550 = vmatprep.subr.mxu0 0.0
    %1551 = vmatpush1.xpose.msra.mxu0 0.0
    %1552 = vmatprep.subr.mxu0 0.0
    %1553 = vmatpush1.xpose.msra.mxu0 0.0
    %1554 = vmatprep.subr.mxu0 0.0
    %1555 = vmatpush1.xpose.msra.mxu0 0.0
    %1556 = vmatprep.subr.mxu0 0.0
    %1557 = vmatpush1.xpose.msra.mxu0 0.0
    %1558 = vmatprep.subr.mxu0 0.0
    %1559 = vmatpush1.xpose.msra.mxu0 0.0
    %1560 = vmatprep.subr.mxu0 0.0
    %1561 = vmatpush1.xpose.msra.mxu0 0.0
    %1562 = vmatprep.subr.mxu0 0.0
    %1563 = vmatpush1.xpose.msra.mxu0 0.0
    %1564 = vmatprep.subr.mxu0 0.0
    %1565 = vmatpush1.xpose.msra.mxu0 0.0
    %1566 = vmatprep.subr.mxu0 0.0
    %1567 = vmatpush1.xpose.msra.mxu0 0.0
    %1568 = vmatprep.subr.mxu0 0.0
    %1569 = vmatpush1.xpose.msra.mxu0 0.0
    %1570 = vmatprep.subr.mxu0 0.0
    %1571 = vmatpush1.xpose.msra.mxu0 0.0
    %1572 = vmatprep.subr.mxu0 0.0
    %1573 = vmatpush1.xpose.msra.mxu0 0.0
    %1574 = vmatprep.subr.mxu0 0.0
    %1575 = vmatpush1.xpose.msra.mxu0 0.0
    %1576 = vmatprep.subr.mxu0 0.0
    %1577 = vmatpush1.xpose.msra.mxu0 0.0
    %1578 = vmatprep.subr.mxu0 0.0
    %1579 = vmatpush1.xpose.msra.mxu0 0.0
    %1580 = vmatprep.subr.mxu0 0.0
    %1581 = vmatpush1.xpose.msra.mxu0 0.0
    %1582 = vmatprep.subr.mxu0 0.0
    %1583 = vmatpush1.xpose.msra.mxu0 0.0
    %1584 = vmatprep.subr.mxu0 0.0
    %1585 = vmatpush1.xpose.msra.mxu0 0.0
    %1586 = vmatprep.subr.mxu0 0.0
    %1587 = vmatpush1.xpose.msra.mxu0 0.0
    %1588 = vmatprep.subr.mxu0 0.0
    %1589 = vmatpush1.xpose.msra.mxu0 0.0
    %1590 = vmatprep.subr.mxu0 0.0
    %1591 = vmatpush1.xpose.msra.mxu0 0.0
    %1592 = vmatprep.subr.mxu0 0.0
    %1593 = vmatpush1.xpose.msra.mxu0 0.0
    %1594 = vmatprep.subr.mxu0 0.0
    %1595 = vmatpush1.xpose.msra.mxu0 0.0
    %1596 = vmatprep.mubr.f32.mxu0 0.0
    %1597 = vmatmul.mubr.f32.gmra.mrb[0].mxu0 %v1527
    %v1598 = vpop.f32.mrb[0].mxu0
    %v1599 = vadd.f32 0.0, %v1598
    %v1600 = vpop.f32.mrb[0].mxu0
    %1601 = vdwg.mxu0
    %v1603 = vsel %vm1069, %v466, 0
    %v1606 = vsel %vm1069, %v766, 0
    %1608 = vmatprep.subr.mxu0 0.0
    %1609 = vmatpush1.xpose.msra.mxu0 %v1606
    %1610 = vmatprep.subr.mxu0 0.0
    %1611 = vmatpush1.xpose.msra.mxu0 0.0
    %1612 = vmatprep.subr.mxu0 0.0
    %1613 = vmatpush1.xpose.msra.mxu0 0.0
    %1614 = vmatprep.subr.mxu0 0.0
    %1615 = vmatpush1.xpose.msra.mxu0 0.0
    %1616 = vmatprep.subr.mxu0 0.0
    %1617 = vmatpush1.xpose.msra.mxu0 0.0
    %1618 = vmatprep.subr.mxu0 0.0
    %1619 = vmatpush1.xpose.msra.mxu0 0.0
    %1620 = vmatprep.subr.mxu0 0.0
    %1621 = vmatpush1.xpose.msra.mxu0 0.0
    %1622 = vmatprep.subr.mxu0 0.0
    %1623 = vmatpush1.xpose.msra.mxu0 0.0
    %1624 = vmatprep.subr.mxu0 0.0
    %1625 = vmatpush1.xpose.msra.mxu0 0.0
    %1626 = vmatprep.subr.mxu0 0.0
    %1627 = vmatpush1.xpose.msra.mxu0 0.0
    %1628 = vmatprep.subr.mxu0 0.0
    %1629 = vmatpush1.xpose.msra.mxu0 0.0
    %1630 = vmatprep.subr.mxu0 0.0
    %1631 = vmatpush1.xpose.msra.mxu0 0.0
    %1632 = vmatprep.subr.mxu0 0.0
    %1633 = vmatpush1.xpose.msra.mxu0 0.0
    %1634 = vmatprep.subr.mxu0 0.0
    %1635 = vmatpush1.xpose.msra.mxu0 0.0
    %1636 = vmatprep.subr.mxu0 0.0
    %1637 = vmatpush1.xpose.msra.mxu0 0.0
    %1638 = vmatprep.subr.mxu0 0.0
    %1639 = vmatpush1.xpose.msra.mxu0 0.0
    %1640 = vmatprep.subr.mxu0 0.0
    %1641 = vmatpush1.xpose.msra.mxu0 0.0
    %1642 = vmatprep.subr.mxu0 0.0
    %1643 = vmatpush1.xpose.msra.mxu0 0.0
    %1644 = vmatprep.subr.mxu0 0.0
    %1645 = vmatpush1.xpose.msra.mxu0 0.0
    %1646 = vmatprep.subr.mxu0 0.0
    %1647 = vmatpush1.xpose.msra.mxu0 0.0
    %1648 = vmatprep.subr.mxu0 0.0
    %1649 = vmatpush1.xpose.msra.mxu0 0.0
    %1650 = vmatprep.subr.mxu0 0.0
    %1651 = vmatpush1.xpose.msra.mxu0 0.0
    %1652 = vmatprep.subr.mxu0 0.0
    %1653 = vmatpush1.xpose.msra.mxu0 0.0
    %1654 = vmatprep.subr.mxu0 0.0
    %1655 = vmatpush1.xpose.msra.mxu0 0.0
    %1656 = vmatprep.subr.mxu0 0.0
    %1657 = vmatpush1.xpose.msra.mxu0 0.0
    %1658 = vmatprep.subr.mxu0 0.0
    %1659 = vmatpush1.xpose.msra.mxu0 0.0
    %1660 = vmatprep.subr.mxu0 0.0
    %1661 = vmatpush1.xpose.msra.mxu0 0.0
    %1662 = vmatprep.subr.mxu0 0.0
    %1663 = vmatpush1.xpose.msra.mxu0 0.0
    %1664 = vmatprep.subr.mxu0 0.0
    %1665 = vmatpush1.xpose.msra.mxu0 0.0
    %1666 = vmatprep.subr.mxu0 0.0
    %1667 = vmatpush1.xpose.msra.mxu0 0.0
    %1668 = vmatprep.subr.mxu0 0.0
    %1669 = vmatpush1.xpose.msra.mxu0 0.0
    %1670 = vmatprep.subr.mxu0 0.0
    %1671 = vmatpush1.xpose.msra.mxu0 0.0
    %1672 = vmatprep.mubr.f32.mxu0 0.0
    %1673 = vmatmul.mubr.f32.gmra.mrb[0].mxu0 %v1603
    %v1674 = vpop.f32.mrb[0].mxu0
    %v1675 = vadd.f32 0.0, %v1674
    %v1676 = vpop.f32.mrb[0].mxu0
    %1677 = vdwg.mxu0
    %v1678 = vsel %vm1069, %v1143, -inf
    %1679 = vmax.xlane.f32.xlu0 %v1678
    %v1680 = vpop.xlane.xlu0 %1679
    %v1681 = vsel %vm1069, %v1219, -inf
    %1682 = vmax.xlane.f32.xlu0 %v1681
    %v1683 = vpop.xlane.xlu0 %1682
    %v1684 = vsel %vm1069, %v1295, -inf
    %1685 = vmax.xlane.f32.xlu0 %v1684
    %v1686 = vpop.xlane.xlu0 %1685
    %v1687 = vsel %vm1069, %v1371, -inf
    %1688 = vmax.xlane.f32.xlu0 %v1687
    %v1689 = vpop.xlane.xlu0 %1688
    %v1690 = vsel %vm1069, %v1447, -inf
    %1691 = vmax.xlane.f32.xlu0 %v1690
    %v1692 = vpop.xlane.xlu0 %1691
    %v1693 = vsel %vm1069, %v1523, -inf
    %1694 = vmax.xlane.f32.xlu0 %v1693
    %v1695 = vpop.xlane.xlu0 %1694
    %v1696 = vsel %vm1069, %v1599, -inf
    %1697 = vmax.xlane.f32.xlu0 %v1696
    %v1698 = vpop.xlane.xlu0 %1697
    %v1699 = vsel %vm1069, %v1675, -inf
    %1700 = vmax.xlane.f32.xlu0 %v1699
    %v1701 = vpop.xlane.xlu0 %1700
    %v1702 = vsub.f32 %v1143, %v1680
    %v1703 = vsub.f32 %v1219, %v1683
    %v1704 = vsub.f32 %v1295, %v1686
    %v1705 = vsub.f32 %v1371, %v1689
    %v1706 = vsub.f32 %v1447, %v1692
    %v1707 = vsub.f32 %v1523, %v1695
    %v1708 = vsub.f32 %v1599, %v1698
    %v1709 = vsub.f32 %v1675, %v1701
    %v1710 = vmul.f32 %v1702, 1.442695
    %v1711 = vpow.pop %v1710
    %v1712 = vmul.f32 %v1703, 1.442695
    %v1713 = vpow.pop %v1712
    %v1714 = vmul.f32 %v1704, 1.442695
    %v1715 = vpow.pop %v1714
    %v1716 = vmul.f32 %v1705, 1.442695
    %v1717 = vpow.pop %v1716
    %v1718 = vmul.f32 %v1706, 1.442695
    %v1719 = vpow.pop %v1718
    %v1720 = vmul.f32 %v1707, 1.442695
    %v1721 = vpow.pop %v1720
    %v1722 = vmul.f32 %v1708, 1.442695
    %v1723 = vpow.pop %v1722
    %v1724 = vmul.f32 %v1709, 1.442695
    %v1725 = vpow.pop %v1724
    %v1726 = vsel %vm1069, %v1711, 0.0
    %1727 = vadd.xlane.f32.xlu0 %v1726
    %v1728 = vpop.xlane.xlu0 %1727
    %v1729 = vsel %vm1069, %v1713, 0.0
    %1730 = vadd.xlane.f32.xlu0 %v1729
    %v1731 = vpop.xlane.xlu0 %1730
    %v1732 = vsel %vm1069, %v1715, 0.0
    %1733 = vadd.xlane.f32.xlu0 %v1732
    %v1734 = vpop.xlane.xlu0 %1733
    %v1735 = vsel %vm1069, %v1717, 0.0
    %1736 = vadd.xlane.f32.xlu0 %v1735
    %v1737 = vpop.xlane.xlu0 %1736
    %v1738 = vsel %vm1069, %v1719, 0.0
    %1739 = vadd.xlane.f32.xlu0 %v1738
    %v1740 = vpop.xlane.xlu0 %1739
    %v1741 = vsel %vm1069, %v1721, 0.0
    %1742 = vadd.xlane.f32.xlu0 %v1741
    %v1743 = vpop.xlane.xlu0 %1742
    %v1744 = vsel %vm1069, %v1723, 0.0
    %1745 = vadd.xlane.f32.xlu0 %v1744
    %v1746 = vpop.xlane.xlu0 %1745
    %v1747 = vsel %vm1069, %v1725, 0.0
    %1748 = vadd.xlane.f32.xlu0 %v1747
    %v1749 = vpop.xlane.xlu0 %1748
    %v1750 = vrcp.pop %v1728
    %v1751 = vmul.f32 %v1711, %v1750
    %v1752 = vrcp.pop %v1731
    %v1753 = vmul.f32 %v1713, %v1752
    %v1754 = vrcp.pop %v1734
    %v1755 = vmul.f32 %v1715, %v1754
    %v1756 = vrcp.pop %v1737
    %v1757 = vmul.f32 %v1717, %v1756
    %v1758 = vrcp.pop %v1740
    %v1759 = vmul.f32 %v1719, %v1758
    %v1760 = vrcp.pop %v1743
    %v1761 = vmul.f32 %v1721, %v1760
    %v1762 = vrcp.pop %v1746
    %v1763 = vmul.f32 %v1723, %v1762
    %v1764 = vrcp.pop %v1749
    %v1765 = vmul.f32 %v1725, %v1764
    %v1767 = vsel %vm1069, %v1751, 0
    %1769 = vmatprep.subr.mxu0 0.0
    %1770 = vmatpush1.msra.mxu0 %v836
    %1771 = vmatprep.subr.mxu0 0.0
    %1772 = vmatpush1.msra.mxu0 0.0
    %1773 = vmatprep.subr.mxu0 0.0
    %1774 = vmatpush1.msra.mxu0 0.0
    %1775 = vmatprep.subr.mxu0 0.0
    %1776 = vmatpush1.msra.mxu0 0.0
    %1777 = vmatprep.subr.mxu0 0.0
    %1778 = vmatpush1.msra.mxu0 0.0
    %1779 = vmatprep.subr.mxu0 0.0
    %1780 = vmatpush1.msra.mxu0 0.0
    %1781 = vmatprep.subr.mxu0 0.0
    %1782 = vmatpush1.msra.mxu0 0.0
    %1783 = vmatprep.subr.mxu0 0.0
    %1784 = vmatpush1.msra.mxu0 0.0
    %1785 = vmatprep.subr.mxu0 0.0
    %1786 = vmatpush1.msra.mxu0 0.0
    %1787 = vmatprep.subr.mxu0 0.0
    %1788 = vmatpush1.msra.mxu0 0.0
    %1789 = vmatprep.subr.mxu0 0.0
    %1790 = vmatpush1.msra.mxu0 0.0
    %1791 = vmatprep.subr.mxu0 0.0
    %1792 = vmatpush1.msra.mxu0 0.0
    %1793 = vmatprep.subr.mxu0 0.0
    %1794 = vmatpush1.msra.mxu0 0.0
    %1795 = vmatprep.subr.mxu0 0.0
    %1796 = vmatpush1.msra.mxu0 0.0
    %1797 = vmatprep.subr.mxu0 0.0
    %1798 = vmatpush1.msra.mxu0 0.0
    %1799 = vmatprep.subr.mxu0 0.0
    %1800 = vmatpush1.msra.mxu0 0.0
    %1801 = vmatprep.subr.mxu0 0.0
    %1802 = vmatpush1.msra.mxu0 0.0
    %1803 = vmatprep.subr.mxu0 0.0
    %1804 = vmatpush1.msra.mxu0 0.0
    %1805 = vmatprep.subr.mxu0 0.0
    %1806 = vmatpush1.msra.mxu0 0.0
    %1807 = vmatprep.subr.mxu0 0.0
    %1808 = vmatpush1.msra.mxu0 0.0
    %1809 = vmatprep.subr.mxu0 0.0
    %1810 = vmatpush1.msra.mxu0 0.0
    %1811 = vmatprep.subr.mxu0 0.0
    %1812 = vmatpush1.msra.mxu0 0.0
    %1813 = vmatprep.subr.mxu0 0.0
    %1814 = vmatpush1.msra.mxu0 0.0
    %1815 = vmatprep.subr.mxu0 0.0
    %1816 = vmatpush1.msra.mxu0 0.0
    %1817 = vmatprep.subr.mxu0 0.0
    %1818 = vmatpush1.msra.mxu0 0.0
    %1819 = vmatprep.subr.mxu0 0.0
    %1820 = vmatpush1.msra.mxu0 0.0
    %1821 = vmatprep.subr.mxu0 0.0
    %1822 = vmatpush1.msra.mxu0 0.0
    %1823 = vmatprep.subr.mxu0 0.0
    %1824 = vmatpush1.msra.mxu0 0.0
    %1825 = vmatprep.subr.mxu0 0.0
    %1826 = vmatpush1.msra.mxu0 0.0
    %1827 = vmatprep.subr.mxu0 0.0
    %1828 = vmatpush1.msra.mxu0 0.0
    %1829 = vmatprep.subr.mxu0 0.0
    %1830 = vmatpush1.msra.mxu0 0.0
    %1831 = vmatprep.subr.mxu0 0.0
    %1832 = vmatpush1.msra.mxu0 0.0
    %1833 = vmatprep.mubr.f32.mxu0 0.0
    %1834 = vmatmul.mubr.f32.gmra.mrb[0].mxu0 %v1767
    %v1835 = vpop.f32.mrb[0].mxu0
    %v1836 = vadd.f32 0.0, %v1835
    %v1837 = vpop.f32.mrb[0].mxu0
    %1838 = vdwg.mxu0
    %v1840 = vsel %vm1069, %v1753, 0
    %1842 = vmatprep.subr.mxu0 0.0
    %1843 = vmatpush1.msra.mxu0 %v841
    %1844 = vmatprep.subr.mxu0 0.0
    %1845 = vmatpush1.msra.mxu0 0.0
    %1846 = vmatprep.subr.mxu0 0.0
    %1847 = vmatpush1.msra.mxu0 0.0
    %1848 = vmatprep.subr.mxu0 0.0
    %1849 = vmatpush1.msra.mxu0 0.0
    %1850 = vmatprep.subr.mxu0 0.0
    %1851 = vmatpush1.msra.mxu0 0.0
    %1852 = vmatprep.subr.mxu0 0.0
    %1853 = vmatpush1.msra.mxu0 0.0
    %1854 = vmatprep.subr.mxu0 0.0
    %1855 = vmatpush1.msra.mxu0 0.0
    %1856 = vmatprep.subr.mxu0 0.0
    %1857 = vmatpush1.msra.mxu0 0.0
    %1858 = vmatprep.subr.mxu0 0.0
    %1859 = vmatpush1.msra.mxu0 0.0
    %1860 = vmatprep.subr.mxu0 0.0
    %1861 = vmatpush1.msra.mxu0 0.0
    %1862 = vmatprep.subr.mxu0 0.0
    %1863 = vmatpush1.msra.mxu0 0.0
    %1864 = vmatprep.subr.mxu0 0.0
    %1865 = vmatpush1.msra.mxu0 0.0
    %1866 = vmatprep.subr.mxu0 0.0
    %1867 = vmatpush1.msra.mxu0 0.0
    %1868 = vmatprep.subr.mxu0 0.0
    %1869 = vmatpush1.msra.mxu0 0.0
    %1870 = vmatprep.subr.mxu0 0.0
    %1871 = vmatpush1.msra.mxu0 0.0
    %1872 = vmatprep.subr.mxu0 0.0
    %1873 = vmatpush1.msra.mxu0 0.0
    %1874 = vmatprep.subr.mxu0 0.0
    %1875 = vmatpush1.msra.mxu0 0.0
    %1876 = vmatprep.subr.mxu0 0.0
    %1877 = vmatpush1.msra.mxu0 0.0
    %1878 = vmatprep.subr.mxu0 0.0
    %1879 = vmatpush1.msra.mxu0 0.0
    %1880 = vmatprep.subr.mxu0 0.0
    %1881 = vmatpush1.msra.mxu0 0.0
    %1882 = vmatprep.subr.mxu0 0.0
    %1883 = vmatpush1.msra.mxu0 0.0
    %1884 = vmatprep.subr.mxu0 0.0
    %1885 = vmatpush1.msra.mxu0 0.0
    %1886 = vmatprep.subr.mxu0 0.0
    %1887 = vmatpush1.msra.mxu0 0.0
    %1888 = vmatprep.subr.mxu0 0.0
    %1889 = vmatpush1.msra.mxu0 0.0
    %1890 = vmatprep.subr.mxu0 0.0
    %1891 = vmatpush1.msra.mxu0 0.0
    %1892 = vmatprep.subr.mxu0 0.0
    %1893 = vmatpush1.msra.mxu0 0.0
    %1894 = vmatprep.subr.mxu0 0.0
    %1895 = vmatpush1.msra.mxu0 0.0
    %1896 = vmatprep.subr.mxu0 0.0
    %1897 = vmatpush1.msra.mxu0 0.0
    %1898 = vmatprep.subr.mxu0 0.0
    %1899 = vmatpush1.msra.mxu0 0.0
    %1900 = vmatprep.subr.mxu0 0.0
    %1901 = vmatpush1.msra.mxu0 0.0
    %1902 = vmatprep.subr.mxu0 0.0
    %1903 = vmatpush1.msra.mxu0 0.0
    %1904 = vmatprep.subr.mxu0 0.0
    %1905 = vmatpush1.msra.mxu0 0.0
    %1906 = vmatprep.mubr.f32.mxu0 0.0
    %1907 = vmatmul.mubr.f32.gmra.mrb[0].mxu0 %v1840
    %v1908 = vpop.f32.mrb[0].mxu0
    %v1909 = vadd.f32 0.0, %v1908
    %v1910 = vpop.f32.mrb[0].mxu0
    %1911 = vdwg.mxu0
    %v1913 = vsel %vm1069, %v1755, 0
    %1915 = vmatprep.subr.mxu0 0.0
    %1916 = vmatpush1.msra.mxu0 %v911
    %1917 = vmatprep.subr.mxu0 0.0
    %1918 = vmatpush1.msra.mxu0 0.0
    %1919 = vmatprep.subr.mxu0 0.0
    %1920 = vmatpush1.msra.mxu0 0.0
    %1921 = vmatprep.subr.mxu0 0.0
    %1922 = vmatpush1.msra.mxu0 0.0
    %1923 = vmatprep.subr.mxu0 0.0
    %1924 = vmatpush1.msra.mxu0 0.0
    %1925 = vmatprep.subr.mxu0 0.0
    %1926 = vmatpush1.msra.mxu0 0.0
    %1927 = vmatprep.subr.mxu0 0.0
    %1928 = vmatpush1.msra.mxu0 0.0
    %1929 = vmatprep.subr.mxu0 0.0
    %1930 = vmatpush1.msra.mxu0 0.0
    %1931 = vmatprep.subr.mxu0 0.0
    %1932 = vmatpush1.msra.mxu0 0.0
    %1933 = vmatprep.subr.mxu0 0.0
    %1934 = vmatpush1.msra.mxu0 0.0
    %1935 = vmatprep.subr.mxu0 0.0
    %1936 = vmatpush1.msra.mxu0 0.0
    %1937 = vmatprep.subr.mxu0 0.0
    %1938 = vmatpush1.msra.mxu0 0.0
    %1939 = vmatprep.subr.mxu0 0.0
    %1940 = vmatpush1.msra.mxu0 0.0
    %1941 = vmatprep.subr.mxu0 0.0
    %1942 = vmatpush1.msra.mxu0 0.0
    %1943 = vmatprep.subr.mxu0 0.0
    %1944 = vmatpush1.msra.mxu0 0.0
    %1945 = vmatprep.subr.mxu0 0.0
    %1946 = vmatpush1.msra.mxu0 0.0
    %1947 = vmatprep.subr.mxu0 0.0
    %1948 = vmatpush1.msra.mxu0 0.0
    %1949 = vmatprep.subr.mxu0 0.0
    %1950 = vmatpush1.msra.mxu0 0.0
    %1951 = vmatprep.subr.mxu0 0.0
    %1952 = vmatpush1.msra.mxu0 0.0
    %1953 = vmatprep.subr.mxu0 0.0
    %1954 = vmatpush1.msra.mxu0 0.0
    %1955 = vmatprep.subr.mxu0 0.0
    %1956 = vmatpush1.msra.mxu0 0.0
    %1957 = vmatprep.subr.mxu0 0.0
    %1958 = vmatpush1.msra.mxu0 0.0
    %1959 = vmatprep.subr.mxu0 0.0
    %1960 = vmatpush1.msra.mxu0 0.0
    %1961 = vmatprep.subr.mxu0 0.0
    %1962 = vmatpush1.msra.mxu0 0.0
    %1963 = vmatprep.subr.mxu0 0.0
    %1964 = vmatpush1.msra.mxu0 0.0
    %1965 = vmatprep.subr.mxu0 0.0
    %1966 = vmatpush1.msra.mxu0 0.0
    %1967 = vmatprep.subr.mxu0 0.0
    %1968 = vmatpush1.msra.mxu0 0.0
    %1969 = vmatprep.subr.mxu0 0.0
    %1970 = vmatpush1.msra.mxu0 0.0
    %1971 = vmatprep.subr.mxu0 0.0
    %1972 = vmatpush1.msra.mxu0 0.0
    %1973 = vmatprep.subr.mxu0 0.0
    %1974 = vmatpush1.msra.mxu0 0.0
    %1975 = vmatprep.subr.mxu0 0.0
    %1976 = vmatpush1.msra.mxu0 0.0
    %1977 = vmatprep.subr.mxu0 0.0
    %1978 = vmatpush1.msra.mxu0 0.0
    %1979 = vmatprep.mubr.f32.mxu0 0.0
    %1980 = vmatmul.mubr.f32.gmra.mrb[0].mxu0 %v1913
    %v1981 = vpop.f32.mrb[0].mxu0
    %v1982 = vadd.f32 0.0, %v1981
    %v1983 = vpop.f32.mrb[0].mxu0
    %1984 = vdwg.mxu0
    %v1986 = vsel %vm1069, %v1757, 0
    %1988 = vmatprep.subr.mxu0 0.0
    %1989 = vmatpush1.msra.mxu0 %v916
    %1990 = vmatprep.subr.mxu0 0.0
    %1991 = vmatpush1.msra.mxu0 0.0
    %1992 = vmatprep.subr.mxu0 0.0
    %1993 = vmatpush1.msra.mxu0 0.0
    %1994 = vmatprep.subr.mxu0 0.0
    %1995 = vmatpush1.msra.mxu0 0.0
    %1996 = vmatprep.subr.mxu0 0.0
    %1997 = vmatpush1.msra.mxu0 0.0
    %1998 = vmatprep.subr.mxu0 0.0
    %1999 = vmatpush1.msra.mxu0 0.0
    %2000 = vmatprep.subr.mxu0 0.0
    %2001 = vmatpush1.msra.mxu0 0.0
    %2002 = vmatprep.subr.mxu0 0.0
    %2003 = vmatpush1.msra.mxu0 0.0
    %2004 = vmatprep.subr.mxu0 0.0
    %2005 = vmatpush1.msra.mxu0 0.0
    %2006 = vmatprep.subr.mxu0 0.0
    %2007 = vmatpush1.msra.mxu0 0.0
    %2008 = vmatprep.subr.mxu0 0.0
    %2009 = vmatpush1.msra.mxu0 0.0
    %2010 = vmatprep.subr.mxu0 0.0
    %2011 = vmatpush1.msra.mxu0 0.0
    %2012 = vmatprep.subr.mxu0 0.0
    %2013 = vmatpush1.msra.mxu0 0.0
    %2014 = vmatprep.subr.mxu0 0.0
    %2015 = vmatpush1.msra.mxu0 0.0
    %2016 = vmatprep.subr.mxu0 0.0
    %2017 = vmatpush1.msra.mxu0 0.0
    %2018 = vmatprep.subr.mxu0 0.0
    %2019 = vmatpush1.msra.mxu0 0.0
    %2020 = vmatprep.subr.mxu0 0.0
    %2021 = vmatpush1.msra.mxu0 0.0
    %2022 = vmatprep.subr.mxu0 0.0
    %2023 = vmatpush1.msra.mxu0 0.0
    %2024 = vmatprep.subr.mxu0 0.0
    %2025 = vmatpush1.msra.mxu0 0.0
    %2026 = vmatprep.subr.mxu0 0.0
    %2027 = vmatpush1.msra.mxu0 0.0
    %2028 = vmatprep.subr.mxu0 0.0
    %2029 = vmatpush1.msra.mxu0 0.0
    %2030 = vmatprep.subr.mxu0 0.0
    %2031 = vmatpush1.msra.mxu0 0.0
    %2032 = vmatprep.subr.mxu0 0.0
    %2033 = vmatpush1.msra.mxu0 0.0
    %2034 = vmatprep.subr.mxu0 0.0
    %2035 = vmatpush1.msra.mxu0 0.0
    %2036 = vmatprep.subr.mxu0 0.0
    %2037 = vmatpush1.msra.mxu0 0.0
    %2038 = vmatprep.subr.mxu0 0.0
    %2039 = vmatpush1.msra.mxu0 0.0
    %2040 = vmatprep.subr.mxu0 0.0
    %2041 = vmatpush1.msra.mxu0 0.0
    %2042 = vmatprep.subr.mxu0 0.0
    %2043 = vmatpush1.msra.mxu0 0.0
    %2044 = vmatprep.subr.mxu0 0.0
    %2045 = vmatpush1.msra.mxu0 0.0
    %2046 = vmatprep.subr.mxu0 0.0
    %2047 = vmatpush1.msra.mxu0 0.0
    %2048 = vmatprep.subr.mxu0 0.0
    %2049 = vmatpush1.msra.mxu0 0.0
    %2050 = vmatprep.subr.mxu0 0.0
    %2051 = vmatpush1.msra.mxu0 0.0
    %2052 = vmatprep.mubr.f32.mxu0 0.0
    %2053 = vmatmul.mubr.f32.gmra.mrb[0].mxu0 %v1986
    %v2054 = vpop.f32.mrb[0].mxu0
    %v2055 = vadd.f32 0.0, %v2054
    %v2056 = vpop.f32.mrb[0].mxu0
    %2057 = vdwg.mxu0
    %v2059 = vsel %vm1069, %v1759, 0
    %2061 = vmatprep.subr.mxu0 0.0
    %2062 = vmatpush1.msra.mxu0 %v986
    %2063 = vmatprep.subr.mxu0 0.0
    %2064 = vmatpush1.msra.mxu0 0.0
    %2065 = vmatprep.subr.mxu0 0.0
    %2066 = vmatpush1.msra.mxu0 0.0
    %2067 = vmatprep.subr.mxu0 0.0
    %2068 = vmatpush1.msra.mxu0 0.0
    %2069 = vmatprep.subr.mxu0 0.0
    %2070 = vmatpush1.msra.mxu0 0.0
    %2071 = vmatprep.subr.mxu0 0.0
    %2072 = vmatpush1.msra.mxu0 0.0
    %2073 = vmatprep.subr.mxu0 0.0
    %2074 = vmatpush1.msra.mxu0 0.0
    %2075 = vmatprep.subr.mxu0 0.0
    %2076 = vmatpush1.msra.mxu0 0.0
    %2077 = vmatprep.subr.mxu0 0.0
    %2078 = vmatpush1.msra.mxu0 0.0
    %2079 = vmatprep.subr.mxu0 0.0
    %2080 = vmatpush1.msra.mxu0 0.0
    %2081 = vmatprep.subr.mxu0 0.0
    %2082 = vmatpush1.msra.mxu0 0.0
    %2083 = vmatprep.subr.mxu0 0.0
    %2084 = vmatpush1.msra.mxu0 0.0
    %2085 = vmatprep.subr.mxu0 0.0
    %2086 = vmatpush1.msra.mxu0 0.0
    %2087 = vmatprep.subr.mxu0 0.0
    %2088 = vmatpush1.msra.mxu0 0.0
    %2089 = vmatprep.subr.mxu0 0.0
    %2090 = vmatpush1.msra.mxu0 0.0
    %2091 = vmatprep.subr.mxu0 0.0
    %2092 = vmatpush1.msra.mxu0 0.0
    %2093 = vmatprep.subr.mxu0 0.0
    %2094 = vmatpush1.msra.mxu0 0.0
    %2095 = vmatprep.subr.mxu0 0.0
    %2096 = vmatpush1.msra.mxu0 0.0
    %2097 = vmatprep.subr.mxu0 0.0
    %2098 = vmatpush1.msra.mxu0 0.0
    %2099 = vmatprep.subr.mxu0 0.0
    %2100 = vmatpush1.msra.mxu0 0.0
    %2101 = vmatprep.subr.mxu0 0.0
    %2102 = vmatpush1.msra.mxu0 0.0
    %2103 = vmatprep.subr.mxu0 0.0
    %2104 = vmatpush1.msra.mxu0 0.0
    %2105 = vmatprep.subr.mxu0 0.0
    %2106 = vmatpush1.msra.mxu0 0.0
    %2107 = vmatprep.subr.mxu0 0.0
    %2108 = vmatpush1.msra.mxu0 0.0
    %2109 = vmatprep.subr.mxu0 0.0
    %2110 = vmatpush1.msra.mxu0 0.0
    %2111 = vmatprep.subr.mxu0 0.0
    %2112 = vmatpush1.msra.mxu0 0.0
    %2113 = vmatprep.subr.mxu0 0.0
    %2114 = vmatpush1.msra.mxu0 0.0
    %2115 = vmatprep.subr.mxu0 0.0
    %2116 = vmatpush1.msra.mxu0 0.0
    %2117 = vmatprep.subr.mxu0 0.0
    %2118 = vmatpush1.msra.mxu0 0.0
    %2119 = vmatprep.subr.mxu0 0.0
    %2120 = vmatpush1.msra.mxu0 0.0
    %2121 = vmatprep.subr.mxu0 0.0
    %2122 = vmatpush1.msra.mxu0 0.0
    %2123 = vmatprep.subr.mxu0 0.0
    %2124 = vmatpush1.msra.mxu0 0.0
    %2125 = vmatprep.mubr.f32.mxu0 0.0
    %2126 = vmatmul.mubr.f32.gmra.mrb[0].mxu0 %v2059
    %v2127 = vpop.f32.mrb[0].mxu0
    %v2128 = vadd.f32 0.0, %v2127
    %v2129 = vpop.f32.mrb[0].mxu0
    %2130 = vdwg.mxu0
    %v2132 = vsel %vm1069, %v1761, 0
    %2134 = vmatprep.subr.mxu0 0.0
    %2135 = vmatpush1.msra.mxu0 %v991
    %2136 = vmatprep.subr.mxu0 0.0
    %2137 = vmatpush1.msra.mxu0 0.0
    %2138 = vmatprep.subr.mxu0 0.0
    %2139 = vmatpush1.msra.mxu0 0.0
    %2140 = vmatprep.subr.mxu0 0.0
    %2141 = vmatpush1.msra.mxu0 0.0
    %2142 = vmatprep.subr.mxu0 0.0
    %2143 = vmatpush1.msra.mxu0 0.0
    %2144 = vmatprep.subr.mxu0 0.0
    %2145 = vmatpush1.msra.mxu0 0.0
    %2146 = vmatprep.subr.mxu0 0.0
    %2147 = vmatpush1.msra.mxu0 0.0
    %2148 = vmatprep.subr.mxu0 0.0
    %2149 = vmatpush1.msra.mxu0 0.0
    %2150 = vmatprep.subr.mxu0 0.0
    %2151 = vmatpush1.msra.mxu0 0.0
    %2152 = vmatprep.subr.mxu0 0.0
    %2153 = vmatpush1.msra.mxu0 0.0
    %2154 = vmatprep.subr.mxu0 0.0
    %2155 = vmatpush1.msra.mxu0 0.0
    %2156 = vmatprep.subr.mxu0 0.0
    %2157 = vmatpush1.msra.mxu0 0.0
    %2158 = vmatprep.subr.mxu0 0.0
    %2159 = vmatpush1.msra.mxu0 0.0
    %2160 = vmatprep.subr.mxu0 0.0
    %2161 = vmatpush1.msra.mxu0 0.0
    %2162 = vmatprep.subr.mxu0 0.0
    %2163 = vmatpush1.msra.mxu0 0.0
    %2164 = vmatprep.subr.mxu0 0.0
    %2165 = vmatpush1.msra.mxu0 0.0
    %2166 = vmatprep.subr.mxu0 0.0
    %2167 = vmatpush1.msra.mxu0 0.0
    %2168 = vmatprep.subr.mxu0 0.0
    %2169 = vmatpush1.msra.mxu0 0.0
    %2170 = vmatprep.subr.mxu0 0.0
    %2171 = vmatpush1.msra.mxu0 0.0
    %2172 = vmatprep.subr.mxu0 0.0
    %2173 = vmatpush1.msra.mxu0 0.0
    %2174 = vmatprep.subr.mxu0 0.0
    %2175 = vmatpush1.msra.mxu0 0.0
    %2176 = vmatprep.subr.mxu0 0.0
    %2177 = vmatpush1.msra.mxu0 0.0
    %2178 = vmatprep.subr.mxu0 0.0
    %2179 = vmatpush1.msra.mxu0 0.0
    %2180 = vmatprep.subr.mxu0 0.0
    %2181 = vmatpush1.msra.mxu0 0.0
    %2182 = vmatprep.subr.mxu0 0.0
    %2183 = vmatpush1.msra.mxu0 0.0
    %2184 = vmatprep.subr.mxu0 0.0
    %2185 = vmatpush1.msra.mxu0 0.0
    %2186 = vmatprep.subr.mxu0 0.0
    %2187 = vmatpush1.msra.mxu0 0.0
    %2188 = vmatprep.subr.mxu0 0.0
    %2189 = vmatpush1.msra.mxu0 0.0
    %2190 = vmatprep.subr.mxu0 0.0
    %2191 = vmatpush1.msra.mxu0 0.0
    %2192 = vmatprep.subr.mxu0 0.0
    %2193 = vmatpush1.msra.mxu0 0.0
    %2194 = vmatprep.subr.mxu0 0.0
    %2195 = vmatpush1.msra.mxu0 0.0
    %2196 = vmatprep.subr.mxu0 0.0
    %2197 = vmatpush1.msra.mxu0 0.0
    %2198 = vmatprep.mubr.f32.mxu0 0.0
    %2199 = vmatmul.mubr.f32.gmra.mrb[0].mxu0 %v2132
    %v2200 = vpop.f32.mrb[0].mxu0
    %v2201 = vadd.f32 0.0, %v2200
    %v2202 = vpop.f32.mrb[0].mxu0
    %2203 = vdwg.mxu0
    %v2205 = vsel %vm1069, %v1763, 0
    %2207 = vmatprep.subr.mxu0 0.0
    %2208 = vmatpush1.msra.mxu0 %v1061
    %2209 = vmatprep.subr.mxu0 0.0
    %2210 = vmatpush1.msra.mxu0 0.0
    %2211 = vmatprep.subr.mxu0 0.0
    %2212 = vmatpush1.msra.mxu0 0.0
    %2213 = vmatprep.subr.mxu0 0.0
    %2214 = vmatpush1.msra.mxu0 0.0
    %2215 = vmatprep.subr.mxu0 0.0
    %2216 = vmatpush1.msra.mxu0 0.0
    %2217 = vmatprep.subr.mxu0 0.0
    %2218 = vmatpush1.msra.mxu0 0.0
    %2219 = vmatprep.subr.mxu0 0.0
    %2220 = vmatpush1.msra.mxu0 0.0
    %2221 = vmatprep.subr.mxu0 0.0
    %2222 = vmatpush1.msra.mxu0 0.0
    %2223 = vmatprep.subr.mxu0 0.0
    %2224 = vmatpush1.msra.mxu0 0.0
    %2225 = vmatprep.subr.mxu0 0.0
    %2226 = vmatpush1.msra.mxu0 0.0
    %2227 = vmatprep.subr.mxu0 0.0
    %2228 = vmatpush1.msra.mxu0 0.0
    %2229 = vmatprep.subr.mxu0 0.0
    %2230 = vmatpush1.msra.mxu0 0.0
    %2231 = vmatprep.subr.mxu0 0.0
    %2232 = vmatpush1.msra.mxu0 0.0
    %2233 = vmatprep.subr.mxu0 0.0
    %2234 = vmatpush1.msra.mxu0 0.0
    %2235 = vmatprep.subr.mxu0 0.0
    %2236 = vmatpush1.msra.mxu0 0.0
    %2237 = vmatprep.subr.mxu0 0.0
    %2238 = vmatpush1.msra.mxu0 0.0
    %2239 = vmatprep.subr.mxu0 0.0
    %2240 = vmatpush1.msra.mxu0 0.0
    %2241 = vmatprep.subr.mxu0 0.0
    %2242 = vmatpush1.msra.mxu0 0.0
    %2243 = vmatprep.subr.mxu0 0.0
    %2244 = vmatpush1.msra.mxu0 0.0
    %2245 = vmatprep.subr.mxu0 0.0
    %2246 = vmatpush1.msra.mxu0 0.0
    %2247 = vmatprep.subr.mxu0 0.0
    %2248 = vmatpush1.msra.mxu0 0.0
    %2249 = vmatprep.subr.mxu0 0.0
    %2250 = vmatpush1.msra.mxu0 0.0
    %2251 = vmatprep.subr.mxu0 0.0
    %2252 = vmatpush1.msra.mxu0 0.0
    %2253 = vmatprep.subr.mxu0 0.0
    %2254 = vmatpush1.msra.mxu0 0.0
    %2255 = vmatprep.subr.mxu0 0.0
    %2256 = vmatpush1.msra.mxu0 0.0
    %2257 = vmatprep.subr.mxu0 0.0
    %2258 = vmatpush1.msra.mxu0 0.0
    %2259 = vmatprep.subr.mxu0 0.0
    %2260 = vmatpush1.msra.mxu0 0.0
    %2261 = vmatprep.subr.mxu0 0.0
    %2262 = vmatpush1.msra.mxu0 0.0
    %2263 = vmatprep.subr.mxu0 0.0
    %2264 = vmatpush1.msra.mxu0 0.0
    %2265 = vmatprep.subr.mxu0 0.0
    %2266 = vmatpush1.msra.mxu0 0.0
    %2267 = vmatprep.subr.mxu0 0.0
    %2268 = vmatpush1.msra.mxu0 0.0
    %2269 = vmatprep.subr.mxu0 0.0
    %2270 = vmatpush1.msra.mxu0 0.0
    %2271 = vmatprep.mubr.f32.mxu0 0.0
    %2272 = vmatmul.mubr.f32.gmra.mrb[0].mxu0 %v2205
    %v2273 = vpop.f32.mrb[0].mxu0
    %v2274 = vadd.f32 0.0, %v2273
    %v2275 = vpop.f32.mrb[0].mxu0
    %2276 = vdwg.mxu0
    %v2278 = vsel %vm1069, %v1765, 0
    %2280 = vmatprep.subr.mxu0 0.0
    %2281 = vmatpush1.msra.mxu0 %v1066
    %2282 = vmatprep.subr.mxu0 0.0
    %2283 = vmatpush1.msra.mxu0 0.0
    %2284 = vmatprep.subr.mxu0 0.0
    %2285 = vmatpush1.msra.mxu0 0.0
    %2286 = vmatprep.subr.mxu0 0.0
    %2287 = vmatpush1.msra.mxu0 0.0
    %2288 = vmatprep.subr.mxu0 0.0
    %2289 = vmatpush1.msra.mxu0 0.0
    %2290 = vmatprep.subr.mxu0 0.0
    %2291 = vmatpush1.msra.mxu0 0.0
    %2292 = vmatprep.subr.mxu0 0.0
    %2293 = vmatpush1.msra.mxu0 0.0
    %2294 = vmatprep.subr.mxu0 0.0
    %2295 = vmatpush1.msra.mxu0 0.0
    %2296 = vmatprep.subr.mxu0 0.0
    %2297 = vmatpush1.msra.mxu0 0.0
    %2298 = vmatprep.subr.mxu0 0.0
    %2299 = vmatpush1.msra.mxu0 0.0
    %2300 = vmatprep.subr.mxu0 0.0
    %2301 = vmatpush1.msra.mxu0 0.0
    %2302 = vmatprep.subr.mxu0 0.0
    %2303 = vmatpush1.msra.mxu0 0.0
    %2304 = vmatprep.subr.mxu0 0.0
    %2305 = vmatpush1.msra.mxu0 0.0
    %2306 = vmatprep.subr.mxu0 0.0
    %2307 = vmatpush1.msra.mxu0 0.0
    %2308 = vmatprep.subr.mxu0 0.0
    %2309 = vmatpush1.msra.mxu0 0.0
    %2310 = vmatprep.subr.mxu0 0.0
    %2311 = vmatpush1.msra.mxu0 0.0
    %2312 = vmatprep.subr.mxu0 0.0
    %2313 = vmatpush1.msra.mxu0 0.0
    %2314 = vmatprep.subr.mxu0 0.0
    %2315 = vmatpush1.msra.mxu0 0.0
    %2316 = vmatprep.subr.mxu0 0.0
    %2317 = vmatpush1.msra.mxu0 0.0
    %2318 = vmatprep.subr.mxu0 0.0
    %2319 = vmatpush1.msra.mxu0 0.0
    %2320 = vmatprep.subr.mxu0 0.0
    %2321 = vmatpush1.msra.mxu0 0.0
    %2322 = vmatprep.subr.mxu0 0.0
    %2323 = vmatpush1.msra.mxu0 0.0
    %2324 = vmatprep.subr.mxu0 0.0
    %2325 = vmatpush1.msra.mxu0 0.0
    %2326 = vmatprep.subr.mxu0 0.0
    %2327 = vmatpush1.msra.mxu0 0.0
    %2328 = vmatprep.subr.mxu0 0.0
    %2329 = vmatpush1.msra.mxu0 0.0
    %2330 = vmatprep.subr.mxu0 0.0
    %2331 = vmatpush1.msra.mxu0 0.0
    %2332 = vmatprep.subr.mxu0 0.0
    %2333 = vmatpush1.msra.mxu0 0.0
    %2334 = vmatprep.subr.mxu0 0.0
    %2335 = vmatpush1.msra.mxu0 0.0
    %2336 = vmatprep.subr.mxu0 0.0
    %2337 = vmatpush1.msra.mxu0 0.0
    %2338 = vmatprep.subr.mxu0 0.0
    %2339 = vmatpush1.msra.mxu0 0.0
    %2340 = vmatprep.subr.mxu0 0.0
    %2341 = vmatpush1.msra.mxu0 0.0
    %2342 = vmatprep.subr.mxu0 0.0
    %2343 = vmatpush1.msra.mxu0 0.0
    %2344 = vmatprep.mubr.f32.mxu0 0.0
    %2345 = vmatmul.mubr.f32.gmra.mrb[0].mxu0 %v2278
    %v2346 = vpop.f32.mrb[0].mxu0
    %v2347 = vadd.f32 0.0, %v2346
    %v2348 = vpop.f32.mrb[0].mxu0
    %2349 = vdwg.mxu0
    %v2350 = vld [vmem:[%s4] sm:$0xff]
    %v2351 = vld [vmem:[%s4 + $0x8] sm:$0xff]
    %v2352 = vld [vmem:[%s4 + $0x10] sm:$0xff]
    %v2353 = vld [vmem:[%s4 + $0x18] sm:$0xff]
    %v2355 = vsel %vm1069, %v1836, 0
    %v2358 = vsel %vm1069, %v1909, 0
    %2360 = vmatprep.subr.mxu0 0.0
    %2361 = vmatpush1.msra.mxu0 %v2350
    %2362 = vmatprep.subr.mxu0 0.0
    %2363 = vmatpush1.msra.mxu0 0.0
    %2364 = vmatprep.subr.mxu0 0.0
    %2365 = vmatpush1.msra.mxu0 0.0
    %2366 = vmatprep.subr.mxu0 0.0
    %2367 = vmatpush1.msra.mxu0 0.0
    %2368 = vmatprep.subr.mxu0 0.0
    %2369 = vmatpush1.msra.mxu0 0.0
    %2370 = vmatprep.subr.mxu0 0.0
    %2371 = vmatpush1.msra.mxu0 0.0
    %2372 = vmatprep.subr.mxu0 0.0
    %2373 = vmatpush1.msra.mxu0 0.0
    %2374 = vmatprep.subr.mxu0 0.0
    %2375 = vmatpush1.msra.mxu0 0.0
    %2376 = vmatprep.subr.mxu0 0.0
    %2377 = vmatpush1.msra.mxu0 0.0
    %2378 = vmatprep.subr.mxu0 0.0
    %2379 = vmatpush1.msra.mxu0 0.0
    %2380 = vmatprep.subr.mxu0 0.0
    %2381 = vmatpush1.msra.mxu0 0.0
    %2382 = vmatprep.subr.mxu0 0.0
    %2383 = vmatpush1.msra.mxu0 0.0
    %2384 = vmatprep.subr.mxu0 0.0
    %2385 = vmatpush1.msra.mxu0 0.0
    %2386 = vmatprep.subr.mxu0 0.0
    %2387 = vmatpush1.msra.mxu0 0.0
    %2388 = vmatprep.subr.mxu0 0.0
    %2389 = vmatpush1.msra.mxu0 0.0
    %2390 = vmatprep.subr.mxu0 0.0
    %2391 = vmatpush1.msra.mxu0 0.0
    %2392 = vmatprep.subr.mxu0 0.0
    %2393 = vmatpush1.msra.mxu0 0.0
    %2394 = vmatprep.subr.mxu0 0.0
    %2395 = vmatpush1.msra.mxu0 0.0
    %2396 = vmatprep.subr.mxu0 0.0
    %2397 = vmatpush1.msra.mxu0 0.0
    %2398 = vmatprep.subr.mxu0 0.0
    %2399 = vmatpush1.msra.mxu0 0.0
    %2400 = vmatprep.subr.mxu0 0.0
    %2401 = vmatpush1.msra.mxu0 0.0
    %2402 = vmatprep.subr.mxu0 0.0
    %2403 = vmatpush1.msra.mxu0 0.0
    %2404 = vmatprep.subr.mxu0 0.0
    %2405 = vmatpush1.msra.mxu0 0.0
    %2406 = vmatprep.subr.mxu0 0.0
    %2407 = vmatpush1.msra.mxu0 0.0
    %2408 = vmatprep.subr.mxu0 0.0
    %2409 = vmatpush1.msra.mxu0 0.0
    %2410 = vmatprep.subr.mxu0 0.0
    %2411 = vmatpush1.msra.mxu0 0.0
    %2412 = vmatprep.subr.mxu0 0.0
    %2413 = vmatpush1.msra.mxu0 0.0
    %2414 = vmatprep.subr.mxu0 0.0
    %2415 = vmatpush1.msra.mxu0 0.0
    %2416 = vmatprep.subr.mxu0 0.0
    %2417 = vmatpush1.msra.mxu0 0.0
    %2418 = vmatprep.subr.mxu0 0.0
    %2419 = vmatpush1.msra.mxu0 0.0
    %2420 = vmatprep.subr.mxu0 0.0
    %2421 = vmatpush1.msra.mxu0 0.0
    %2422 = vmatprep.subr.mxu0 0.0
    %2423 = vmatpush1.msra.mxu0 0.0
    %2424 = vmatprep.mubr.f32.mxu0 0.0
    %2425 = vmatmul.mubr.f32.gmra.mrb[0].mxu0 %v2355
    %v2426 = vpop.f32.mrb[0].mxu0
    %v2427 = vadd.f32 0.0, %v2426
    %v2428 = vpop.f32.mrb[0].mxu0
    %2429 = vmatprep.mubr.f32.mxu0 0.0
    %2430 = vmatmul.mubr.f32.gmra.mrb[0].mxu0 %v2358
    %v2431 = vpop.f32.mrb[0].mxu0
    %v2432 = vadd.f32 0.0, %v2431
    %v2433 = vpop.f32.mrb[0].mxu0
    %2434 = vdwg.mxu0
    %v2436 = vsel %vm1069, %v1982, 0
    %v2439 = vsel %vm1069, %v2055, 0
    %2441 = vmatprep.subr.mxu0 0.0
    %2442 = vmatpush1.msra.mxu0 %v2351
    %2443 = vmatprep.subr.mxu0 0.0
    %2444 = vmatpush1.msra.mxu0 0.0
    %2445 = vmatprep.subr.mxu0 0.0
    %2446 = vmatpush1.msra.mxu0 0.0
    %2447 = vmatprep.subr.mxu0 0.0
    %2448 = vmatpush1.msra.mxu0 0.0
    %2449 = vmatprep.subr.mxu0 0.0
    %2450 = vmatpush1.msra.mxu0 0.0
    %2451 = vmatprep.subr.mxu0 0.0
    %2452 = vmatpush1.msra.mxu0 0.0
    %2453 = vmatprep.subr.mxu0 0.0
    %2454 = vmatpush1.msra.mxu0 0.0
    %2455 = vmatprep.subr.mxu0 0.0
    %2456 = vmatpush1.msra.mxu0 0.0
    %2457 = vmatprep.subr.mxu0 0.0
    %2458 = vmatpush1.msra.mxu0 0.0
    %2459 = vmatprep.subr.mxu0 0.0
    %2460 = vmatpush1.msra.mxu0 0.0
    %2461 = vmatprep.subr.mxu0 0.0
    %2462 = vmatpush1.msra.mxu0 0.0
    %2463 = vmatprep.subr.mxu0 0.0
    %2464 = vmatpush1.msra.mxu0 0.0
    %2465 = vmatprep.subr.mxu0 0.0
    %2466 = vmatpush1.msra.mxu0 0.0
    %2467 = vmatprep.subr.mxu0 0.0
    %2468 = vmatpush1.msra.mxu0 0.0
    %2469 = vmatprep.subr.mxu0 0.0
    %2470 = vmatpush1.msra.mxu0 0.0
    %2471 = vmatprep.subr.mxu0 0.0
    %2472 = vmatpush1.msra.mxu0 0.0
    %2473 = vmatprep.subr.mxu0 0.0
    %2474 = vmatpush1.msra.mxu0 0.0
    %2475 = vmatprep.subr.mxu0 0.0
    %2476 = vmatpush1.msra.mxu0 0.0
    %2477 = vmatprep.subr.mxu0 0.0
    %2478 = vmatpush1.msra.mxu0 0.0
    %2479 = vmatprep.subr.mxu0 0.0
    %2480 = vmatpush1.msra.mxu0 0.0
    %2481 = vmatprep.subr.mxu0 0.0
    %2482 = vmatpush1.msra.mxu0 0.0
    %2483 = vmatprep.subr.mxu0 0.0
    %2484 = vmatpush1.msra.mxu0 0.0
    %2485 = vmatprep.subr.mxu0 0.0
    %2486 = vmatpush1.msra.mxu0 0.0
    %2487 = vmatprep.subr.mxu0 0.0
    %2488 = vmatpush1.msra.mxu0 0.0
    %2489 = vmatprep.subr.mxu0 0.0
    %2490 = vmatpush1.msra.mxu0 0.0
    %2491 = vmatprep.subr.mxu0 0.0
    %2492 = vmatpush1.msra.mxu0 0.0
    %2493 = vmatprep.subr.mxu0 0.0
    %2494 = vmatpush1.msra.mxu0 0.0
    %2495 = vmatprep.subr.mxu0 0.0
    %2496 = vmatpush1.msra.mxu0 0.0
    %2497 = vmatprep.subr.mxu0 0.0
    %2498 = vmatpush1.msra.mxu0 0.0
    %2499 = vmatprep.subr.mxu0 0.0
    %2500 = vmatpush1.msra.mxu0 0.0
    %2501 = vmatprep.subr.mxu0 0.0
    %2502 = vmatpush1.msra.mxu0 0.0
    %2503 = vmatprep.subr.mxu0 0.0
    %2504 = vmatpush1.msra.mxu0 0.0
    %2505 = vmatprep.mubr.f32.mxu0 0.0
    %2506 = vmatmul.mubr.f32.gmra.mrb[0].mxu0 %v2436
    %v2507 = vpop.f32.mrb[0].mxu0
    %v2508 = vadd.f32 0.0, %v2507
    %v2509 = vpop.f32.mrb[0].mxu0
    %2510 = vmatprep.mubr.f32.mxu0 0.0
    %2511 = vmatmul.mubr.f32.gmra.mrb[0].mxu0 %v2439
    %v2512 = vpop.f32.mrb[0].mxu0
    %v2513 = vadd.f32 0.0, %v2512
    %v2514 = vpop.f32.mrb[0].mxu0
    %2515 = vdwg.mxu0
    %v2517 = vsel %vm1069, %v2128, 0
    %v2520 = vsel %vm1069, %v2201, 0
    %2522 = vmatprep.subr.mxu0 0.0
    %2523 = vmatpush1.msra.mxu0 %v2352
    %2524 = vmatprep.subr.mxu0 0.0
    %2525 = vmatpush1.msra.mxu0 0.0
    %2526 = vmatprep.subr.mxu0 0.0
    %2527 = vmatpush1.msra.mxu0 0.0
    %2528 = vmatprep.subr.mxu0 0.0
    %2529 = vmatpush1.msra.mxu0 0.0
    %2530 = vmatprep.subr.mxu0 0.0
    %2531 = vmatpush1.msra.mxu0 0.0
    %2532 = vmatprep.subr.mxu0 0.0
    %2533 = vmatpush1.msra.mxu0 0.0
    %2534 = vmatprep.subr.mxu0 0.0
    %2535 = vmatpush1.msra.mxu0 0.0
    %2536 = vmatprep.subr.mxu0 0.0
    %2537 = vmatpush1.msra.mxu0 0.0
    %2538 = vmatprep.subr.mxu0 0.0
    %2539 = vmatpush1.msra.mxu0 0.0
    %2540 = vmatprep.subr.mxu0 0.0
    %2541 = vmatpush1.msra.mxu0 0.0
    %2542 = vmatprep.subr.mxu0 0.0
    %2543 = vmatpush1.msra.mxu0 0.0
    %2544 = vmatprep.subr.mxu0 0.0
    %2545 = vmatpush1.msra.mxu0 0.0
    %2546 = vmatprep.subr.mxu0 0.0
    %2547 = vmatpush1.msra.mxu0 0.0
    %2548 = vmatprep.subr.mxu0 0.0
    %2549 = vmatpush1.msra.mxu0 0.0
    %2550 = vmatprep.subr.mxu0 0.0
    %2551 = vmatpush1.msra.mxu0 0.0
    %2552 = vmatprep.subr.mxu0 0.0
    %2553 = vmatpush1.msra.mxu0 0.0
    %2554 = vmatprep.subr.mxu0 0.0
    %2555 = vmatpush1.msra.mxu0 0.0
    %2556 = vmatprep.subr.mxu0 0.0
    %2557 = vmatpush1.msra.mxu0 0.0
    %2558 = vmatprep.subr.mxu0 0.0
    %2559 = vmatpush1.msra.mxu0 0.0
    %2560 = vmatprep.subr.mxu0 0.0
    %2561 = vmatpush1.msra.mxu0 0.0
    %2562 = vmatprep.subr.mxu0 0.0
    %2563 = vmatpush1.msra.mxu0 0.0
    %2564 = vmatprep.subr.mxu0 0.0
    %2565 = vmatpush1.msra.mxu0 0.0
    %2566 = vmatprep.subr.mxu0 0.0
    %2567 = vmatpush1.msra.mxu0 0.0
    %2568 = vmatprep.subr.mxu0 0.0
    %2569 = vmatpush1.msra.mxu0 0.0
    %2570 = vmatprep.subr.mxu0 0.0
    %2571 = vmatpush1.msra.mxu0 0.0
    %2572 = vmatprep.subr.mxu0 0.0
    %2573 = vmatpush1.msra.mxu0 0.0
    %2574 = vmatprep.subr.mxu0 0.0
    %2575 = vmatpush1.msra.mxu0 0.0
    %2576 = vmatprep.subr.mxu0 0.0
    %2577 = vmatpush1.msra.mxu0 0.0
    %2578 = vmatprep.subr.mxu0 0.0
    %2579 = vmatpush1.msra.mxu0 0.0
    %2580 = vmatprep.subr.mxu0 0.0
    %2581 = vmatpush1.msra.mxu0 0.0
    %2582 = vmatprep.subr.mxu0 0.0
    %2583 = vmatpush1.msra.mxu0 0.0
    %2584 = vmatprep.subr.mxu0 0.0
    %2585 = vmatpush1.msra.mxu0 0.0
    %2586 = vmatprep.mubr.f32.mxu0 0.0
    %2587 = vmatmul.mubr.f32.gmra.mrb[0].mxu0 %v2517
    %v2588 = vpop.f32.mrb[0].mxu0
    %v2589 = vadd.f32 0.0, %v2588
    %v2590 = vpop.f32.mrb[0].mxu0
    %2591 = vmatprep.mubr.f32.mxu0 0.0
    %2592 = vmatmul.mubr.f32.gmra.mrb[0].mxu0 %v2520
    %v2593 = vpop.f32.mrb[0].mxu0
    %v2594 = vadd.f32 0.0, %v2593
    %v2595 = vpop.f32.mrb[0].mxu0
    %2596 = vdwg.mxu0
    %v2598 = vsel %vm1069, %v2274, 0
    %v2601 = vsel %vm1069, %v2347, 0
    %2603 = vmatprep.subr.mxu0 0.0
    %2604 = vmatpush1.msra.mxu0 %v2353
    %2605 = vmatprep.subr.mxu0 0.0
    %2606 = vmatpush1.msra.mxu0 0.0
    %2607 = vmatprep.subr.mxu0 0.0
    %2608 = vmatpush1.msra.mxu0 0.0
    %2609 = vmatprep.subr.mxu0 0.0
    %2610 = vmatpush1.msra.mxu0 0.0
    %2611 = vmatprep.subr.mxu0 0.0
    %2612 = vmatpush1.msra.mxu0 0.0
    %2613 = vmatprep.subr.mxu0 0.0
    %2614 = vmatpush1.msra.mxu0 0.0
    %2615 = vmatprep.subr.mxu0 0.0
    %2616 = vmatpush1.msra.mxu0 0.0
    %2617 = vmatprep.subr.mxu0 0.0
    %2618 = vmatpush1.msra.mxu0 0.0
    %2619 = vmatprep.subr.mxu0 0.0
    %2620 = vmatpush1.msra.mxu0 0.0
    %2621 = vmatprep.subr.mxu0 0.0
    %2622 = vmatpush1.msra.mxu0 0.0
    %2623 = vmatprep.subr.mxu0 0.0
    %2624 = vmatpush1.msra.mxu0 0.0
    %2625 = vmatprep.subr.mxu0 0.0
    %2626 = vmatpush1.msra.mxu0 0.0
    %2627 = vmatprep.subr.mxu0 0.0
    %2628 = vmatpush1.msra.mxu0 0.0
    %2629 = vmatprep.subr.mxu0 0.0
    %2630 = vmatpush1.msra.mxu0 0.0
    %2631 = vmatprep.subr.mxu0 0.0
    %2632 = vmatpush1.msra.mxu0 0.0
    %2633 = vmatprep.subr.mxu0 0.0
    %2634 = vmatpush1.msra.mxu0 0.0
    %2635 = vmatprep.subr.mxu0 0.0
    %2636 = vmatpush1.msra.mxu0 0.0
    %2637 = vmatprep.subr.mxu0 0.0
    %2638 = vmatpush1.msra.mxu0 0.0
    %2639 = vmatprep.subr.mxu0 0.0
    %2640 = vmatpush1.msra.mxu0 0.0
    %2641 = vmatprep.subr.mxu0 0.0
    %2642 = vmatpush1.msra.mxu0 0.0
    %2643 = vmatprep.subr.mxu0 0.0
    %2644 = vmatpush1.msra.mxu0 0.0
    %2645 = vmatprep.subr.mxu0 0.0
    %2646 = vmatpush1.msra.mxu0 0.0
    %2647 = vmatprep.subr.mxu0 0.0
    %2648 = vmatpush1.msra.mxu0 0.0
    %2649 = vmatprep.subr.mxu0 0.0
    %2650 = vmatpush1.msra.mxu0 0.0
    %2651 = vmatprep.subr.mxu0 0.0
    %2652 = vmatpush1.msra.mxu0 0.0
    %2653 = vmatprep.subr.mxu0 0.0
    %2654 = vmatpush1.msra.mxu0 0.0
    %2655 = vmatprep.subr.mxu0 0.0
    %2656 = vmatpush1.msra.mxu0 0.0
    %2657 = vmatprep.subr.mxu0 0.0
    %2658 = vmatpush1.msra.mxu0 0.0
    %2659 = vmatprep.subr.mxu0 0.0
    %2660 = vmatpush1.msra.mxu0 0.0
    %2661 = vmatprep.subr.mxu0 0.0
    %2662 = vmatpush1.msra.mxu0 0.0
    %2663 = vmatprep.subr.mxu0 0.0
    %2664 = vmatpush1.msra.mxu0 0.0
    %2665 = vmatprep.subr.mxu0 0.0
    %2666 = vmatpush1.msra.mxu0 0.0
    %2667 = vmatprep.mubr.f32.mxu0 0.0
    %2668 = vmatmul.mubr.f32.gmra.mrb[0].mxu0 %v2598
    %v2669 = vpop.f32.mrb[0].mxu0
    %v2670 = vadd.f32 0.0, %v2669
    %v2671 = vpop.f32.mrb[0].mxu0
    %2672 = vmatprep.mubr.f32.mxu0 0.0
    %2673 = vmatmul.mubr.f32.gmra.mrb[0].mxu0 %v2601
    %v2674 = vpop.f32.mrb[0].mxu0
    %v2675 = vadd.f32 0.0, %v2674
    %v2676 = vpop.f32.mrb[0].mxu0
    %2677 = vdwg.mxu0
    %v2678 = vsel %vm30, %v2427, 0.0
    %v2679 = vsel %vm30, %v2508, 0.0
    %v2680 = vadd.f32 %v2678, %v2679
    %v2681 = vsel %vm30, %v2589, 0.0
    %v2682 = vadd.f32 %v2680, %v2681
    %v2683 = vsel %vm30, %v2670, 0.0
    %v2684 = vadd.f32 %v2682, %v2683
    %v2685 = vsel %vm30, %v2432, 0.0
    %v2686 = vsel %vm30, %v2513, 0.0
    %v2687 = vadd.f32 %v2685, %v2686
    %v2688 = vsel %vm30, %v2594, 0.0
    %v2689 = vadd.f32 %v2687, %v2688
    %v2690 = vsel %vm30, %v2675, 0.0
    %v2691 = vadd.f32 %v2689, %v2690
    %s2692 = scalar_lea.vmem %s3, 384
    %v2693 = vld [vmem:[%s2692] sm:$0xff]
    %v2694 = vld [vmem:[%s2692 + $0x8] sm:$0xff]
    %v2695 = vld [vmem:[%s2692 + $0x10] sm:$0xff]
    %v2696 = vld [vmem:[%s2692 + $0x18] sm:$0xff]
    %v2697 = vld [vmem:[%s2692 + $0x20] sm:$0xff]
    %v2698 = vld [vmem:[%s2692 + $0x28] sm:$0xff]
    %v2699 = vld [vmem:[%s2692 + $0x30] sm:$0xff]
    %v2700 = vld [vmem:[%s2692 + $0x38] sm:$0xff]
    %v2701 = vld [vmem:[%s2692 + $0x40] sm:$0xff]
    %v2702 = vld [vmem:[%s2692 + $0x48] sm:$0xff]
    %v2703 = vld [vmem:[%s2692 + $0x50] sm:$0xff]
    %v2704 = vld [vmem:[%s2692 + $0x58] sm:$0xff]
    %v2705 = vld [vmem:[%s2692 + $0x60] sm:$0xff]
    %v2706 = vld [vmem:[%s2692 + $0x68] sm:$0xff]
    %v2707 = vld [vmem:[%s2692 + $0x70] sm:$0xff]
    %v2708 = vld [vmem:[%s2692 + $0x78] sm:$0xff]
    %v2709 = vld [vmem:[%s2692 + $0x80] sm:$0xff]
    %v2710 = vld [vmem:[%s2692 + $0x88] sm:$0xff]
    %v2711 = vld [vmem:[%s2692 + $0x90] sm:$0xff]
    %v2712 = vld [vmem:[%s2692 + $0x98] sm:$0xff]
    %v2713 = vld [vmem:[%s2692 + $0xa0] sm:$0xff]
    %v2714 = vld [vmem:[%s2692 + $0xa8] sm:$0xff]
    %v2715 = vld [vmem:[%s2692 + $0xb0] sm:$0xff]
    %v2716 = vld [vmem:[%s2692 + $0xb8] sm:$0xff]
    %v2717 = vld [vmem:[%s2692 + $0xc0] sm:$0xff]
    %v2718 = vld [vmem:[%s2692 + $0xc8] sm:$0xff]
    %v2719 = vld [vmem:[%s2692 + $0xd0] sm:$0xff]
    %v2720 = vld [vmem:[%s2692 + $0xd8] sm:$0xff]
    %v2721 = vld [vmem:[%s2692 + $0xe0] sm:$0xff]
    %v2722 = vld [vmem:[%s2692 + $0xe8] sm:$0xff]
    %v2723 = vld [vmem:[%s2692 + $0xf0] sm:$0xff]
    %v2724 = vld [vmem:[%s2692 + $0xf8] sm:$0xff]
    %v2725 = vld [vmem:[%s2692 + $0x100] sm:$0xff]
    %v2726 = vld [vmem:[%s2692 + $0x108] sm:$0xff]
    %v2727 = vld [vmem:[%s2692 + $0x110] sm:$0xff]
    %v2728 = vld [vmem:[%s2692 + $0x118] sm:$0xff]
    %v2729 = vld [vmem:[%s2692 + $0x120] sm:$0xff]
    %v2730 = vld [vmem:[%s2692 + $0x128] sm:$0xff]
    %v2731 = vld [vmem:[%s2692 + $0x130] sm:$0xff]
    %v2732 = vld [vmem:[%s2692 + $0x138] sm:$0xff]
    %v2733 = vld [vmem:[%s2692 + $0x140] sm:$0xff]
    %v2734 = vld [vmem:[%s2692 + $0x148] sm:$0xff]
    %v2735 = vld [vmem:[%s2692 + $0x150] sm:$0xff]
    %v2736 = vld [vmem:[%s2692 + $0x158] sm:$0xff]
    %v2737 = vld [vmem:[%s2692 + $0x160] sm:$0xff]
    %v2738 = vld [vmem:[%s2692 + $0x168] sm:$0xff]
    %v2739 = vld [vmem:[%s2692 + $0x170] sm:$0xff]
    %v2740 = vld [vmem:[%s2692 + $0x178] sm:$0xff]
    %v2742 = vsel %vm30, %v2684, 0
    %v2745 = vsel %vm30, %v2691, 0
    %2747 = vmatprep.subr.mxu0 0.0
    %2748 = vmatpush1.msra.mxu0 %v2693
    %2749 = vmatprep.subr.mxu0 0.0
    %2750 = vmatpush1.msra.mxu0 %v2694
    %2751 = vmatprep.subr.mxu0 0.0
    %2752 = vmatpush1.msra.mxu0 %v2695
    %2753 = vmatprep.subr.mxu0 0.0
    %2754 = vmatpush1.msra.mxu0 %v2696
    %2755 = vmatprep.subr.mxu0 0.0
    %2756 = vmatpush1.msra.mxu0 0.0
    %2757 = vmatprep.subr.mxu0 0.0
    %2758 = vmatpush1.msra.mxu0 0.0
    %2759 = vmatprep.subr.mxu0 0.0
    %2760 = vmatpush1.msra.mxu0 0.0
    %2761 = vmatprep.subr.mxu0 0.0
    %2762 = vmatpush1.msra.mxu0 0.0
    %2763 = vmatprep.subr.mxu0 0.0
    %2764 = vmatpush1.msra.mxu0 0.0
    %2765 = vmatprep.subr.mxu0 0.0
    %2766 = vmatpush1.msra.mxu0 0.0
    %2767 = vmatprep.subr.mxu0 0.0
    %2768 = vmatpush1.msra.mxu0 0.0
    %2769 = vmatprep.subr.mxu0 0.0
    %2770 = vmatpush1.msra.mxu0 0.0
    %2771 = vmatprep.subr.mxu0 0.0
    %2772 = vmatpush1.msra.mxu0 0.0
    %2773 = vmatprep.subr.mxu0 0.0
    %2774 = vmatpush1.msra.mxu0 0.0
    %2775 = vmatprep.subr.mxu0 0.0
    %2776 = vmatpush1.msra.mxu0 0.0
    %2777 = vmatprep.subr.mxu0 0.0
    %2778 = vmatpush1.msra.mxu0 0.0
    %2779 = vmatprep.subr.mxu0 0.0
    %2780 = vmatpush1.msra.mxu0 0.0
    %2781 = vmatprep.subr.mxu0 0.0
    %2782 = vmatpush1.msra.mxu0 0.0
    %2783 = vmatprep.subr.mxu0 0.0
    %2784 = vmatpush1.msra.mxu0 0.0
    %2785 = vmatprep.subr.mxu0 0.0
    %2786 = vmatpush1.msra.mxu0 0.0
    %2787 = vmatprep.subr.mxu0 0.0
    %2788 = vmatpush1.msra.mxu0 0.0
    %2789 = vmatprep.subr.mxu0 0.0
    %2790 = vmatpush1.msra.mxu0 0.0
    %2791 = vmatprep.subr.mxu0 0.0
    %2792 = vmatpush1.msra.mxu0 0.0
    %2793 = vmatprep.subr.mxu0 0.0
    %2794 = vmatpush1.msra.mxu0 0.0
    %2795 = vmatprep.subr.mxu0 0.0
    %2796 = vmatpush1.msra.mxu0 0.0
    %2797 = vmatprep.subr.mxu0 0.0
    %2798 = vmatpush1.msra.mxu0 0.0
    %2799 = vmatprep.subr.mxu0 0.0
    %2800 = vmatpush1.msra.mxu0 0.0
    %2801 = vmatprep.subr.mxu0 0.0
    %2802 = vmatpush1.msra.mxu0 0.0
    %2803 = vmatprep.subr.mxu0 0.0
    %2804 = vmatpush1.msra.mxu0 0.0
    %2805 = vmatprep.subr.mxu0 0.0
    %2806 = vmatpush1.msra.mxu0 0.0
    %2807 = vmatprep.subr.mxu0 0.0
    %2808 = vmatpush1.msra.mxu0 0.0
    %2809 = vmatprep.subr.mxu0 0.0
    %2810 = vmatpush1.msra.mxu0 0.0
    %2811 = vmatprep.mubr.f32.mxu0 0.0
    %2812 = vmatmul.mubr.f32.gmra.mrb[0].mxu0 %v2742
    %v2813 = vpop.f32.mrb[0].mxu0
    %v2814 = vadd.f32 0.0, %v2813
    %v2815 = vpop.f32.mrb[0].mxu0
    %2816 = vmatprep.mubr.f32.mxu0 0.0
    %2817 = vmatmul.mubr.f32.gmra.mrb[0].mxu0 %v2745
    %v2818 = vpop.f32.mrb[0].mxu0
    %v2819 = vadd.f32 0.0, %v2818
    %v2820 = vpop.f32.mrb[0].mxu0
    %2821 = vdwg.mxu0
    %2822 = vmatprep.subr.mxu0 0.0
    %2823 = vmatpush1.msra.mxu0 %v2697
    %2824 = vmatprep.subr.mxu0 0.0
    %2825 = vmatpush1.msra.mxu0 %v2698
    %2826 = vmatprep.subr.mxu0 0.0
    %2827 = vmatpush1.msra.mxu0 %v2699
    %2828 = vmatprep.subr.mxu0 0.0
    %2829 = vmatpush1.msra.mxu0 %v2700
    %2830 = vmatprep.subr.mxu0 0.0
    %2831 = vmatpush1.msra.mxu0 0.0
    %2832 = vmatprep.subr.mxu0 0.0
    %2833 = vmatpush1.msra.mxu0 0.0
    %2834 = vmatprep.subr.mxu0 0.0
    %2835 = vmatpush1.msra.mxu0 0.0
    %2836 = vmatprep.subr.mxu0 0.0
    %2837 = vmatpush1.msra.mxu0 0.0
    %2838 = vmatprep.subr.mxu0 0.0
    %2839 = vmatpush1.msra.mxu0 0.0
    %2840 = vmatprep.subr.mxu0 0.0
    %2841 = vmatpush1.msra.mxu0 0.0
    %2842 = vmatprep.subr.mxu0 0.0
    %2843 = vmatpush1.msra.mxu0 0.0
    %2844 = vmatprep.subr.mxu0 0.0
    %2845 = vmatpush1.msra.mxu0 0.0
    %2846 = vmatprep.subr.mxu0 0.0
    %2847 = vmatpush1.msra.mxu0 0.0
    %2848 = vmatprep.subr.mxu0 0.0
    %2849 = vmatpush1.msra.mxu0 0.0
    %2850 = vmatprep.subr.mxu0 0.0
    %2851 = vmatpush1.msra.mxu0 0.0
    %2852 = vmatprep.subr.mxu0 0.0
    %2853 = vmatpush1.msra.mxu0 0.0
    %2854 = vmatprep.subr.mxu0 0.0
    %2855 = vmatpush1.msra.mxu0 0.0
    %2856 = vmatprep.subr.mxu0 0.0
    %2857 = vmatpush1.msra.mxu0 0.0
    %2858 = vmatprep.subr.mxu0 0.0
    %2859 = vmatpush1.msra.mxu0 0.0
    %2860 = vmatprep.subr.mxu0 0.0
    %2861 = vmatpush1.msra.mxu0 0.0
    %2862 = vmatprep.subr.mxu0 0.0
    %2863 = vmatpush1.msra.mxu0 0.0
    %2864 = vmatprep.subr.mxu0 0.0
    %2865 = vmatpush1.msra.mxu0 0.0
    %2866 = vmatprep.subr.mxu0 0.0
    %2867 = vmatpush1.msra.mxu0 0.0
    %2868 = vmatprep.subr.mxu0 0.0
    %2869 = vmatpush1.msra.mxu0 0.0
    %2870 = vmatprep.subr.mxu0 0.0
    %2871 = vmatpush1.msra.mxu0 0.0
    %2872 = vmatprep.subr.mxu0 0.0
    %2873 = vmatpush1.msra.mxu0 0.0
    %2874 = vmatprep.subr.mxu0 0.0
    %2875 = vmatpush1.msra.mxu0 0.0
    %2876 = vmatprep.subr.mxu0 0.0
    %2877 = vmatpush1.msra.mxu0 0.0
    %2878 = vmatprep.subr.mxu0 0.0
    %2879 = vmatpush1.msra.mxu0 0.0
    %2880 = vmatprep.subr.mxu0 0.0
    %2881 = vmatpush1.msra.mxu0 0.0
    %2882 = vmatprep.subr.mxu0 0.0
    %2883 = vmatpush1.msra.mxu0 0.0
    %2884 = vmatprep.subr.mxu0 0.0
    %2885 = vmatpush1.msra.mxu0 0.0
    %2886 = vmatprep.mubr.f32.mxu0 0.0
    %2887 = vmatmul.mubr.f32.gmra.mrb[0].mxu0 %v2742
    %v2888 = vpop.f32.mrb[0].mxu0
    %v2889 = vadd.f32 0.0, %v2888
    %v2890 = vpop.f32.mrb[0].mxu0
    %2891 = vmatprep.mubr.f32.mxu0 0.0
    %2892 = vmatmul.mubr.f32.gmra.mrb[0].mxu0 %v2745
    %v2893 = vpop.f32.mrb[0].mxu0
    %v2894 = vadd.f32 0.0, %v2893
    %v2895 = vpop.f32.mrb[0].mxu0
    %2896 = vdwg.mxu0
    %2897 = vmatprep.subr.mxu0 0.0
    %2898 = vmatpush1.msra.mxu0 %v2701
    %2899 = vmatprep.subr.mxu0 0.0
    %2900 = vmatpush1.msra.mxu0 %v2702
    %2901 = vmatprep.subr.mxu0 0.0
    %2902 = vmatpush1.msra.mxu0 %v2703
    %2903 = vmatprep.subr.mxu0 0.0
    %2904 = vmatpush1.msra.mxu0 %v2704
    %2905 = vmatprep.subr.mxu0 0.0
    %2906 = vmatpush1.msra.mxu0 0.0
    %2907 = vmatprep.subr.mxu0 0.0
    %2908 = vmatpush1.msra.mxu0 0.0
    %2909 = vmatprep.subr.mxu0 0.0
    %2910 = vmatpush1.msra.mxu0 0.0
    %2911 = vmatprep.subr.mxu0 0.0
    %2912 = vmatpush1.msra.mxu0 0.0
    %2913 = vmatprep.subr.mxu0 0.0
    %2914 = vmatpush1.msra.mxu0 0.0
    %2915 = vmatprep.subr.mxu0 0.0
    %2916 = vmatpush1.msra.mxu0 0.0
    %2917 = vmatprep.subr.mxu0 0.0
    %2918 = vmatpush1.msra.mxu0 0.0
    %2919 = vmatprep.subr.mxu0 0.0
    %2920 = vmatpush1.msra.mxu0 0.0
    %2921 = vmatprep.subr.mxu0 0.0
    %2922 = vmatpush1.msra.mxu0 0.0
    %2923 = vmatprep.subr.mxu0 0.0
    %2924 = vmatpush1.msra.mxu0 0.0
    %2925 = vmatprep.subr.mxu0 0.0
    %2926 = vmatpush1.msra.mxu0 0.0
    %2927 = vmatprep.subr.mxu0 0.0
    %2928 = vmatpush1.msra.mxu0 0.0
    %2929 = vmatprep.subr.mxu0 0.0
    %2930 = vmatpush1.msra.mxu0 0.0
    %2931 = vmatprep.subr.mxu0 0.0
    %2932 = vmatpush1.msra.mxu0 0.0
    %2933 = vmatprep.subr.mxu0 0.0
    %2934 = vmatpush1.msra.mxu0 0.0
    %2935 = vmatprep.subr.mxu0 0.0
    %2936 = vmatpush1.msra.mxu0 0.0
    %2937 = vmatprep.subr.mxu0 0.0
    %2938 = vmatpush1.msra.mxu0 0.0
    %2939 = vmatprep.subr.mxu0 0.0
    %2940 = vmatpush1.msra.mxu0 0.0
    %2941 = vmatprep.subr.mxu0 0.0
    %2942 = vmatpush1.msra.mxu0 0.0
    %2943 = vmatprep.subr.mxu0 0.0
    %2944 = vmatpush1.msra.mxu0 0.0
    %2945 = vmatprep.subr.mxu0 0.0
    %2946 = vmatpush1.msra.mxu0 0.0
    %2947 = vmatprep.subr.mxu0 0.0
    %2948 = vmatpush1.msra.mxu0 0.0
    %2949 = vmatprep.subr.mxu0 0.0
    %2950 = vmatpush1.msra.mxu0 0.0
    %2951 = vmatprep.subr.mxu0 0.0
    %2952 = vmatpush1.msra.mxu0 0.0
    %2953 = vmatprep.subr.mxu0 0.0
    %2954 = vmatpush1.msra.mxu0 0.0
    %2955 = vmatprep.subr.mxu0 0.0
    %2956 = vmatpush1.msra.mxu0 0.0
    %2957 = vmatprep.subr.mxu0 0.0
    %2958 = vmatpush1.msra.mxu0 0.0
    %2959 = vmatprep.subr.mxu0 0.0
    %2960 = vmatpush1.msra.mxu0 0.0
    %2961 = vmatprep.mubr.f32.mxu0 0.0
    %2962 = vmatmul.mubr.f32.gmra.mrb[0].mxu0 %v2742
    %v2963 = vpop.f32.mrb[0].mxu0
    %v2964 = vadd.f32 0.0, %v2963
    %v2965 = vpop.f32.mrb[0].mxu0
    %2966 = vmatprep.mubr.f32.mxu0 0.0
    %2967 = vmatmul.mubr.f32.gmra.mrb[0].mxu0 %v2745
    %v2968 = vpop.f32.mrb[0].mxu0
    %v2969 = vadd.f32 0.0, %v2968
    %v2970 = vpop.f32.mrb[0].mxu0
    %2971 = vdwg.mxu0
    %2972 = vmatprep.subr.mxu0 0.0
    %2973 = vmatpush1.msra.mxu0 %v2705
    %2974 = vmatprep.subr.mxu0 0.0
    %2975 = vmatpush1.msra.mxu0 %v2706
    %2976 = vmatprep.subr.mxu0 0.0
    %2977 = vmatpush1.msra.mxu0 %v2707
    %2978 = vmatprep.subr.mxu0 0.0
    %2979 = vmatpush1.msra.mxu0 %v2708
    %2980 = vmatprep.subr.mxu0 0.0
    %2981 = vmatpush1.msra.mxu0 0.0
    %2982 = vmatprep.subr.mxu0 0.0
    %2983 = vmatpush1.msra.mxu0 0.0
    %2984 = vmatprep.subr.mxu0 0.0
    %2985 = vmatpush1.msra.mxu0 0.0
    %2986 = vmatprep.subr.mxu0 0.0
    %2987 = vmatpush1.msra.mxu0 0.0
    %2988 = vmatprep.subr.mxu0 0.0
    %2989 = vmatpush1.msra.mxu0 0.0
    %2990 = vmatprep.subr.mxu0 0.0
    %2991 = vmatpush1.msra.mxu0 0.0
    %2992 = vmatprep.subr.mxu0 0.0
    %2993 = vmatpush1.msra.mxu0 0.0
    %2994 = vmatprep.subr.mxu0 0.0
    %2995 = vmatpush1.msra.mxu0 0.0
    %2996 = vmatprep.subr.mxu0 0.0
    %2997 = vmatpush1.msra.mxu0 0.0
    %2998 = vmatprep.subr.mxu0 0.0
    %2999 = vmatpush1.msra.mxu0 0.0
    %3000 = vmatprep.subr.mxu0 0.0
    %3001 = vmatpush1.msra.mxu0 0.0
    %3002 = vmatprep.subr.mxu0 0.0
    %3003 = vmatpush1.msra.mxu0 0.0
    %3004 = vmatprep.subr.mxu0 0.0
    %3005 = vmatpush1.msra.mxu0 0.0
    %3006 = vmatprep.subr.mxu0 0.0
    %3007 = vmatpush1.msra.mxu0 0.0
    %3008 = vmatprep.subr.mxu0 0.0
    %3009 = vmatpush1.msra.mxu0 0.0
    %3010 = vmatprep.subr.mxu0 0.0
    %3011 = vmatpush1.msra.mxu0 0.0
    %3012 = vmatprep.subr.mxu0 0.0
    %3013 = vmatpush1.msra.mxu0 0.0
    %3014 = vmatprep.subr.mxu0 0.0
    %3015 = vmatpush1.msra.mxu0 0.0
    %3016 = vmatprep.subr.mxu0 0.0
    %3017 = vmatpush1.msra.mxu0 0.0
    %3018 = vmatprep.subr.mxu0 0.0
    %3019 = vmatpush1.msra.mxu0 0.0
    %3020 = vmatprep.subr.mxu0 0.0
    %3021 = vmatpush1.msra.mxu0 0.0
    %3022 = vmatprep.subr.mxu0 0.0
    %3023 = vmatpush1.msra.mxu0 0.0
    %3024 = vmatprep.subr.mxu0 0.0
    %3025 = vmatpush1.msra.mxu0 0.0
    %3026 = vmatprep.subr.mxu0 0.0
    %3027 = vmatpush1.msra.mxu0 0.0
    %3028 = vmatprep.subr.mxu0 0.0
    %3029 = vmatpush1.msra.mxu0 0.0
    %3030 = vmatprep.subr.mxu0 0.0
    %3031 = vmatpush1.msra.mxu0 0.0
    %3032 = vmatprep.subr.mxu0 0.0
    %3033 = vmatpush1.msra.mxu0 0.0
    %3034 = vmatprep.subr.mxu0 0.0
    %3035 = vmatpush1.msra.mxu0 0.0
    %3036 = vmatprep.mubr.f32.mxu0 0.0
    %3037 = vmatmul.mubr.f32.gmra.mrb[0].mxu0 %v2742
    %v3038 = vpop.f32.mrb[0].mxu0
    %v3039 = vadd.f32 0.0, %v3038
    %v3040 = vpop.f32.mrb[0].mxu0
    %3041 = vmatprep.mubr.f32.mxu0 0.0
    %3042 = vmatmul.mubr.f32.gmra.mrb[0].mxu0 %v2745
    %v3043 = vpop.f32.mrb[0].mxu0
    %v3044 = vadd.f32 0.0, %v3043
    %v3045 = vpop.f32.mrb[0].mxu0
    %3046 = vdwg.mxu0
    %3047 = vmatprep.subr.mxu0 0.0
    %3048 = vmatpush1.msra.mxu0 %v2709
    %3049 = vmatprep.subr.mxu0 0.0
    %3050 = vmatpush1.msra.mxu0 %v2710
    %3051 = vmatprep.subr.mxu0 0.0
    %3052 = vmatpush1.msra.mxu0 %v2711
    %3053 = vmatprep.subr.mxu0 0.0
    %3054 = vmatpush1.msra.mxu0 %v2712
    %3055 = vmatprep.subr.mxu0 0.0
    %3056 = vmatpush1.msra.mxu0 0.0
    %3057 = vmatprep.subr.mxu0 0.0
    %3058 = vmatpush1.msra.mxu0 0.0
    %3059 = vmatprep.subr.mxu0 0.0
    %3060 = vmatpush1.msra.mxu0 0.0
    %3061 = vmatprep.subr.mxu0 0.0
    %3062 = vmatpush1.msra.mxu0 0.0
    %3063 = vmatprep.subr.mxu0 0.0
    %3064 = vmatpush1.msra.mxu0 0.0
    %3065 = vmatprep.subr.mxu0 0.0
    %3066 = vmatpush1.msra.mxu0 0.0
    %3067 = vmatprep.subr.mxu0 0.0
    %3068 = vmatpush1.msra.mxu0 0.0
    %3069 = vmatprep.subr.mxu0 0.0
    %3070 = vmatpush1.msra.mxu0 0.0
    %3071 = vmatprep.subr.mxu0 0.0
    %3072 = vmatpush1.msra.mxu0 0.0
    %3073 = vmatprep.subr.mxu0 0.0
    %3074 = vmatpush1.msra.mxu0 0.0
    %3075 = vmatprep.subr.mxu0 0.0
    %3076 = vmatpush1.msra.mxu0 0.0
    %3077 = vmatprep.subr.mxu0 0.0
    %3078 = vmatpush1.msra.mxu0 0.0
    %3079 = vmatprep.subr.mxu0 0.0
    %3080 = vmatpush1.msra.mxu0 0.0
    %3081 = vmatprep.subr.mxu0 0.0
    %3082 = vmatpush1.msra.mxu0 0.0
    %3083 = vmatprep.subr.mxu0 0.0
    %3084 = vmatpush1.msra.mxu0 0.0
    %3085 = vmatprep.subr.mxu0 0.0
    %3086 = vmatpush1.msra.mxu0 0.0
    %3087 = vmatprep.subr.mxu0 0.0
    %3088 = vmatpush1.msra.mxu0 0.0
    %3089 = vmatprep.subr.mxu0 0.0
    %3090 = vmatpush1.msra.mxu0 0.0
    %3091 = vmatprep.subr.mxu0 0.0
    %3092 = vmatpush1.msra.mxu0 0.0
    %3093 = vmatprep.subr.mxu0 0.0
    %3094 = vmatpush1.msra.mxu0 0.0
    %3095 = vmatprep.subr.mxu0 0.0
    %3096 = vmatpush1.msra.mxu0 0.0
    %3097 = vmatprep.subr.mxu0 0.0
    %3098 = vmatpush1.msra.mxu0 0.0
    %3099 = vmatprep.subr.mxu0 0.0
    %3100 = vmatpush1.msra.mxu0 0.0
    %3101 = vmatprep.subr.mxu0 0.0
    %3102 = vmatpush1.msra.mxu0 0.0
    %3103 = vmatprep.subr.mxu0 0.0
    %3104 = vmatpush1.msra.mxu0 0.0
    %3105 = vmatprep.subr.mxu0 0.0
    %3106 = vmatpush1.msra.mxu0 0.0
    %3107 = vmatprep.subr.mxu0 0.0
    %3108 = vmatpush1.msra.mxu0 0.0
    %3109 = vmatprep.subr.mxu0 0.0
    %3110 = vmatpush1.msra.mxu0 0.0
    %3111 = vmatprep.mubr.f32.mxu0 0.0
    %3112 = vmatmul.mubr.f32.gmra.mrb[0].mxu0 %v2742
    %v3113 = vpop.f32.mrb[0].mxu0
    %v3114 = vadd.f32 0.0, %v3113
    %v3115 = vpop.f32.mrb[0].mxu0
    %3116 = vmatprep.mubr.f32.mxu0 0.0
    %3117 = vmatmul.mubr.f32.gmra.mrb[0].mxu0 %v2745
    %v3118 = vpop.f32.mrb[0].mxu0
    %v3119 = vadd.f32 0.0, %v3118
    %v3120 = vpop.f32.mrb[0].mxu0
    %3121 = vdwg.mxu0
    %3122 = vmatprep.subr.mxu0 0.0
    %3123 = vmatpush1.msra.mxu0 %v2713
    %3124 = vmatprep.subr.mxu0 0.0
    %3125 = vmatpush1.msra.mxu0 %v2714
    %3126 = vmatprep.subr.mxu0 0.0
    %3127 = vmatpush1.msra.mxu0 %v2715
    %3128 = vmatprep.subr.mxu0 0.0
    %3129 = vmatpush1.msra.mxu0 %v2716
    %3130 = vmatprep.subr.mxu0 0.0
    %3131 = vmatpush1.msra.mxu0 0.0
    %3132 = vmatprep.subr.mxu0 0.0
    %3133 = vmatpush1.msra.mxu0 0.0
    %3134 = vmatprep.subr.mxu0 0.0
    %3135 = vmatpush1.msra.mxu0 0.0
    %3136 = vmatprep.subr.mxu0 0.0
    %3137 = vmatpush1.msra.mxu0 0.0
    %3138 = vmatprep.subr.mxu0 0.0
    %3139 = vmatpush1.msra.mxu0 0.0
    %3140 = vmatprep.subr.mxu0 0.0
    %3141 = vmatpush1.msra.mxu0 0.0
    %3142 = vmatprep.subr.mxu0 0.0
    %3143 = vmatpush1.msra.mxu0 0.0
    %3144 = vmatprep.subr.mxu0 0.0
    %3145 = vmatpush1.msra.mxu0 0.0
    %3146 = vmatprep.subr.mxu0 0.0
    %3147 = vmatpush1.msra.mxu0 0.0
    %3148 = vmatprep.subr.mxu0 0.0
    %3149 = vmatpush1.msra.mxu0 0.0
    %3150 = vmatprep.subr.mxu0 0.0
    %3151 = vmatpush1.msra.mxu0 0.0
    %3152 = vmatprep.subr.mxu0 0.0
    %3153 = vmatpush1.msra.mxu0 0.0
    %3154 = vmatprep.subr.mxu0 0.0
    %3155 = vmatpush1.msra.mxu0 0.0
    %3156 = vmatprep.subr.mxu0 0.0
    %3157 = vmatpush1.msra.mxu0 0.0
    %3158 = vmatprep.subr.mxu0 0.0
    %3159 = vmatpush1.msra.mxu0 0.0
    %3160 = vmatprep.subr.mxu0 0.0
    %3161 = vmatpush1.msra.mxu0 0.0
    %3162 = vmatprep.subr.mxu0 0.0
    %3163 = vmatpush1.msra.mxu0 0.0
    %3164 = vmatprep.subr.mxu0 0.0
    %3165 = vmatpush1.msra.mxu0 0.0
    %3166 = vmatprep.subr.mxu0 0.0
    %3167 = vmatpush1.msra.mxu0 0.0
    %3168 = vmatprep.subr.mxu0 0.0
    %3169 = vmatpush1.msra.mxu0 0.0
    %3170 = vmatprep.subr.mxu0 0.0
    %3171 = vmatpush1.msra.mxu0 0.0
    %3172 = vmatprep.subr.mxu0 0.0
    %3173 = vmatpush1.msra.mxu0 0.0
    %3174 = vmatprep.subr.mxu0 0.0
    %3175 = vmatpush1.msra.mxu0 0.0
    %3176 = vmatprep.subr.mxu0 0.0
    %3177 = vmatpush1.msra.mxu0 0.0
    %3178 = vmatprep.subr.mxu0 0.0
    %3179 = vmatpush1.msra.mxu0 0.0
    %3180 = vmatprep.subr.mxu0 0.0
    %3181 = vmatpush1.msra.mxu0 0.0
    %3182 = vmatprep.subr.mxu0 0.0
    %3183 = vmatpush1.msra.mxu0 0.0
    %3184 = vmatprep.subr.mxu0 0.0
    %3185 = vmatpush1.msra.mxu0 0.0
    %3186 = vmatprep.mubr.f32.mxu0 0.0
    %3187 = vmatmul.mubr.f32.gmra.mrb[0].mxu0 %v2742
    %v3188 = vpop.f32.mrb[0].mxu0
    %v3189 = vadd.f32 0.0, %v3188
    %v3190 = vpop.f32.mrb[0].mxu0
    %3191 = vmatprep.mubr.f32.mxu0 0.0
    %3192 = vmatmul.mubr.f32.gmra.mrb[0].mxu0 %v2745
    %v3193 = vpop.f32.mrb[0].mxu0
    %v3194 = vadd.f32 0.0, %v3193
    %v3195 = vpop.f32.mrb[0].mxu0
    %3196 = vdwg.mxu0
    %3197 = vmatprep.subr.mxu0 0.0
    %3198 = vmatpush1.msra.mxu0 %v2717
    %3199 = vmatprep.subr.mxu0 0.0
    %3200 = vmatpush1.msra.mxu0 %v2718
    %3201 = vmatprep.subr.mxu0 0.0
    %3202 = vmatpush1.msra.mxu0 %v2719
    %3203 = vmatprep.subr.mxu0 0.0
    %3204 = vmatpush1.msra.mxu0 %v2720
    %3205 = vmatprep.subr.mxu0 0.0
    %3206 = vmatpush1.msra.mxu0 0.0
    %3207 = vmatprep.subr.mxu0 0.0
    %3208 = vmatpush1.msra.mxu0 0.0
    %3209 = vmatprep.subr.mxu0 0.0
    %3210 = vmatpush1.msra.mxu0 0.0
    %3211 = vmatprep.subr.mxu0 0.0
    %3212 = vmatpush1.msra.mxu0 0.0
    %3213 = vmatprep.subr.mxu0 0.0
    %3214 = vmatpush1.msra.mxu0 0.0
    %3215 = vmatprep.subr.mxu0 0.0
    %3216 = vmatpush1.msra.mxu0 0.0
    %3217 = vmatprep.subr.mxu0 0.0
    %3218 = vmatpush1.msra.mxu0 0.0
    %3219 = vmatprep.subr.mxu0 0.0
    %3220 = vmatpush1.msra.mxu0 0.0
    %3221 = vmatprep.subr.mxu0 0.0
    %3222 = vmatpush1.msra.mxu0 0.0
    %3223 = vmatprep.subr.mxu0 0.0
    %3224 = vmatpush1.msra.mxu0 0.0
    %3225 = vmatprep.subr.mxu0 0.0
    %3226 = vmatpush1.msra.mxu0 0.0
    %3227 = vmatprep.subr.mxu0 0.0
    %3228 = vmatpush1.msra.mxu0 0.0
    %3229 = vmatprep.subr.mxu0 0.0
    %3230 = vmatpush1.msra.mxu0 0.0
    %3231 = vmatprep.subr.mxu0 0.0
    %3232 = vmatpush1.msra.mxu0 0.0
    %3233 = vmatprep.subr.mxu0 0.0
    %3234 = vmatpush1.msra.mxu0 0.0
    %3235 = vmatprep.subr.mxu0 0.0
    %3236 = vmatpush1.msra.mxu0 0.0
    %3237 = vmatprep.subr.mxu0 0.0
    %3238 = vmatpush1.msra.mxu0 0.0
    %3239 = vmatprep.subr.mxu0 0.0
    %3240 = vmatpush1.msra.mxu0 0.0
    %3241 = vmatprep.subr.mxu0 0.0
    %3242 = vmatpush1.msra.mxu0 0.0
    %3243 = vmatprep.subr.mxu0 0.0
    %3244 = vmatpush1.msra.mxu0 0.0
    %3245 = vmatprep.subr.mxu0 0.0
    %3246 = vmatpush1.msra.mxu0 0.0
    %3247 = vmatprep.subr.mxu0 0.0
    %3248 = vmatpush1.msra.mxu0 0.0
    %3249 = vmatprep.subr.mxu0 0.0
    %3250 = vmatpush1.msra.mxu0 0.0
    %3251 = vmatprep.subr.mxu0 0.0
    %3252 = vmatpush1.msra.mxu0 0.0
    %3253 = vmatprep.subr.mxu0 0.0
    %3254 = vmatpush1.msra.mxu0 0.0
    %3255 = vmatprep.subr.mxu0 0.0
    %3256 = vmatpush1.msra.mxu0 0.0
    %3257 = vmatprep.subr.mxu0 0.0
    %3258 = vmatpush1.msra.mxu0 0.0
    %3259 = vmatprep.subr.mxu0 0.0
    %3260 = vmatpush1.msra.mxu0 0.0
    %3261 = vmatprep.mubr.f32.mxu0 0.0
    %3262 = vmatmul.mubr.f32.gmra.mrb[0].mxu0 %v2742
    %v3263 = vpop.f32.mrb[0].mxu0
    %v3264 = vadd.f32 0.0, %v3263
    %v3265 = vpop.f32.mrb[0].mxu0
    %3266 = vmatprep.mubr.f32.mxu0 0.0
    %3267 = vmatmul.mubr.f32.gmra.mrb[0].mxu0 %v2745
    %v3268 = vpop.f32.mrb[0].mxu0
    %v3269 = vadd.f32 0.0, %v3268
    %v3270 = vpop.f32.mrb[0].mxu0
    %3271 = vdwg.mxu0
    %3272 = vmatprep.subr.mxu0 0.0
    %3273 = vmatpush1.msra.mxu0 %v2721
    %3274 = vmatprep.subr.mxu0 0.0
    %3275 = vmatpush1.msra.mxu0 %v2722
    %3276 = vmatprep.subr.mxu0 0.0
    %3277 = vmatpush1.msra.mxu0 %v2723
    %3278 = vmatprep.subr.mxu0 0.0
    %3279 = vmatpush1.msra.mxu0 %v2724
    %3280 = vmatprep.subr.mxu0 0.0
    %3281 = vmatpush1.msra.mxu0 0.0
    %3282 = vmatprep.subr.mxu0 0.0
    %3283 = vmatpush1.msra.mxu0 0.0
    %3284 = vmatprep.subr.mxu0 0.0
    %3285 = vmatpush1.msra.mxu0 0.0
    %3286 = vmatprep.subr.mxu0 0.0
    %3287 = vmatpush1.msra.mxu0 0.0
    %3288 = vmatprep.subr.mxu0 0.0
    %3289 = vmatpush1.msra.mxu0 0.0
    %3290 = vmatprep.subr.mxu0 0.0
    %3291 = vmatpush1.msra.mxu0 0.0
    %3292 = vmatprep.subr.mxu0 0.0
    %3293 = vmatpush1.msra.mxu0 0.0
    %3294 = vmatprep.subr.mxu0 0.0
    %3295 = vmatpush1.msra.mxu0 0.0
    %3296 = vmatprep.subr.mxu0 0.0
    %3297 = vmatpush1.msra.mxu0 0.0
    %3298 = vmatprep.subr.mxu0 0.0
    %3299 = vmatpush1.msra.mxu0 0.0
    %3300 = vmatprep.subr.mxu0 0.0
    %3301 = vmatpush1.msra.mxu0 0.0
    %3302 = vmatprep.subr.mxu0 0.0
    %3303 = vmatpush1.msra.mxu0 0.0
    %3304 = vmatprep.subr.mxu0 0.0
    %3305 = vmatpush1.msra.mxu0 0.0
    %3306 = vmatprep.subr.mxu0 0.0
    %3307 = vmatpush1.msra.mxu0 0.0
    %3308 = vmatprep.subr.mxu0 0.0
    %3309 = vmatpush1.msra.mxu0 0.0
    %3310 = vmatprep.subr.mxu0 0.0
    %3311 = vmatpush1.msra.mxu0 0.0
    %3312 = vmatprep.subr.mxu0 0.0
    %3313 = vmatpush1.msra.mxu0 0.0
    %3314 = vmatprep.subr.mxu0 0.0
    %3315 = vmatpush1.msra.mxu0 0.0
    %3316 = vmatprep.subr.mxu0 0.0
    %3317 = vmatpush1.msra.mxu0 0.0
    %3318 = vmatprep.subr.mxu0 0.0
    %3319 = vmatpush1.msra.mxu0 0.0
    %3320 = vmatprep.subr.mxu0 0.0
    %3321 = vmatpush1.msra.mxu0 0.0
    %3322 = vmatprep.subr.mxu0 0.0
    %3323 = vmatpush1.msra.mxu0 0.0
    %3324 = vmatprep.subr.mxu0 0.0
    %3325 = vmatpush1.msra.mxu0 0.0
    %3326 = vmatprep.subr.mxu0 0.0
    %3327 = vmatpush1.msra.mxu0 0.0
    %3328 = vmatprep.subr.mxu0 0.0
    %3329 = vmatpush1.msra.mxu0 0.0
    %3330 = vmatprep.subr.mxu0 0.0
    %3331 = vmatpush1.msra.mxu0 0.0
    %3332 = vmatprep.subr.mxu0 0.0
    %3333 = vmatpush1.msra.mxu0 0.0
    %3334 = vmatprep.subr.mxu0 0.0
    %3335 = vmatpush1.msra.mxu0 0.0
    %3336 = vmatprep.mubr.f32.mxu0 0.0
    %3337 = vmatmul.mubr.f32.gmra.mrb[0].mxu0 %v2742
    %v3338 = vpop.f32.mrb[0].mxu0
    %v3339 = vadd.f32 0.0, %v3338
    %v3340 = vpop.f32.mrb[0].mxu0
    %3341 = vmatprep.mubr.f32.mxu0 0.0
    %3342 = vmatmul.mubr.f32.gmra.mrb[0].mxu0 %v2745
    %v3343 = vpop.f32.mrb[0].mxu0
    %v3344 = vadd.f32 0.0, %v3343
    %v3345 = vpop.f32.mrb[0].mxu0
    %3346 = vdwg.mxu0
    %3347 = vmatprep.subr.mxu0 0.0
    %3348 = vmatpush1.msra.mxu0 %v2725
    %3349 = vmatprep.subr.mxu0 0.0
    %3350 = vmatpush1.msra.mxu0 %v2726
    %3351 = vmatprep.subr.mxu0 0.0
    %3352 = vmatpush1.msra.mxu0 %v2727
    %3353 = vmatprep.subr.mxu0 0.0
    %3354 = vmatpush1.msra.mxu0 %v2728
    %3355 = vmatprep.subr.mxu0 0.0
    %3356 = vmatpush1.msra.mxu0 0.0
    %3357 = vmatprep.subr.mxu0 0.0
    %3358 = vmatpush1.msra.mxu0 0.0
    %3359 = vmatprep.subr.mxu0 0.0
    %3360 = vmatpush1.msra.mxu0 0.0
    %3361 = vmatprep.subr.mxu0 0.0
    %3362 = vmatpush1.msra.mxu0 0.0
    %3363 = vmatprep.subr.mxu0 0.0
    %3364 = vmatpush1.msra.mxu0 0.0
    %3365 = vmatprep.subr.mxu0 0.0
    %3366 = vmatpush1.msra.mxu0 0.0
    %3367 = vmatprep.subr.mxu0 0.0
    %3368 = vmatpush1.msra.mxu0 0.0
    %3369 = vmatprep.subr.mxu0 0.0
    %3370 = vmatpush1.msra.mxu0 0.0
    %3371 = vmatprep.subr.mxu0 0.0
    %3372 = vmatpush1.msra.mxu0 0.0
    %3373 = vmatprep.subr.mxu0 0.0
    %3374 = vmatpush1.msra.mxu0 0.0
    %3375 = vmatprep.subr.mxu0 0.0
    %3376 = vmatpush1.msra.mxu0 0.0
    %3377 = vmatprep.subr.mxu0 0.0
    %3378 = vmatpush1.msra.mxu0 0.0
    %3379 = vmatprep.subr.mxu0 0.0
    %3380 = vmatpush1.msra.mxu0 0.0
    %3381 = vmatprep.subr.mxu0 0.0
    %3382 = vmatpush1.msra.mxu0 0.0
    %3383 = vmatprep.subr.mxu0 0.0
    %3384 = vmatpush1.msra.mxu0 0.0
    %3385 = vmatprep.subr.mxu0 0.0
    %3386 = vmatpush1.msra.mxu0 0.0
    %3387 = vmatprep.subr.mxu0 0.0
    %3388 = vmatpush1.msra.mxu0 0.0
    %3389 = vmatprep.subr.mxu0 0.0
    %3390 = vmatpush1.msra.mxu0 0.0
    %3391 = vmatprep.subr.mxu0 0.0
    %3392 = vmatpush1.msra.mxu0 0.0
    %3393 = vmatprep.subr.mxu0 0.0
    %3394 = vmatpush1.msra.mxu0 0.0
    %3395 = vmatprep.subr.mxu0 0.0
    %3396 = vmatpush1.msra.mxu0 0.0
    %3397 = vmatprep.subr.mxu0 0.0
    %3398 = vmatpush1.msra.mxu0 0.0
    %3399 = vmatprep.subr.mxu0 0.0
    %3400 = vmatpush1.msra.mxu0 0.0
    %3401 = vmatprep.subr.mxu0 0.0
    %3402 = vmatpush1.msra.mxu0 0.0
    %3403 = vmatprep.subr.mxu0 0.0
    %3404 = vmatpush1.msra.mxu0 0.0
    %3405 = vmatprep.subr.mxu0 0.0
    %3406 = vmatpush1.msra.mxu0 0.0
    %3407 = vmatprep.subr.mxu0 0.0
    %3408 = vmatpush1.msra.mxu0 0.0
    %3409 = vmatprep.subr.mxu0 0.0
    %3410 = vmatpush1.msra.mxu0 0.0
    %3411 = vmatprep.mubr.f32.mxu0 0.0
    %3412 = vmatmul.mubr.f32.gmra.mrb[0].mxu0 %v2742
    %v3413 = vpop.f32.mrb[0].mxu0
    %v3414 = vadd.f32 0.0, %v3413
    %v3415 = vpop.f32.mrb[0].mxu0
    %3416 = vmatprep.mubr.f32.mxu0 0.0
    %3417 = vmatmul.mubr.f32.gmra.mrb[0].mxu0 %v2745
    %v3418 = vpop.f32.mrb[0].mxu0
    %v3419 = vadd.f32 0.0, %v3418
    %v3420 = vpop.f32.mrb[0].mxu0
    %3421 = vdwg.mxu0
    %3422 = vmatprep.subr.mxu0 0.0
    %3423 = vmatpush1.msra.mxu0 %v2729
    %3424 = vmatprep.subr.mxu0 0.0
    %3425 = vmatpush1.msra.mxu0 %v2730
    %3426 = vmatprep.subr.mxu0 0.0
    %3427 = vmatpush1.msra.mxu0 %v2731
    %3428 = vmatprep.subr.mxu0 0.0
    %3429 = vmatpush1.msra.mxu0 %v2732
    %3430 = vmatprep.subr.mxu0 0.0
    %3431 = vmatpush1.msra.mxu0 0.0
    %3432 = vmatprep.subr.mxu0 0.0
    %3433 = vmatpush1.msra.mxu0 0.0
    %3434 = vmatprep.subr.mxu0 0.0
    %3435 = vmatpush1.msra.mxu0 0.0
    %3436 = vmatprep.subr.mxu0 0.0
    %3437 = vmatpush1.msra.mxu0 0.0
    %3438 = vmatprep.subr.mxu0 0.0
    %3439 = vmatpush1.msra.mxu0 0.0
    %3440 = vmatprep.subr.mxu0 0.0
    %3441 = vmatpush1.msra.mxu0 0.0
    %3442 = vmatprep.subr.mxu0 0.0
    %3443 = vmatpush1.msra.mxu0 0.0
    %3444 = vmatprep.subr.mxu0 0.0
    %3445 = vmatpush1.msra.mxu0 0.0
    %3446 = vmatprep.subr.mxu0 0.0
    %3447 = vmatpush1.msra.mxu0 0.0
    %3448 = vmatprep.subr.mxu0 0.0
    %3449 = vmatpush1.msra.mxu0 0.0
    %3450 = vmatprep.subr.mxu0 0.0
    %3451 = vmatpush1.msra.mxu0 0.0
    %3452 = vmatprep.subr.mxu0 0.0
    %3453 = vmatpush1.msra.mxu0 0.0
    %3454 = vmatprep.subr.mxu0 0.0
    %3455 = vmatpush1.msra.mxu0 0.0
    %3456 = vmatprep.subr.mxu0 0.0
    %3457 = vmatpush1.msra.mxu0 0.0
    %3458 = vmatprep.subr.mxu0 0.0
    %3459 = vmatpush1.msra.mxu0 0.0
    %3460 = vmatprep.subr.mxu0 0.0
    %3461 = vmatpush1.msra.mxu0 0.0
    %3462 = vmatprep.subr.mxu0 0.0
    %3463 = vmatpush1.msra.mxu0 0.0
    %3464 = vmatprep.subr.mxu0 0.0
    %3465 = vmatpush1.msra.mxu0 0.0
    %3466 = vmatprep.subr.mxu0 0.0
    %3467 = vmatpush1.msra.mxu0 0.0
    %3468 = vmatprep.subr.mxu0 0.0
    %3469 = vmatpush1.msra.mxu0 0.0
    %3470 = vmatprep.subr.mxu0 0.0
    %3471 = vmatpush1.msra.mxu0 0.0
    %3472 = vmatprep.subr.mxu0 0.0
    %3473 = vmatpush1.msra.mxu0 0.0
    %3474 = vmatprep.subr.mxu0 0.0
    %3475 = vmatpush1.msra.mxu0 0.0
    %3476 = vmatprep.subr.mxu0 0.0
    %3477 = vmatpush1.msra.mxu0 0.0
    %3478 = vmatprep.subr.mxu0 0.0
    %3479 = vmatpush1.msra.mxu0 0.0
    %3480 = vmatprep.subr.mxu0 0.0
    %3481 = vmatpush1.msra.mxu0 0.0
    %3482 = vmatprep.subr.mxu0 0.0
    %3483 = vmatpush1.msra.mxu0 0.0
    %3484 = vmatprep.subr.mxu0 0.0
    %3485 = vmatpush1.msra.mxu0 0.0
    %3486 = vmatprep.mubr.f32.mxu0 0.0
    %3487 = vmatmul.mubr.f32.gmra.mrb[0].mxu0 %v2742
    %v3488 = vpop.f32.mrb[0].mxu0
    %v3489 = vadd.f32 0.0, %v3488
    %v3490 = vpop.f32.mrb[0].mxu0
    %3491 = vmatprep.mubr.f32.mxu0 0.0
    %3492 = vmatmul.mubr.f32.gmra.mrb[0].mxu0 %v2745
    %v3493 = vpop.f32.mrb[0].mxu0
    %v3494 = vadd.f32 0.0, %v3493
    %v3495 = vpop.f32.mrb[0].mxu0
    %3496 = vdwg.mxu0
    %3497 = vmatprep.subr.mxu0 0.0
    %3498 = vmatpush1.msra.mxu0 %v2733
    %3499 = vmatprep.subr.mxu0 0.0
    %3500 = vmatpush1.msra.mxu0 %v2734
    %3501 = vmatprep.subr.mxu0 0.0
    %3502 = vmatpush1.msra.mxu0 %v2735
    %3503 = vmatprep.subr.mxu0 0.0
    %3504 = vmatpush1.msra.mxu0 %v2736
    %3505 = vmatprep.subr.mxu0 0.0
    %3506 = vmatpush1.msra.mxu0 0.0
    %3507 = vmatprep.subr.mxu0 0.0
    %3508 = vmatpush1.msra.mxu0 0.0
    %3509 = vmatprep.subr.mxu0 0.0
    %3510 = vmatpush1.msra.mxu0 0.0
    %3511 = vmatprep.subr.mxu0 0.0
    %3512 = vmatpush1.msra.mxu0 0.0
    %3513 = vmatprep.subr.mxu0 0.0
    %3514 = vmatpush1.msra.mxu0 0.0
    %3515 = vmatprep.subr.mxu0 0.0
    %3516 = vmatpush1.msra.mxu0 0.0
    %3517 = vmatprep.subr.mxu0 0.0
    %3518 = vmatpush1.msra.mxu0 0.0
    %3519 = vmatprep.subr.mxu0 0.0
    %3520 = vmatpush1.msra.mxu0 0.0
    %3521 = vmatprep.subr.mxu0 0.0
    %3522 = vmatpush1.msra.mxu0 0.0
    %3523 = vmatprep.subr.mxu0 0.0
    %3524 = vmatpush1.msra.mxu0 0.0
    %3525 = vmatprep.subr.mxu0 0.0
    %3526 = vmatpush1.msra.mxu0 0.0
    %3527 = vmatprep.subr.mxu0 0.0
    %3528 = vmatpush1.msra.mxu0 0.0
    %3529 = vmatprep.subr.mxu0 0.0
    %3530 = vmatpush1.msra.mxu0 0.0
    %3531 = vmatprep.subr.mxu0 0.0
    %3532 = vmatpush1.msra.mxu0 0.0
    %3533 = vmatprep.subr.mxu0 0.0
    %3534 = vmatpush1.msra.mxu0 0.0
    %3535 = vmatprep.subr.mxu0 0.0
    %3536 = vmatpush1.msra.mxu0 0.0
    %3537 = vmatprep.subr.mxu0 0.0
    %3538 = vmatpush1.msra.mxu0 0.0
    %3539 = vmatprep.subr.mxu0 0.0
    %3540 = vmatpush1.msra.mxu0 0.0
    %3541 = vmatprep.subr.mxu0 0.0
    %3542 = vmatpush1.msra.mxu0 0.0
    %3543 = vmatprep.subr.mxu0 0.0
    %3544 = vmatpush1.msra.mxu0 0.0
    %3545 = vmatprep.subr.mxu0 0.0
    %3546 = vmatpush1.msra.mxu0 0.0
    %3547 = vmatprep.subr.mxu0 0.0
    %3548 = vmatpush1.msra.mxu0 0.0
    %3549 = vmatprep.subr.mxu0 0.0
    %3550 = vmatpush1.msra.mxu0 0.0
    %3551 = vmatprep.subr.mxu0 0.0
    %3552 = vmatpush1.msra.mxu0 0.0
    %3553 = vmatprep.subr.mxu0 0.0
    %3554 = vmatpush1.msra.mxu0 0.0
    %3555 = vmatprep.subr.mxu0 0.0
    %3556 = vmatpush1.msra.mxu0 0.0
    %3557 = vmatprep.subr.mxu0 0.0
    %3558 = vmatpush1.msra.mxu0 0.0
    %3559 = vmatprep.subr.mxu0 0.0
    %3560 = vmatpush1.msra.mxu0 0.0
    %3561 = vmatprep.mubr.f32.mxu0 0.0
    %3562 = vmatmul.mubr.f32.gmra.mrb[0].mxu0 %v2742
    %v3563 = vpop.f32.mrb[0].mxu0
    %v3564 = vadd.f32 0.0, %v3563
    %v3565 = vpop.f32.mrb[0].mxu0
    %3566 = vmatprep.mubr.f32.mxu0 0.0
    %3567 = vmatmul.mubr.f32.gmra.mrb[0].mxu0 %v2745
    %v3568 = vpop.f32.mrb[0].mxu0
    %v3569 = vadd.f32 0.0, %v3568
    %v3570 = vpop.f32.mrb[0].mxu0
    %3571 = vdwg.mxu0
    %3572 = vmatprep.subr.mxu0 0.0
    %3573 = vmatpush1.msra.mxu0 %v2737
    %3574 = vmatprep.subr.mxu0 0.0
    %3575 = vmatpush1.msra.mxu0 %v2738
    %3576 = vmatprep.subr.mxu0 0.0
    %3577 = vmatpush1.msra.mxu0 %v2739
    %3578 = vmatprep.subr.mxu0 0.0
    %3579 = vmatpush1.msra.mxu0 %v2740
    %3580 = vmatprep.subr.mxu0 0.0
    %3581 = vmatpush1.msra.mxu0 0.0
    %3582 = vmatprep.subr.mxu0 0.0
    %3583 = vmatpush1.msra.mxu0 0.0
    %3584 = vmatprep.subr.mxu0 0.0
    %3585 = vmatpush1.msra.mxu0 0.0
    %3586 = vmatprep.subr.mxu0 0.0
    %3587 = vmatpush1.msra.mxu0 0.0
    %3588 = vmatprep.subr.mxu0 0.0
    %3589 = vmatpush1.msra.mxu0 0.0
    %3590 = vmatprep.subr.mxu0 0.0
    %3591 = vmatpush1.msra.mxu0 0.0
    %3592 = vmatprep.subr.mxu0 0.0
    %3593 = vmatpush1.msra.mxu0 0.0
    %3594 = vmatprep.subr.mxu0 0.0
    %3595 = vmatpush1.msra.mxu0 0.0
    %3596 = vmatprep.subr.mxu0 0.0
    %3597 = vmatpush1.msra.mxu0 0.0
    %3598 = vmatprep.subr.mxu0 0.0
    %3599 = vmatpush1.msra.mxu0 0.0
    %3600 = vmatprep.subr.mxu0 0.0
    %3601 = vmatpush1.msra.mxu0 0.0
    %3602 = vmatprep.subr.mxu0 0.0
    %3603 = vmatpush1.msra.mxu0 0.0
    %3604 = vmatprep.subr.mxu0 0.0
    %3605 = vmatpush1.msra.mxu0 0.0
    %3606 = vmatprep.subr.mxu0 0.0
    %3607 = vmatpush1.msra.mxu0 0.0
    %3608 = vmatprep.subr.mxu0 0.0
    %3609 = vmatpush1.msra.mxu0 0.0
    %3610 = vmatprep.subr.mxu0 0.0
    %3611 = vmatpush1.msra.mxu0 0.0
    %3612 = vmatprep.subr.mxu0 0.0
    %3613 = vmatpush1.msra.mxu0 0.0
    %3614 = vmatprep.subr.mxu0 0.0
    %3615 = vmatpush1.msra.mxu0 0.0
    %3616 = vmatprep.subr.mxu0 0.0
    %3617 = vmatpush1.msra.mxu0 0.0
    %3618 = vmatprep.subr.mxu0 0.0
    %3619 = vmatpush1.msra.mxu0 0.0
    %3620 = vmatprep.subr.mxu0 0.0
    %3621 = vmatpush1.msra.mxu0 0.0
    %3622 = vmatprep.subr.mxu0 0.0
    %3623 = vmatpush1.msra.mxu0 0.0
    %3624 = vmatprep.subr.mxu0 0.0
    %3625 = vmatpush1.msra.mxu0 0.0
    %3626 = vmatprep.subr.mxu0 0.0
    %3627 = vmatpush1.msra.mxu0 0.0
    %3628 = vmatprep.subr.mxu0 0.0
    %3629 = vmatpush1.msra.mxu0 0.0
    %3630 = vmatprep.subr.mxu0 0.0
    %3631 = vmatpush1.msra.mxu0 0.0
    %3632 = vmatprep.subr.mxu0 0.0
    %3633 = vmatpush1.msra.mxu0 0.0
    %3634 = vmatprep.subr.mxu0 0.0
    %3635 = vmatpush1.msra.mxu0 0.0
    %3636 = vmatprep.mubr.f32.mxu0 0.0
    %3637 = vmatmul.mubr.f32.gmra.mrb[0].mxu0 %v2742
    %v3638 = vpop.f32.mrb[0].mxu0
    %v3639 = vadd.f32 0.0, %v3638
    %v3640 = vpop.f32.mrb[0].mxu0
    %3641 = vmatprep.mubr.f32.mxu0 0.0
    %3642 = vmatmul.mubr.f32.gmra.mrb[0].mxu0 %v2745
    %v3643 = vpop.f32.mrb[0].mxu0
    %v3644 = vadd.f32 0.0, %v3643
    %v3645 = vpop.f32.mrb[0].mxu0
    %3646 = vdwg.mxu0
    %v3648 = vsel %vm1069, %v2814, 0
    %v3651 = vsel %vm1069, %v3114, 0
    %3653 = vmatprep.subr.mxu0 0.0
    %3654 = vmatpush1.xpose.msra.mxu0 %v3651
    %3655 = vmatprep.subr.mxu0 0.0
    %3656 = vmatpush1.xpose.msra.mxu0 0.0
    %3657 = vmatprep.subr.mxu0 0.0
    %3658 = vmatpush1.xpose.msra.mxu0 0.0
    %3659 = vmatprep.subr.mxu0 0.0
    %3660 = vmatpush1.xpose.msra.mxu0 0.0
    %3661 = vmatprep.subr.mxu0 0.0
    %3662 = vmatpush1.xpose.msra.mxu0 0.0
    %3663 = vmatprep.subr.mxu0 0.0
    %3664 = vmatpush1.xpose.msra.mxu0 0.0
    %3665 = vmatprep.subr.mxu0 0.0
    %3666 = vmatpush1.xpose.msra.mxu0 0.0
    %3667 = vmatprep.subr.mxu0 0.0
    %3668 = vmatpush1.xpose.msra.mxu0 0.0
    %3669 = vmatprep.subr.mxu0 0.0
    %3670 = vmatpush1.xpose.msra.mxu0 0.0
    %3671 = vmatprep.subr.mxu0 0.0
    %3672 = vmatpush1.xpose.msra.mxu0 0.0
    %3673 = vmatprep.subr.mxu0 0.0
    %3674 = vmatpush1.xpose.msra.mxu0 0.0
    %3675 = vmatprep.subr.mxu0 0.0
    %3676 = vmatpush1.xpose.msra.mxu0 0.0
    %3677 = vmatprep.subr.mxu0 0.0
    %3678 = vmatpush1.xpose.msra.mxu0 0.0
    %3679 = vmatprep.subr.mxu0 0.0
    %3680 = vmatpush1.xpose.msra.mxu0 0.0
    %3681 = vmatprep.subr.mxu0 0.0
    %3682 = vmatpush1.xpose.msra.mxu0 0.0
    %3683 = vmatprep.subr.mxu0 0.0
    %3684 = vmatpush1.xpose.msra.mxu0 0.0
    %3685 = vmatprep.subr.mxu0 0.0
    %3686 = vmatpush1.xpose.msra.mxu0 0.0
    %3687 = vmatprep.subr.mxu0 0.0
    %3688 = vmatpush1.xpose.msra.mxu0 0.0
    %3689 = vmatprep.subr.mxu0 0.0
    %3690 = vmatpush1.xpose.msra.mxu0 0.0
    %3691 = vmatprep.subr.mxu0 0.0
    %3692 = vmatpush1.xpose.msra.mxu0 0.0
    %3693 = vmatprep.subr.mxu0 0.0
    %3694 = vmatpush1.xpose.msra.mxu0 0.0
    %3695 = vmatprep.subr.mxu0 0.0
    %3696 = vmatpush1.xpose.msra.mxu0 0.0
    %3697 = vmatprep.subr.mxu0 0.0
    %3698 = vmatpush1.xpose.msra.mxu0 0.0
    %3699 = vmatprep.subr.mxu0 0.0
    %3700 = vmatpush1.xpose.msra.mxu0 0.0
    %3701 = vmatprep.subr.mxu0 0.0
    %3702 = vmatpush1.xpose.msra.mxu0 0.0
    %3703 = vmatprep.subr.mxu0 0.0
    %3704 = vmatpush1.xpose.msra.mxu0 0.0
    %3705 = vmatprep.subr.mxu0 0.0
    %3706 = vmatpush1.xpose.msra.mxu0 0.0
    %3707 = vmatprep.subr.mxu0 0.0
    %3708 = vmatpush1.xpose.msra.mxu0 0.0
    %3709 = vmatprep.subr.mxu0 0.0
    %3710 = vmatpush1.xpose.msra.mxu0 0.0
    %3711 = vmatprep.subr.mxu0 0.0
    %3712 = vmatpush1.xpose.msra.mxu0 0.0
    %3713 = vmatprep.subr.mxu0 0.0
    %3714 = vmatpush1.xpose.msra.mxu0 0.0
    %3715 = vmatprep.subr.mxu0 0.0
    %3716 = vmatpush1.xpose.msra.mxu0 0.0
    %3717 = vmatprep.mubr.f32.mxu0 0.0
    %3718 = vmatmul.mubr.f32.gmra.mrb[0].mxu0 %v3648
    %v3719 = vpop.f32.mrb[0].mxu0
    %v3720 = vadd.f32 0.0, %v3719
    %v3721 = vpop.f32.mrb[0].mxu0
    %3722 = vdwg.mxu0
    %v3724 = vsel %vm1069, %v2819, 0
    %v3727 = vsel %vm1069, %v3119, 0
    %3729 = vmatprep.subr.mxu0 0.0
    %3730 = vmatpush1.xpose.msra.mxu0 %v3727
    %3731 = vmatprep.subr.mxu0 0.0
    %3732 = vmatpush1.xpose.msra.mxu0 0.0
    %3733 = vmatprep.subr.mxu0 0.0
    %3734 = vmatpush1.xpose.msra.mxu0 0.0
    %3735 = vmatprep.subr.mxu0 0.0
    %3736 = vmatpush1.xpose.msra.mxu0 0.0
    %3737 = vmatprep.subr.mxu0 0.0
    %3738 = vmatpush1.xpose.msra.mxu0 0.0
    %3739 = vmatprep.subr.mxu0 0.0
    %3740 = vmatpush1.xpose.msra.mxu0 0.0
    %3741 = vmatprep.subr.mxu0 0.0
    %3742 = vmatpush1.xpose.msra.mxu0 0.0
    %3743 = vmatprep.subr.mxu0 0.0
    %3744 = vmatpush1.xpose.msra.mxu0 0.0
    %3745 = vmatprep.subr.mxu0 0.0
    %3746 = vmatpush1.xpose.msra.mxu0 0.0
    %3747 = vmatprep.subr.mxu0 0.0
    %3748 = vmatpush1.xpose.msra.mxu0 0.0
    %3749 = vmatprep.subr.mxu0 0.0
    %3750 = vmatpush1.xpose.msra.mxu0 0.0
    %3751 = vmatprep.subr.mxu0 0.0
    %3752 = vmatpush1.xpose.msra.mxu0 0.0
    %3753 = vmatprep.subr.mxu0 0.0
    %3754 = vmatpush1.xpose.msra.mxu0 0.0
    %3755 = vmatprep.subr.mxu0 0.0
    %3756 = vmatpush1.xpose.msra.mxu0 0.0
    %3757 = vmatprep.subr.mxu0 0.0
    %3758 = vmatpush1.xpose.msra.mxu0 0.0
    %3759 = vmatprep.subr.mxu0 0.0
    %3760 = vmatpush1.xpose.msra.mxu0 0.0
    %3761 = vmatprep.subr.mxu0 0.0
    %3762 = vmatpush1.xpose.msra.mxu0 0.0
    %3763 = vmatprep.subr.mxu0 0.0
    %3764 = vmatpush1.xpose.msra.mxu0 0.0
    %3765 = vmatprep.subr.mxu0 0.0
    %3766 = vmatpush1.xpose.msra.mxu0 0.0
    %3767 = vmatprep.subr.mxu0 0.0
    %3768 = vmatpush1.xpose.msra.mxu0 0.0
    %3769 = vmatprep.subr.mxu0 0.0
    %3770 = vmatpush1.xpose.msra.mxu0 0.0
    %3771 = vmatprep.subr.mxu0 0.0
    %3772 = vmatpush1.xpose.msra.mxu0 0.0
    %3773 = vmatprep.subr.mxu0 0.0
    %3774 = vmatpush1.xpose.msra.mxu0 0.0
    %3775 = vmatprep.subr.mxu0 0.0
    %3776 = vmatpush1.xpose.msra.mxu0 0.0
    %3777 = vmatprep.subr.mxu0 0.0
    %3778 = vmatpush1.xpose.msra.mxu0 0.0
    %3779 = vmatprep.subr.mxu0 0.0
    %3780 = vmatpush1.xpose.msra.mxu0 0.0
    %3781 = vmatprep.subr.mxu0 0.0
    %3782 = vmatpush1.xpose.msra.mxu0 0.0
    %3783 = vmatprep.subr.mxu0 0.0
    %3784 = vmatpush1.xpose.msra.mxu0 0.0
    %3785 = vmatprep.subr.mxu0 0.0
    %3786 = vmatpush1.xpose.msra.mxu0 0.0
    %3787 = vmatprep.subr.mxu0 0.0
    %3788 = vmatpush1.xpose.msra.mxu0 0.0
    %3789 = vmatprep.subr.mxu0 0.0
    %3790 = vmatpush1.xpose.msra.mxu0 0.0
    %3791 = vmatprep.subr.mxu0 0.0
    %3792 = vmatpush1.xpose.msra.mxu0 0.0
    %3793 = vmatprep.mubr.f32.mxu0 0.0
    %3794 = vmatmul.mubr.f32.gmra.mrb[0].mxu0 %v3724
    %v3795 = vpop.f32.mrb[0].mxu0
    %v3796 = vadd.f32 0.0, %v3795
    %v3797 = vpop.f32.mrb[0].mxu0
    %3798 = vdwg.mxu0
    %v3800 = vsel %vm1069, %v2889, 0
    %v3803 = vsel %vm1069, %v3189, 0
    %3805 = vmatprep.subr.mxu0 0.0
    %3806 = vmatpush1.xpose.msra.mxu0 %v3803
    %3807 = vmatprep.subr.mxu0 0.0
    %3808 = vmatpush1.xpose.msra.mxu0 0.0
    %3809 = vmatprep.subr.mxu0 0.0
    %3810 = vmatpush1.xpose.msra.mxu0 0.0
    %3811 = vmatprep.subr.mxu0 0.0
    %3812 = vmatpush1.xpose.msra.mxu0 0.0
    %3813 = vmatprep.subr.mxu0 0.0
    %3814 = vmatpush1.xpose.msra.mxu0 0.0
    %3815 = vmatprep.subr.mxu0 0.0
    %3816 = vmatpush1.xpose.msra.mxu0 0.0
    %3817 = vmatprep.subr.mxu0 0.0
    %3818 = vmatpush1.xpose.msra.mxu0 0.0
    %3819 = vmatprep.subr.mxu0 0.0
    %3820 = vmatpush1.xpose.msra.mxu0 0.0
    %3821 = vmatprep.subr.mxu0 0.0
    %3822 = vmatpush1.xpose.msra.mxu0 0.0
    %3823 = vmatprep.subr.mxu0 0.0
    %3824 = vmatpush1.xpose.msra.mxu0 0.0
    %3825 = vmatprep.subr.mxu0 0.0
    %3826 = vmatpush1.xpose.msra.mxu0 0.0
    %3827 = vmatprep.subr.mxu0 0.0
    %3828 = vmatpush1.xpose.msra.mxu0 0.0
    %3829 = vmatprep.subr.mxu0 0.0
    %3830 = vmatpush1.xpose.msra.mxu0 0.0
    %3831 = vmatprep.subr.mxu0 0.0
    %3832 = vmatpush1.xpose.msra.mxu0 0.0
    %3833 = vmatprep.subr.mxu0 0.0
    %3834 = vmatpush1.xpose.msra.mxu0 0.0
    %3835 = vmatprep.subr.mxu0 0.0
    %3836 = vmatpush1.xpose.msra.mxu0 0.0
    %3837 = vmatprep.subr.mxu0 0.0
    %3838 = vmatpush1.xpose.msra.mxu0 0.0
    %3839 = vmatprep.subr.mxu0 0.0
    %3840 = vmatpush1.xpose.msra.mxu0 0.0
    %3841 = vmatprep.subr.mxu0 0.0
    %3842 = vmatpush1.xpose.msra.mxu0 0.0
    %3843 = vmatprep.subr.mxu0 0.0
    %3844 = vmatpush1.xpose.msra.mxu0 0.0
    %3845 = vmatprep.subr.mxu0 0.0
    %3846 = vmatpush1.xpose.msra.mxu0 0.0
    %3847 = vmatprep.subr.mxu0 0.0
    %3848 = vmatpush1.xpose.msra.mxu0 0.0
    %3849 = vmatprep.subr.mxu0 0.0
    %3850 = vmatpush1.xpose.msra.mxu0 0.0
    %3851 = vmatprep.subr.mxu0 0.0
    %3852 = vmatpush1.xpose.msra.mxu0 0.0
    %3853 = vmatprep.subr.mxu0 0.0
    %3854 = vmatpush1.xpose.msra.mxu0 0.0
    %3855 = vmatprep.subr.mxu0 0.0
    %3856 = vmatpush1.xpose.msra.mxu0 0.0
    %3857 = vmatprep.subr.mxu0 0.0
    %3858 = vmatpush1.xpose.msra.mxu0 0.0
    %3859 = vmatprep.subr.mxu0 0.0
    %3860 = vmatpush1.xpose.msra.mxu0 0.0
    %3861 = vmatprep.subr.mxu0 0.0
    %3862 = vmatpush1.xpose.msra.mxu0 0.0
    %3863 = vmatprep.subr.mxu0 0.0
    %3864 = vmatpush1.xpose.msra.mxu0 0.0
    %3865 = vmatprep.subr.mxu0 0.0
    %3866 = vmatpush1.xpose.msra.mxu0 0.0
    %3867 = vmatprep.subr.mxu0 0.0
    %3868 = vmatpush1.xpose.msra.mxu0 0.0
    %3869 = vmatprep.mubr.f32.mxu0 0.0
    %3870 = vmatmul.mubr.f32.gmra.mrb[0].mxu0 %v3800
    %v3871 = vpop.f32.mrb[0].mxu0
    %v3872 = vadd.f32 0.0, %v3871
    %v3873 = vpop.f32.mrb[0].mxu0
    %3874 = vdwg.mxu0
    %v3876 = vsel %vm1069, %v2894, 0
    %v3879 = vsel %vm1069, %v3194, 0
    %3881 = vmatprep.subr.mxu0 0.0
    %3882 = vmatpush1.xpose.msra.mxu0 %v3879
    %3883 = vmatprep.subr.mxu0 0.0
    %3884 = vmatpush1.xpose.msra.mxu0 0.0
    %3885 = vmatprep.subr.mxu0 0.0
    %3886 = vmatpush1.xpose.msra.mxu0 0.0
    %3887 = vmatprep.subr.mxu0 0.0
    %3888 = vmatpush1.xpose.msra.mxu0 0.0
    %3889 = vmatprep.subr.mxu0 0.0
    %3890 = vmatpush1.xpose.msra.mxu0 0.0
    %3891 = vmatprep.subr.mxu0 0.0
    %3892 = vmatpush1.xpose.msra.mxu0 0.0
    %3893 = vmatprep.subr.mxu0 0.0
    %3894 = vmatpush1.xpose.msra.mxu0 0.0
    %3895 = vmatprep.subr.mxu0 0.0
    %3896 = vmatpush1.xpose.msra.mxu0 0.0
    %3897 = vmatprep.subr.mxu0 0.0
    %3898 = vmatpush1.xpose.msra.mxu0 0.0
    %3899 = vmatprep.subr.mxu0 0.0
    %3900 = vmatpush1.xpose.msra.mxu0 0.0
    %3901 = vmatprep.subr.mxu0 0.0
    %3902 = vmatpush1.xpose.msra.mxu0 0.0
    %3903 = vmatprep.subr.mxu0 0.0
    %3904 = vmatpush1.xpose.msra.mxu0 0.0
    %3905 = vmatprep.subr.mxu0 0.0
    %3906 = vmatpush1.xpose.msra.mxu0 0.0
    %3907 = vmatprep.subr.mxu0 0.0
    %3908 = vmatpush1.xpose.msra.mxu0 0.0
    %3909 = vmatprep.subr.mxu0 0.0
    %3910 = vmatpush1.xpose.msra.mxu0 0.0
    %3911 = vmatprep.subr.mxu0 0.0
    %3912 = vmatpush1.xpose.msra.mxu0 0.0
    %3913 = vmatprep.subr.mxu0 0.0
    %3914 = vmatpush1.xpose.msra.mxu0 0.0
    %3915 = vmatprep.subr.mxu0 0.0
    %3916 = vmatpush1.xpose.msra.mxu0 0.0
    %3917 = vmatprep.subr.mxu0 0.0
    %3918 = vmatpush1.xpose.msra.mxu0 0.0
    %3919 = vmatprep.subr.mxu0 0.0
    %3920 = vmatpush1.xpose.msra.mxu0 0.0
    %3921 = vmatprep.subr.mxu0 0.0
    %3922 = vmatpush1.xpose.msra.mxu0 0.0
    %3923 = vmatprep.subr.mxu0 0.0
    %3924 = vmatpush1.xpose.msra.mxu0 0.0
    %3925 = vmatprep.subr.mxu0 0.0
    %3926 = vmatpush1.xpose.msra.mxu0 0.0
    %3927 = vmatprep.subr.mxu0 0.0
    %3928 = vmatpush1.xpose.msra.mxu0 0.0
    %3929 = vmatprep.subr.mxu0 0.0
    %3930 = vmatpush1.xpose.msra.mxu0 0.0
    %3931 = vmatprep.subr.mxu0 0.0
    %3932 = vmatpush1.xpose.msra.mxu0 0.0
    %3933 = vmatprep.subr.mxu0 0.0
    %3934 = vmatpush1.xpose.msra.mxu0 0.0
    %3935 = vmatprep.subr.mxu0 0.0
    %3936 = vmatpush1.xpose.msra.mxu0 0.0
    %3937 = vmatprep.subr.mxu0 0.0
    %3938 = vmatpush1.xpose.msra.mxu0 0.0
    %3939 = vmatprep.subr.mxu0 0.0
    %3940 = vmatpush1.xpose.msra.mxu0 0.0
    %3941 = vmatprep.subr.mxu0 0.0
    %3942 = vmatpush1.xpose.msra.mxu0 0.0
    %3943 = vmatprep.subr.mxu0 0.0
    %3944 = vmatpush1.xpose.msra.mxu0 0.0
    %3945 = vmatprep.mubr.f32.mxu0 0.0
    %3946 = vmatmul.mubr.f32.gmra.mrb[0].mxu0 %v3876
    %v3947 = vpop.f32.mrb[0].mxu0
    %v3948 = vadd.f32 0.0, %v3947
    %v3949 = vpop.f32.mrb[0].mxu0
    %3950 = vdwg.mxu0
    %v3952 = vsel %vm1069, %v2964, 0
    %v3955 = vsel %vm1069, %v3264, 0
    %3957 = vmatprep.subr.mxu0 0.0
    %3958 = vmatpush1.xpose.msra.mxu0 %v3955
    %3959 = vmatprep.subr.mxu0 0.0
    %3960 = vmatpush1.xpose.msra.mxu0 0.0
    %3961 = vmatprep.subr.mxu0 0.0
    %3962 = vmatpush1.xpose.msra.mxu0 0.0
    %3963 = vmatprep.subr.mxu0 0.0
    %3964 = vmatpush1.xpose.msra.mxu0 0.0
    %3965 = vmatprep.subr.mxu0 0.0
    %3966 = vmatpush1.xpose.msra.mxu0 0.0
    %3967 = vmatprep.subr.mxu0 0.0
    %3968 = vmatpush1.xpose.msra.mxu0 0.0
    %3969 = vmatprep.subr.mxu0 0.0
    %3970 = vmatpush1.xpose.msra.mxu0 0.0
    %3971 = vmatprep.subr.mxu0 0.0
    %3972 = vmatpush1.xpose.msra.mxu0 0.0
    %3973 = vmatprep.subr.mxu0 0.0
    %3974 = vmatpush1.xpose.msra.mxu0 0.0
    %3975 = vmatprep.subr.mxu0 0.0
    %3976 = vmatpush1.xpose.msra.mxu0 0.0
    %3977 = vmatprep.subr.mxu0 0.0
    %3978 = vmatpush1.xpose.msra.mxu0 0.0
    %3979 = vmatprep.subr.mxu0 0.0
    %3980 = vmatpush1.xpose.msra.mxu0 0.0
    %3981 = vmatprep.subr.mxu0 0.0
    %3982 = vmatpush1.xpose.msra.mxu0 0.0
    %3983 = vmatprep.subr.mxu0 0.0
    %3984 = vmatpush1.xpose.msra.mxu0 0.0
    %3985 = vmatprep.subr.mxu0 0.0
    %3986 = vmatpush1.xpose.msra.mxu0 0.0
    %3987 = vmatprep.subr.mxu0 0.0
    %3988 = vmatpush1.xpose.msra.mxu0 0.0
    %3989 = vmatprep.subr.mxu0 0.0
    %3990 = vmatpush1.xpose.msra.mxu0 0.0
    %3991 = vmatprep.subr.mxu0 0.0
    %3992 = vmatpush1.xpose.msra.mxu0 0.0
    %3993 = vmatprep.subr.mxu0 0.0
    %3994 = vmatpush1.xpose.msra.mxu0 0.0
    %3995 = vmatprep.subr.mxu0 0.0
    %3996 = vmatpush1.xpose.msra.mxu0 0.0
    %3997 = vmatprep.subr.mxu0 0.0
    %3998 = vmatpush1.xpose.msra.mxu0 0.0
    %3999 = vmatprep.subr.mxu0 0.0
    %4000 = vmatpush1.xpose.msra.mxu0 0.0
    %4001 = vmatprep.subr.mxu0 0.0
    %4002 = vmatpush1.xpose.msra.mxu0 0.0
    %4003 = vmatprep.subr.mxu0 0.0
    %4004 = vmatpush1.xpose.msra.mxu0 0.0
    %4005 = vmatprep.subr.mxu0 0.0
    %4006 = vmatpush1.xpose.msra.mxu0 0.0
    %4007 = vmatprep.subr.mxu0 0.0
    %4008 = vmatpush1.xpose.msra.mxu0 0.0
    %4009 = vmatprep.subr.mxu0 0.0
    %4010 = vmatpush1.xpose.msra.mxu0 0.0
    %4011 = vmatprep.subr.mxu0 0.0
    %4012 = vmatpush1.xpose.msra.mxu0 0.0
    %4013 = vmatprep.subr.mxu0 0.0
    %4014 = vmatpush1.xpose.msra.mxu0 0.0
    %4015 = vmatprep.subr.mxu0 0.0
    %4016 = vmatpush1.xpose.msra.mxu0 0.0
    %4017 = vmatprep.subr.mxu0 0.0
    %4018 = vmatpush1.xpose.msra.mxu0 0.0
    %4019 = vmatprep.subr.mxu0 0.0
    %4020 = vmatpush1.xpose.msra.mxu0 0.0
    %4021 = vmatprep.mubr.f32.mxu0 0.0
    %4022 = vmatmul.mubr.f32.gmra.mrb[0].mxu0 %v3952
    %v4023 = vpop.f32.mrb[0].mxu0
    %v4024 = vadd.f32 0.0, %v4023
    %v4025 = vpop.f32.mrb[0].mxu0
    %4026 = vdwg.mxu0
    %v4028 = vsel %vm1069, %v2969, 0
    %v4031 = vsel %vm1069, %v3269, 0
    %4033 = vmatprep.subr.mxu0 0.0
    %4034 = vmatpush1.xpose.msra.mxu0 %v4031
    %4035 = vmatprep.subr.mxu0 0.0
    %4036 = vmatpush1.xpose.msra.mxu0 0.0
    %4037 = vmatprep.subr.mxu0 0.0
    %4038 = vmatpush1.xpose.msra.mxu0 0.0
    %4039 = vmatprep.subr.mxu0 0.0
    %4040 = vmatpush1.xpose.msra.mxu0 0.0
    %4041 = vmatprep.subr.mxu0 0.0
    %4042 = vmatpush1.xpose.msra.mxu0 0.0
    %4043 = vmatprep.subr.mxu0 0.0
    %4044 = vmatpush1.xpose.msra.mxu0 0.0
    %4045 = vmatprep.subr.mxu0 0.0
    %4046 = vmatpush1.xpose.msra.mxu0 0.0
    %4047 = vmatprep.subr.mxu0 0.0
    %4048 = vmatpush1.xpose.msra.mxu0 0.0
    %4049 = vmatprep.subr.mxu0 0.0
    %4050 = vmatpush1.xpose.msra.mxu0 0.0
    %4051 = vmatprep.subr.mxu0 0.0
    %4052 = vmatpush1.xpose.msra.mxu0 0.0
    %4053 = vmatprep.subr.mxu0 0.0
    %4054 = vmatpush1.xpose.msra.mxu0 0.0
    %4055 = vmatprep.subr.mxu0 0.0
    %4056 = vmatpush1.xpose.msra.mxu0 0.0
    %4057 = vmatprep.subr.mxu0 0.0
    %4058 = vmatpush1.xpose.msra.mxu0 0.0
    %4059 = vmatprep.subr.mxu0 0.0
    %4060 = vmatpush1.xpose.msra.mxu0 0.0
    %4061 = vmatprep.subr.mxu0 0.0
    %4062 = vmatpush1.xpose.msra.mxu0 0.0
    %4063 = vmatprep.subr.mxu0 0.0
    %4064 = vmatpush1.xpose.msra.mxu0 0.0
    %4065 = vmatprep.subr.mxu0 0.0
    %4066 = vmatpush1.xpose.msra.mxu0 0.0
    %4067 = vmatprep.subr.mxu0 0.0
    %4068 = vmatpush1.xpose.msra.mxu0 0.0
    %4069 = vmatprep.subr.mxu0 0.0
    %4070 = vmatpush1.xpose.msra.mxu0 0.0
    %4071 = vmatprep.subr.mxu0 0.0
    %4072 = vmatpush1.xpose.msra.mxu0 0.0
    %4073 = vmatprep.subr.mxu0 0.0
    %4074 = vmatpush1.xpose.msra.mxu0 0.0
    %4075 = vmatprep.subr.mxu0 0.0
    %4076 = vmatpush1.xpose.msra.mxu0 0.0
    %4077 = vmatprep.subr.mxu0 0.0
    %4078 = vmatpush1.xpose.msra.mxu0 0.0
    %4079 = vmatprep.subr.mxu0 0.0
    %4080 = vmatpush1.xpose.msra.mxu0 0.0
    %4081 = vmatprep.subr.mxu0 0.0
    %4082 = vmatpush1.xpose.msra.mxu0 0.0
    %4083 = vmatprep.subr.mxu0 0.0
    %4084 = vmatpush1.xpose.msra.mxu0 0.0
    %4085 = vmatprep.subr.mxu0 0.0
    %4086 = vmatpush1.xpose.msra.mxu0 0.0
    %4087 = vmatprep.subr.mxu0 0.0
    %4088 = vmatpush1.xpose.msra.mxu0 0.0
    %4089 = vmatprep.subr.mxu0 0.0
    %4090 = vmatpush1.xpose.msra.mxu0 0.0
    %4091 = vmatprep.subr.mxu0 0.0
    %4092 = vmatpush1.xpose.msra.mxu0 0.0
    %4093 = vmatprep.subr.mxu0 0.0
    %4094 = vmatpush1.xpose.msra.mxu0 0.0
    %4095 = vmatprep.subr.mxu0 0.0
    %4096 = vmatpush1.xpose.msra.mxu0 0.0
    %4097 = vmatprep.mubr.f32.mxu0 0.0
    %4098 = vmatmul.mubr.f32.gmra.mrb[0].mxu0 %v4028
    %v4099 = vpop.f32.mrb[0].mxu0
    %v4100 = vadd.f32 0.0, %v4099
    %v4101 = vpop.f32.mrb[0].mxu0
    %4102 = vdwg.mxu0
    %v4104 = vsel %vm1069, %v3039, 0
    %v4107 = vsel %vm1069, %v3339, 0
    %4109 = vmatprep.subr.mxu0 0.0
    %4110 = vmatpush1.xpose.msra.mxu0 %v4107
    %4111 = vmatprep.subr.mxu0 0.0
    %4112 = vmatpush1.xpose.msra.mxu0 0.0
    %4113 = vmatprep.subr.mxu0 0.0
    %4114 = vmatpush1.xpose.msra.mxu0 0.0
    %4115 = vmatprep.subr.mxu0 0.0
    %4116 = vmatpush1.xpose.msra.mxu0 0.0
    %4117 = vmatprep.subr.mxu0 0.0
    %4118 = vmatpush1.xpose.msra.mxu0 0.0
    %4119 = vmatprep.subr.mxu0 0.0
    %4120 = vmatpush1.xpose.msra.mxu0 0.0
    %4121 = vmatprep.subr.mxu0 0.0
    %4122 = vmatpush1.xpose.msra.mxu0 0.0
    %4123 = vmatprep.subr.mxu0 0.0
    %4124 = vmatpush1.xpose.msra.mxu0 0.0
    %4125 = vmatprep.subr.mxu0 0.0
    %4126 = vmatpush1.xpose.msra.mxu0 0.0
    %4127 = vmatprep.subr.mxu0 0.0
    %4128 = vmatpush1.xpose.msra.mxu0 0.0
    %4129 = vmatprep.subr.mxu0 0.0
    %4130 = vmatpush1.xpose.msra.mxu0 0.0
    %4131 = vmatprep.subr.mxu0 0.0
    %4132 = vmatpush1.xpose.msra.mxu0 0.0
    %4133 = vmatprep.subr.mxu0 0.0
    %4134 = vmatpush1.xpose.msra.mxu0 0.0
    %4135 = vmatprep.subr.mxu0 0.0
    %4136 = vmatpush1.xpose.msra.mxu0 0.0
    %4137 = vmatprep.subr.mxu0 0.0
    %4138 = vmatpush1.xpose.msra.mxu0 0.0
    %4139 = vmatprep.subr.mxu0 0.0
    %4140 = vmatpush1.xpose.msra.mxu0 0.0
    %4141 = vmatprep.subr.mxu0 0.0
    %4142 = vmatpush1.xpose.msra.mxu0 0.0
    %4143 = vmatprep.subr.mxu0 0.0
    %4144 = vmatpush1.xpose.msra.mxu0 0.0
    %4145 = vmatprep.subr.mxu0 0.0
    %4146 = vmatpush1.xpose.msra.mxu0 0.0
    %4147 = vmatprep.subr.mxu0 0.0
    %4148 = vmatpush1.xpose.msra.mxu0 0.0
    %4149 = vmatprep.subr.mxu0 0.0
    %4150 = vmatpush1.xpose.msra.mxu0 0.0
    %4151 = vmatprep.subr.mxu0 0.0
    %4152 = vmatpush1.xpose.msra.mxu0 0.0
    %4153 = vmatprep.subr.mxu0 0.0
    %4154 = vmatpush1.xpose.msra.mxu0 0.0
    %4155 = vmatprep.subr.mxu0 0.0
    %4156 = vmatpush1.xpose.msra.mxu0 0.0
    %4157 = vmatprep.subr.mxu0 0.0
    %4158 = vmatpush1.xpose.msra.mxu0 0.0
    %4159 = vmatprep.subr.mxu0 0.0
    %4160 = vmatpush1.xpose.msra.mxu0 0.0
    %4161 = vmatprep.subr.mxu0 0.0
    %4162 = vmatpush1.xpose.msra.mxu0 0.0
    %4163 = vmatprep.subr.mxu0 0.0
    %4164 = vmatpush1.xpose.msra.mxu0 0.0
    %4165 = vmatprep.subr.mxu0 0.0
    %4166 = vmatpush1.xpose.msra.mxu0 0.0
    %4167 = vmatprep.subr.mxu0 0.0
    %4168 = vmatpush1.xpose.msra.mxu0 0.0
    %4169 = vmatprep.subr.mxu0 0.0
    %4170 = vmatpush1.xpose.msra.mxu0 0.0
    %4171 = vmatprep.subr.mxu0 0.0
    %4172 = vmatpush1.xpose.msra.mxu0 0.0
    %4173 = vmatprep.mubr.f32.mxu0 0.0
    %4174 = vmatmul.mubr.f32.gmra.mrb[0].mxu0 %v4104
    %v4175 = vpop.f32.mrb[0].mxu0
    %v4176 = vadd.f32 0.0, %v4175
    %v4177 = vpop.f32.mrb[0].mxu0
    %4178 = vdwg.mxu0
    %v4180 = vsel %vm1069, %v3044, 0
    %v4183 = vsel %vm1069, %v3344, 0
    %4185 = vmatprep.subr.mxu0 0.0
    %4186 = vmatpush1.xpose.msra.mxu0 %v4183
    %4187 = vmatprep.subr.mxu0 0.0
    %4188 = vmatpush1.xpose.msra.mxu0 0.0
    %4189 = vmatprep.subr.mxu0 0.0
    %4190 = vmatpush1.xpose.msra.mxu0 0.0
    %4191 = vmatprep.subr.mxu0 0.0
    %4192 = vmatpush1.xpose.msra.mxu0 0.0
    %4193 = vmatprep.subr.mxu0 0.0
    %4194 = vmatpush1.xpose.msra.mxu0 0.0
    %4195 = vmatprep.subr.mxu0 0.0
    %4196 = vmatpush1.xpose.msra.mxu0 0.0
    %4197 = vmatprep.subr.mxu0 0.0
    %4198 = vmatpush1.xpose.msra.mxu0 0.0
    %4199 = vmatprep.subr.mxu0 0.0
    %4200 = vmatpush1.xpose.msra.mxu0 0.0
    %4201 = vmatprep.subr.mxu0 0.0
    %4202 = vmatpush1.xpose.msra.mxu0 0.0
    %4203 = vmatprep.subr.mxu0 0.0
    %4204 = vmatpush1.xpose.msra.mxu0 0.0
    %4205 = vmatprep.subr.mxu0 0.0
    %4206 = vmatpush1.xpose.msra.mxu0 0.0
    %4207 = vmatprep.subr.mxu0 0.0
    %4208 = vmatpush1.xpose.msra.mxu0 0.0
    %4209 = vmatprep.subr.mxu0 0.0
    %4210 = vmatpush1.xpose.msra.mxu0 0.0
    %4211 = vmatprep.subr.mxu0 0.0
    %4212 = vmatpush1.xpose.msra.mxu0 0.0
    %4213 = vmatprep.subr.mxu0 0.0
    %4214 = vmatpush1.xpose.msra.mxu0 0.0
    %4215 = vmatprep.subr.mxu0 0.0
    %4216 = vmatpush1.xpose.msra.mxu0 0.0
    %4217 = vmatprep.subr.mxu0 0.0
    %4218 = vmatpush1.xpose.msra.mxu0 0.0
    %4219 = vmatprep.subr.mxu0 0.0
    %4220 = vmatpush1.xpose.msra.mxu0 0.0
    %4221 = vmatprep.subr.mxu0 0.0
    %4222 = vmatpush1.xpose.msra.mxu0 0.0
    %4223 = vmatprep.subr.mxu0 0.0
    %4224 = vmatpush1.xpose.msra.mxu0 0.0
    %4225 = vmatprep.subr.mxu0 0.0
    %4226 = vmatpush1.xpose.msra.mxu0 0.0
    %4227 = vmatprep.subr.mxu0 0.0
    %4228 = vmatpush1.xpose.msra.mxu0 0.0
    %4229 = vmatprep.subr.mxu0 0.0
    %4230 = vmatpush1.xpose.msra.mxu0 0.0
    %4231 = vmatprep.subr.mxu0 0.0
    %4232 = vmatpush1.xpose.msra.mxu0 0.0
    %4233 = vmatprep.subr.mxu0 0.0
    %4234 = vmatpush1.xpose.msra.mxu0 0.0
    %4235 = vmatprep.subr.mxu0 0.0
    %4236 = vmatpush1.xpose.msra.mxu0 0.0
    %4237 = vmatprep.subr.mxu0 0.0
    %4238 = vmatpush1.xpose.msra.mxu0 0.0
    %4239 = vmatprep.subr.mxu0 0.0
    %4240 = vmatpush1.xpose.msra.mxu0 0.0
    %4241 = vmatprep.subr.mxu0 0.0
    %4242 = vmatpush1.xpose.msra.mxu0 0.0
    %4243 = vmatprep.subr.mxu0 0.0
    %4244 = vmatpush1.xpose.msra.mxu0 0.0
    %4245 = vmatprep.subr.mxu0 0.0
    %4246 = vmatpush1.xpose.msra.mxu0 0.0
    %4247 = vmatprep.subr.mxu0 0.0
    %4248 = vmatpush1.xpose.msra.mxu0 0.0
    %4249 = vmatprep.mubr.f32.mxu0 0.0
    %4250 = vmatmul.mubr.f32.gmra.mrb[0].mxu0 %v4180
    %v4251 = vpop.f32.mrb[0].mxu0
    %v4252 = vadd.f32 0.0, %v4251
    %v4253 = vpop.f32.mrb[0].mxu0
    %4254 = vdwg.mxu0
    %v4255 = vsel %vm1069, %v3720, -inf
    %4256 = vmax.xlane.f32.xlu0 %v4255
    %v4257 = vpop.xlane.xlu0 %4256
    %v4258 = vsel %vm1069, %v3796, -inf
    %4259 = vmax.xlane.f32.xlu0 %v4258
    %v4260 = vpop.xlane.xlu0 %4259
    %v4261 = vsel %vm1069, %v3872, -inf
    %4262 = vmax.xlane.f32.xlu0 %v4261
    %v4263 = vpop.xlane.xlu0 %4262
    %v4264 = vsel %vm1069, %v3948, -inf
    %4265 = vmax.xlane.f32.xlu0 %v4264
    %v4266 = vpop.xlane.xlu0 %4265
    %v4267 = vsel %vm1069, %v4024, -inf
    %4268 = vmax.xlane.f32.xlu0 %v4267
    %v4269 = vpop.xlane.xlu0 %4268
    %v4270 = vsel %vm1069, %v4100, -inf
    %4271 = vmax.xlane.f32.xlu0 %v4270
    %v4272 = vpop.xlane.xlu0 %4271
    %v4273 = vsel %vm1069, %v4176, -inf
    %4274 = vmax.xlane.f32.xlu0 %v4273
    %v4275 = vpop.xlane.xlu0 %4274
    %v4276 = vsel %vm1069, %v4252, -inf
    %4277 = vmax.xlane.f32.xlu0 %v4276
    %v4278 = vpop.xlane.xlu0 %4277
    %v4279 = vsub.f32 %v3720, %v4257
    %v4280 = vsub.f32 %v3796, %v4260
    %v4281 = vsub.f32 %v3872, %v4263
    %v4282 = vsub.f32 %v3948, %v4266
    %v4283 = vsub.f32 %v4024, %v4269
    %v4284 = vsub.f32 %v4100, %v4272
    %v4285 = vsub.f32 %v4176, %v4275
    %v4286 = vsub.f32 %v4252, %v4278
    %v4287 = vmul.f32 %v4279, 1.442695
    %v4288 = vpow.pop %v4287
    %v4289 = vmul.f32 %v4280, 1.442695
    %v4290 = vpow.pop %v4289
    %v4291 = vmul.f32 %v4281, 1.442695
    %v4292 = vpow.pop %v4291
    %v4293 = vmul.f32 %v4282, 1.442695
    %v4294 = vpow.pop %v4293
    %v4295 = vmul.f32 %v4283, 1.442695
    %v4296 = vpow.pop %v4295
    %v4297 = vmul.f32 %v4284, 1.442695
    %v4298 = vpow.pop %v4297
    %v4299 = vmul.f32 %v4285, 1.442695
    %v4300 = vpow.pop %v4299
    %v4301 = vmul.f32 %v4286, 1.442695
    %v4302 = vpow.pop %v4301
    %v4303 = vsel %vm1069, %v4288, 0.0
    %4304 = vadd.xlane.f32.xlu0 %v4303
    %v4305 = vpop.xlane.xlu0 %4304
    %v4306 = vsel %vm1069, %v4290, 0.0
    %4307 = vadd.xlane.f32.xlu0 %v4306
    %v4308 = vpop.xlane.xlu0 %4307
    %v4309 = vsel %vm1069, %v4292, 0.0
    %4310 = vadd.xlane.f32.xlu0 %v4309
    %v4311 = vpop.xlane.xlu0 %4310
    %v4312 = vsel %vm1069, %v4294, 0.0
    %4313 = vadd.xlane.f32.xlu0 %v4312
    %v4314 = vpop.xlane.xlu0 %4313
    %v4315 = vsel %vm1069, %v4296, 0.0
    %4316 = vadd.xlane.f32.xlu0 %v4315
    %v4317 = vpop.xlane.xlu0 %4316
    %v4318 = vsel %vm1069, %v4298, 0.0
    %4319 = vadd.xlane.f32.xlu0 %v4318
    %v4320 = vpop.xlane.xlu0 %4319
    %v4321 = vsel %vm1069, %v4300, 0.0
    %4322 = vadd.xlane.f32.xlu0 %v4321
    %v4323 = vpop.xlane.xlu0 %4322
    %v4324 = vsel %vm1069, %v4302, 0.0
    %4325 = vadd.xlane.f32.xlu0 %v4324
    %v4326 = vpop.xlane.xlu0 %4325
    %v4327 = vrcp.pop %v4305
    %v4328 = vmul.f32 %v4288, %v4327
    %v4329 = vrcp.pop %v4308
    %v4330 = vmul.f32 %v4290, %v4329
    %v4331 = vrcp.pop %v4311
    %v4332 = vmul.f32 %v4292, %v4331
    %v4333 = vrcp.pop %v4314
    %v4334 = vmul.f32 %v4294, %v4333
    %v4335 = vrcp.pop %v4317
    %v4336 = vmul.f32 %v4296, %v4335
    %v4337 = vrcp.pop %v4320
    %v4338 = vmul.f32 %v4298, %v4337
    %v4339 = vrcp.pop %v4323
    %v4340 = vmul.f32 %v4300, %v4339
    %v4341 = vrcp.pop %v4326
    %v4342 = vmul.f32 %v4302, %v4341
    %v4344 = vsel %vm1069, %v4328, 0
    %4346 = vmatprep.subr.mxu0 0.0
    %4347 = vmatpush1.msra.mxu0 %v3414
    %4348 = vmatprep.subr.mxu0 0.0
    %4349 = vmatpush1.msra.mxu0 0.0
    %4350 = vmatprep.subr.mxu0 0.0
    %4351 = vmatpush1.msra.mxu0 0.0
    %4352 = vmatprep.subr.mxu0 0.0
    %4353 = vmatpush1.msra.mxu0 0.0
    %4354 = vmatprep.subr.mxu0 0.0
    %4355 = vmatpush1.msra.mxu0 0.0
    %4356 = vmatprep.subr.mxu0 0.0
    %4357 = vmatpush1.msra.mxu0 0.0
    %4358 = vmatprep.subr.mxu0 0.0
    %4359 = vmatpush1.msra.mxu0 0.0
    %4360 = vmatprep.subr.mxu0 0.0
    %4361 = vmatpush1.msra.mxu0 0.0
    %4362 = vmatprep.subr.mxu0 0.0
    %4363 = vmatpush1.msra.mxu0 0.0
    %4364 = vmatprep.subr.mxu0 0.0
    %4365 = vmatpush1.msra.mxu0 0.0
    %4366 = vmatprep.subr.mxu0 0.0
    %4367 = vmatpush1.msra.mxu0 0.0
    %4368 = vmatprep.subr.mxu0 0.0
    %4369 = vmatpush1.msra.mxu0 0.0
    %4370 = vmatprep.subr.mxu0 0.0
    %4371 = vmatpush1.msra.mxu0 0.0
    %4372 = vmatprep.subr.mxu0 0.0
    %4373 = vmatpush1.msra.mxu0 0.0
    %4374 = vmatprep.subr.mxu0 0.0
    %4375 = vmatpush1.msra.mxu0 0.0
    %4376 = vmatprep.subr.mxu0 0.0
    %4377 = vmatpush1.msra.mxu0 0.0
    %4378 = vmatprep.subr.mxu0 0.0
    %4379 = vmatpush1.msra.mxu0 0.0
    %4380 = vmatprep.subr.mxu0 0.0
    %4381 = vmatpush1.msra.mxu0 0.0
    %4382 = vmatprep.subr.mxu0 0.0
    %4383 = vmatpush1.msra.mxu0 0.0
    %4384 = vmatprep.subr.mxu0 0.0
    %4385 = vmatpush1.msra.mxu0 0.0
    %4386 = vmatprep.subr.mxu0 0.0
    %4387 = vmatpush1.msra.mxu0 0.0
    %4388 = vmatprep.subr.mxu0 0.0
    %4389 = vmatpush1.msra.mxu0 0.0
    %4390 = vmatprep.subr.mxu0 0.0
    %4391 = vmatpush1.msra.mxu0 0.0
    %4392 = vmatprep.subr.mxu0 0.0
    %4393 = vmatpush1.msra.mxu0 0.0
    %4394 = vmatprep.subr.mxu0 0.0
    %4395 = vmatpush1.msra.mxu0 0.0
    %4396 = vmatprep.subr.mxu0 0.0
    %4397 = vmatpush1.msra.mxu0 0.0
    %4398 = vmatprep.subr.mxu0 0.0
    %4399 = vmatpush1.msra.mxu0 0.0
    %4400 = vmatprep.subr.mxu0 0.0
    %4401 = vmatpush1.msra.mxu0 0.0
    %4402 = vmatprep.subr.mxu0 0.0
    %4403 = vmatpush1.msra.mxu0 0.0
    %4404 = vmatprep.subr.mxu0 0.0
    %4405 = vmatpush1.msra.mxu0 0.0
    %4406 = vmatprep.subr.mxu0 0.0
    %4407 = vmatpush1.msra.mxu0 0.0
    %4408 = vmatprep.subr.mxu0 0.0
    %4409 = vmatpush1.msra.mxu0 0.0
    %4410 = vmatprep.mubr.f32.mxu0 0.0
    %4411 = vmatmul.mubr.f32.gmra.mrb[0].mxu0 %v4344
    %v4412 = vpop.f32.mrb[0].mxu0
    %v4413 = vadd.f32 0.0, %v4412
    %v4414 = vpop.f32.mrb[0].mxu0
    %4415 = vdwg.mxu0
    %v4417 = vsel %vm1069, %v4330, 0
    %4419 = vmatprep.subr.mxu0 0.0
    %4420 = vmatpush1.msra.mxu0 %v3419
    %4421 = vmatprep.subr.mxu0 0.0
    %4422 = vmatpush1.msra.mxu0 0.0
    %4423 = vmatprep.subr.mxu0 0.0
    %4424 = vmatpush1.msra.mxu0 0.0
    %4425 = vmatprep.subr.mxu0 0.0
    %4426 = vmatpush1.msra.mxu0 0.0
    %4427 = vmatprep.subr.mxu0 0.0
    %4428 = vmatpush1.msra.mxu0 0.0
    %4429 = vmatprep.subr.mxu0 0.0
    %4430 = vmatpush1.msra.mxu0 0.0
    %4431 = vmatprep.subr.mxu0 0.0
    %4432 = vmatpush1.msra.mxu0 0.0
    %4433 = vmatprep.subr.mxu0 0.0
    %4434 = vmatpush1.msra.mxu0 0.0
    %4435 = vmatprep.subr.mxu0 0.0
    %4436 = vmatpush1.msra.mxu0 0.0
    %4437 = vmatprep.subr.mxu0 0.0
    %4438 = vmatpush1.msra.mxu0 0.0
    %4439 = vmatprep.subr.mxu0 0.0
    %4440 = vmatpush1.msra.mxu0 0.0
    %4441 = vmatprep.subr.mxu0 0.0
    %4442 = vmatpush1.msra.mxu0 0.0
    %4443 = vmatprep.subr.mxu0 0.0
    %4444 = vmatpush1.msra.mxu0 0.0
    %4445 = vmatprep.subr.mxu0 0.0
    %4446 = vmatpush1.msra.mxu0 0.0
    %4447 = vmatprep.subr.mxu0 0.0
    %4448 = vmatpush1.msra.mxu0 0.0
    %4449 = vmatprep.subr.mxu0 0.0
    %4450 = vmatpush1.msra.mxu0 0.0
    %4451 = vmatprep.subr.mxu0 0.0
    %4452 = vmatpush1.msra.mxu0 0.0
    %4453 = vmatprep.subr.mxu0 0.0
    %4454 = vmatpush1.msra.mxu0 0.0
    %4455 = vmatprep.subr.mxu0 0.0
    %4456 = vmatpush1.msra.mxu0 0.0
    %4457 = vmatprep.subr.mxu0 0.0
    %4458 = vmatpush1.msra.mxu0 0.0
    %4459 = vmatprep.subr.mxu0 0.0
    %4460 = vmatpush1.msra.mxu0 0.0
    %4461 = vmatprep.subr.mxu0 0.0
    %4462 = vmatpush1.msra.mxu0 0.0
    %4463 = vmatprep.subr.mxu0 0.0
    %4464 = vmatpush1.msra.mxu0 0.0
    %4465 = vmatprep.subr.mxu0 0.0
    %4466 = vmatpush1.msra.mxu0 0.0
    %4467 = vmatprep.subr.mxu0 0.0
    %4468 = vmatpush1.msra.mxu0 0.0
    %4469 = vmatprep.subr.mxu0 0.0
    %4470 = vmatpush1.msra.mxu0 0.0
    %4471 = vmatprep.subr.mxu0 0.0
    %4472 = vmatpush1.msra.mxu0 0.0
    %4473 = vmatprep.subr.mxu0 0.0
    %4474 = vmatpush1.msra.mxu0 0.0
    %4475 = vmatprep.subr.mxu0 0.0
    %4476 = vmatpush1.msra.mxu0 0.0
    %4477 = vmatprep.subr.mxu0 0.0
    %4478 = vmatpush1.msra.mxu0 0.0
    %4479 = vmatprep.subr.mxu0 0.0
    %4480 = vmatpush1.msra.mxu0 0.0
    %4481 = vmatprep.subr.mxu0 0.0
    %4482 = vmatpush1.msra.mxu0 0.0
    %4483 = vmatprep.mubr.f32.mxu0 0.0
    %4484 = vmatmul.mubr.f32.gmra.mrb[0].mxu0 %v4417
    %v4485 = vpop.f32.mrb[0].mxu0
    %v4486 = vadd.f32 0.0, %v4485
    %v4487 = vpop.f32.mrb[0].mxu0
    %4488 = vdwg.mxu0
    %v4490 = vsel %vm1069, %v4332, 0
    %4492 = vmatprep.subr.mxu0 0.0
    %4493 = vmatpush1.msra.mxu0 %v3489
    %4494 = vmatprep.subr.mxu0 0.0
    %4495 = vmatpush1.msra.mxu0 0.0
    %4496 = vmatprep.subr.mxu0 0.0
    %4497 = vmatpush1.msra.mxu0 0.0
    %4498 = vmatprep.subr.mxu0 0.0
    %4499 = vmatpush1.msra.mxu0 0.0
    %4500 = vmatprep.subr.mxu0 0.0
    %4501 = vmatpush1.msra.mxu0 0.0
    %4502 = vmatprep.subr.mxu0 0.0
    %4503 = vmatpush1.msra.mxu0 0.0
    %4504 = vmatprep.subr.mxu0 0.0
    %4505 = vmatpush1.msra.mxu0 0.0
    %4506 = vmatprep.subr.mxu0 0.0
    %4507 = vmatpush1.msra.mxu0 0.0
    %4508 = vmatprep.subr.mxu0 0.0
    %4509 = vmatpush1.msra.mxu0 0.0
    %4510 = vmatprep.subr.mxu0 0.0
    %4511 = vmatpush1.msra.mxu0 0.0
    %4512 = vmatprep.subr.mxu0 0.0
    %4513 = vmatpush1.msra.mxu0 0.0
    %4514 = vmatprep.subr.mxu0 0.0
    %4515 = vmatpush1.msra.mxu0 0.0
    %4516 = vmatprep.subr.mxu0 0.0
    %4517 = vmatpush1.msra.mxu0 0.0
    %4518 = vmatprep.subr.mxu0 0.0
    %4519 = vmatpush1.msra.mxu0 0.0
    %4520 = vmatprep.subr.mxu0 0.0
    %4521 = vmatpush1.msra.mxu0 0.0
    %4522 = vmatprep.subr.mxu0 0.0
    %4523 = vmatpush1.msra.mxu0 0.0
    %4524 = vmatprep.subr.mxu0 0.0
    %4525 = vmatpush1.msra.mxu0 0.0
    %4526 = vmatprep.subr.mxu0 0.0
    %4527 = vmatpush1.msra.mxu0 0.0
    %4528 = vmatprep.subr.mxu0 0.0
    %4529 = vmatpush1.msra.mxu0 0.0
    %4530 = vmatprep.subr.mxu0 0.0
    %4531 = vmatpush1.msra.mxu0 0.0
    %4532 = vmatprep.subr.mxu0 0.0
    %4533 = vmatpush1.msra.mxu0 0.0
    %4534 = vmatprep.subr.mxu0 0.0
    %4535 = vmatpush1.msra.mxu0 0.0
    %4536 = vmatprep.subr.mxu0 0.0
    %4537 = vmatpush1.msra.mxu0 0.0
    %4538 = vmatprep.subr.mxu0 0.0
    %4539 = vmatpush1.msra.mxu0 0.0
    %4540 = vmatprep.subr.mxu0 0.0
    %4541 = vmatpush1.msra.mxu0 0.0
    %4542 = vmatprep.subr.mxu0 0.0
    %4543 = vmatpush1.msra.mxu0 0.0
    %4544 = vmatprep.subr.mxu0 0.0
    %4545 = vmatpush1.msra.mxu0 0.0
    %4546 = vmatprep.subr.mxu0 0.0
    %4547 = vmatpush1.msra.mxu0 0.0
    %4548 = vmatprep.subr.mxu0 0.0
    %4549 = vmatpush1.msra.mxu0 0.0
    %4550 = vmatprep.subr.mxu0 0.0
    %4551 = vmatpush1.msra.mxu0 0.0
    %4552 = vmatprep.subr.mxu0 0.0
    %4553 = vmatpush1.msra.mxu0 0.0
    %4554 = vmatprep.subr.mxu0 0.0
    %4555 = vmatpush1.msra.mxu0 0.0
    %4556 = vmatprep.mubr.f32.mxu0 0.0
    %4557 = vmatmul.mubr.f32.gmra.mrb[0].mxu0 %v4490
    %v4558 = vpop.f32.mrb[0].mxu0
    %v4559 = vadd.f32 0.0, %v4558
    %v4560 = vpop.f32.mrb[0].mxu0
    %4561 = vdwg.mxu0
    %v4563 = vsel %vm1069, %v4334, 0
    %4565 = vmatprep.subr.mxu0 0.0
    %4566 = vmatpush1.msra.mxu0 %v3494
    %4567 = vmatprep.subr.mxu0 0.0
    %4568 = vmatpush1.msra.mxu0 0.0
    %4569 = vmatprep.subr.mxu0 0.0
    %4570 = vmatpush1.msra.mxu0 0.0
    %4571 = vmatprep.subr.mxu0 0.0
    %4572 = vmatpush1.msra.mxu0 0.0
    %4573 = vmatprep.subr.mxu0 0.0
    %4574 = vmatpush1.msra.mxu0 0.0
    %4575 = vmatprep.subr.mxu0 0.0
    %4576 = vmatpush1.msra.mxu0 0.0
    %4577 = vmatprep.subr.mxu0 0.0
    %4578 = vmatpush1.msra.mxu0 0.0
    %4579 = vmatprep.subr.mxu0 0.0
    %4580 = vmatpush1.msra.mxu0 0.0
    %4581 = vmatprep.subr.mxu0 0.0
    %4582 = vmatpush1.msra.mxu0 0.0
    %4583 = vmatprep.subr.mxu0 0.0
    %4584 = vmatpush1.msra.mxu0 0.0
    %4585 = vmatprep.subr.mxu0 0.0
    %4586 = vmatpush1.msra.mxu0 0.0
    %4587 = vmatprep.subr.mxu0 0.0
    %4588 = vmatpush1.msra.mxu0 0.0
    %4589 = vmatprep.subr.mxu0 0.0
    %4590 = vmatpush1.msra.mxu0 0.0
    %4591 = vmatprep.subr.mxu0 0.0
    %4592 = vmatpush1.msra.mxu0 0.0
    %4593 = vmatprep.subr.mxu0 0.0
    %4594 = vmatpush1.msra.mxu0 0.0
    %4595 = vmatprep.subr.mxu0 0.0
    %4596 = vmatpush1.msra.mxu0 0.0
    %4597 = vmatprep.subr.mxu0 0.0
    %4598 = vmatpush1.msra.mxu0 0.0
    %4599 = vmatprep.subr.mxu0 0.0
    %4600 = vmatpush1.msra.mxu0 0.0
    %4601 = vmatprep.subr.mxu0 0.0
    %4602 = vmatpush1.msra.mxu0 0.0
    %4603 = vmatprep.subr.mxu0 0.0
    %4604 = vmatpush1.msra.mxu0 0.0
    %4605 = vmatprep.subr.mxu0 0.0
    %4606 = vmatpush1.msra.mxu0 0.0
    %4607 = vmatprep.subr.mxu0 0.0
    %4608 = vmatpush1.msra.mxu0 0.0
    %4609 = vmatprep.subr.mxu0 0.0
    %4610 = vmatpush1.msra.mxu0 0.0
    %4611 = vmatprep.subr.mxu0 0.0
    %4612 = vmatpush1.msra.mxu0 0.0
    %4613 = vmatprep.subr.mxu0 0.0
    %4614 = vmatpush1.msra.mxu0 0.0
    %4615 = vmatprep.subr.mxu0 0.0
    %4616 = vmatpush1.msra.mxu0 0.0
    %4617 = vmatprep.subr.mxu0 0.0
    %4618 = vmatpush1.msra.mxu0 0.0
    %4619 = vmatprep.subr.mxu0 0.0
    %4620 = vmatpush1.msra.mxu0 0.0
    %4621 = vmatprep.subr.mxu0 0.0
    %4622 = vmatpush1.msra.mxu0 0.0
    %4623 = vmatprep.subr.mxu0 0.0
    %4624 = vmatpush1.msra.mxu0 0.0
    %4625 = vmatprep.subr.mxu0 0.0
    %4626 = vmatpush1.msra.mxu0 0.0
    %4627 = vmatprep.subr.mxu0 0.0
    %4628 = vmatpush1.msra.mxu0 0.0
    %4629 = vmatprep.mubr.f32.mxu0 0.0
    %4630 = vmatmul.mubr.f32.gmra.mrb[0].mxu0 %v4563
    %v4631 = vpop.f32.mrb[0].mxu0
    %v4632 = vadd.f32 0.0, %v4631
    %v4633 = vpop.f32.mrb[0].mxu0
    %4634 = vdwg.mxu0
    %v4636 = vsel %vm1069, %v4336, 0
    %4638 = vmatprep.subr.mxu0 0.0
    %4639 = vmatpush1.msra.mxu0 %v3564
    %4640 = vmatprep.subr.mxu0 0.0
    %4641 = vmatpush1.msra.mxu0 0.0
    %4642 = vmatprep.subr.mxu0 0.0
    %4643 = vmatpush1.msra.mxu0 0.0
    %4644 = vmatprep.subr.mxu0 0.0
    %4645 = vmatpush1.msra.mxu0 0.0
    %4646 = vmatprep.subr.mxu0 0.0
    %4647 = vmatpush1.msra.mxu0 0.0
    %4648 = vmatprep.subr.mxu0 0.0
    %4649 = vmatpush1.msra.mxu0 0.0
    %4650 = vmatprep.subr.mxu0 0.0
    %4651 = vmatpush1.msra.mxu0 0.0
    %4652 = vmatprep.subr.mxu0 0.0
    %4653 = vmatpush1.msra.mxu0 0.0
    %4654 = vmatprep.subr.mxu0 0.0
    %4655 = vmatpush1.msra.mxu0 0.0
    %4656 = vmatprep.subr.mxu0 0.0
    %4657 = vmatpush1.msra.mxu0 0.0
    %4658 = vmatprep.subr.mxu0 0.0
    %4659 = vmatpush1.msra.mxu0 0.0
    %4660 = vmatprep.subr.mxu0 0.0
    %4661 = vmatpush1.msra.mxu0 0.0
    %4662 = vmatprep.subr.mxu0 0.0
    %4663 = vmatpush1.msra.mxu0 0.0
    %4664 = vmatprep.subr.mxu0 0.0
    %4665 = vmatpush1.msra.mxu0 0.0
    %4666 = vmatprep.subr.mxu0 0.0
    %4667 = vmatpush1.msra.mxu0 0.0
    %4668 = vmatprep.subr.mxu0 0.0
    %4669 = vmatpush1.msra.mxu0 0.0
    %4670 = vmatprep.subr.mxu0 0.0
    %4671 = vmatpush1.msra.mxu0 0.0
    %4672 = vmatprep.subr.mxu0 0.0
    %4673 = vmatpush1.msra.mxu0 0.0
    %4674 = vmatprep.subr.mxu0 0.0
    %4675 = vmatpush1.msra.mxu0 0.0
    %4676 = vmatprep.subr.mxu0 0.0
    %4677 = vmatpush1.msra.mxu0 0.0
    %4678 = vmatprep.subr.mxu0 0.0
    %4679 = vmatpush1.msra.mxu0 0.0
    %4680 = vmatprep.subr.mxu0 0.0
    %4681 = vmatpush1.msra.mxu0 0.0
    %4682 = vmatprep.subr.mxu0 0.0
    %4683 = vmatpush1.msra.mxu0 0.0
    %4684 = vmatprep.subr.mxu0 0.0
    %4685 = vmatpush1.msra.mxu0 0.0
    %4686 = vmatprep.subr.mxu0 0.0
    %4687 = vmatpush1.msra.mxu0 0.0
    %4688 = vmatprep.subr.mxu0 0.0
    %4689 = vmatpush1.msra.mxu0 0.0
    %4690 = vmatprep.subr.mxu0 0.0
    %4691 = vmatpush1.msra.mxu0 0.0
    %4692 = vmatprep.subr.mxu0 0.0
    %4693 = vmatpush1.msra.mxu0 0.0
    %4694 = vmatprep.subr.mxu0 0.0
    %4695 = vmatpush1.msra.mxu0 0.0
    %4696 = vmatprep.subr.mxu0 0.0
    %4697 = vmatpush1.msra.mxu0 0.0
    %4698 = vmatprep.subr.mxu0 0.0
    %4699 = vmatpush1.msra.mxu0 0.0
    %4700 = vmatprep.subr.mxu0 0.0
    %4701 = vmatpush1.msra.mxu0 0.0
    %4702 = vmatprep.mubr.f32.mxu0 0.0
    %4703 = vmatmul.mubr.f32.gmra.mrb[0].mxu0 %v4636
    %v4704 = vpop.f32.mrb[0].mxu0
    %v4705 = vadd.f32 0.0, %v4704
    %v4706 = vpop.f32.mrb[0].mxu0
    %4707 = vdwg.mxu0
    %v4709 = vsel %vm1069, %v4338, 0
    %4711 = vmatprep.subr.mxu0 0.0
    %4712 = vmatpush1.msra.mxu0 %v3569
    %4713 = vmatprep.subr.mxu0 0.0
    %4714 = vmatpush1.msra.mxu0 0.0
    %4715 = vmatprep.subr.mxu0 0.0
    %4716 = vmatpush1.msra.mxu0 0.0
    %4717 = vmatprep.subr.mxu0 0.0
    %4718 = vmatpush1.msra.mxu0 0.0
    %4719 = vmatprep.subr.mxu0 0.0
    %4720 = vmatpush1.msra.mxu0 0.0
    %4721 = vmatprep.subr.mxu0 0.0
    %4722 = vmatpush1.msra.mxu0 0.0
    %4723 = vmatprep.subr.mxu0 0.0
    %4724 = vmatpush1.msra.mxu0 0.0
    %4725 = vmatprep.subr.mxu0 0.0
    %4726 = vmatpush1.msra.mxu0 0.0
    %4727 = vmatprep.subr.mxu0 0.0
    %4728 = vmatpush1.msra.mxu0 0.0
    %4729 = vmatprep.subr.mxu0 0.0
    %4730 = vmatpush1.msra.mxu0 0.0
    %4731 = vmatprep.subr.mxu0 0.0
    %4732 = vmatpush1.msra.mxu0 0.0
    %4733 = vmatprep.subr.mxu0 0.0
    %4734 = vmatpush1.msra.mxu0 0.0
    %4735 = vmatprep.subr.mxu0 0.0
    %4736 = vmatpush1.msra.mxu0 0.0
    %4737 = vmatprep.subr.mxu0 0.0
    %4738 = vmatpush1.msra.mxu0 0.0
    %4739 = vmatprep.subr.mxu0 0.0
    %4740 = vmatpush1.msra.mxu0 0.0
    %4741 = vmatprep.subr.mxu0 0.0
    %4742 = vmatpush1.msra.mxu0 0.0
    %4743 = vmatprep.subr.mxu0 0.0
    %4744 = vmatpush1.msra.mxu0 0.0
    %4745 = vmatprep.subr.mxu0 0.0
    %4746 = vmatpush1.msra.mxu0 0.0
    %4747 = vmatprep.subr.mxu0 0.0
    %4748 = vmatpush1.msra.mxu0 0.0
    %4749 = vmatprep.subr.mxu0 0.0
    %4750 = vmatpush1.msra.mxu0 0.0
    %4751 = vmatprep.subr.mxu0 0.0
    %4752 = vmatpush1.msra.mxu0 0.0
    %4753 = vmatprep.subr.mxu0 0.0
    %4754 = vmatpush1.msra.mxu0 0.0
    %4755 = vmatprep.subr.mxu0 0.0
    %4756 = vmatpush1.msra.mxu0 0.0
    %4757 = vmatprep.subr.mxu0 0.0
    %4758 = vmatpush1.msra.mxu0 0.0
    %4759 = vmatprep.subr.mxu0 0.0
    %4760 = vmatpush1.msra.mxu0 0.0
    %4761 = vmatprep.subr.mxu0 0.0
    %4762 = vmatpush1.msra.mxu0 0.0
    %4763 = vmatprep.subr.mxu0 0.0
    %4764 = vmatpush1.msra.mxu0 0.0
    %4765 = vmatprep.subr.mxu0 0.0
    %4766 = vmatpush1.msra.mxu0 0.0
    %4767 = vmatprep.subr.mxu0 0.0
    %4768 = vmatpush1.msra.mxu0 0.0
    %4769 = vmatprep.subr.mxu0 0.0
    %4770 = vmatpush1.msra.mxu0 0.0
    %4771 = vmatprep.subr.mxu0 0.0
    %4772 = vmatpush1.msra.mxu0 0.0
    %4773 = vmatprep.subr.mxu0 0.0
    %4774 = vmatpush1.msra.mxu0 0.0
    %4775 = vmatprep.mubr.f32.mxu0 0.0
    %4776 = vmatmul.mubr.f32.gmra.mrb[0].mxu0 %v4709
    %v4777 = vpop.f32.mrb[0].mxu0
    %v4778 = vadd.f32 0.0, %v4777
    %v4779 = vpop.f32.mrb[0].mxu0
    %4780 = vdwg.mxu0
    %v4782 = vsel %vm1069, %v4340, 0
    %4784 = vmatprep.subr.mxu0 0.0
    %4785 = vmatpush1.msra.mxu0 %v3639
    %4786 = vmatprep.subr.mxu0 0.0
    %4787 = vmatpush1.msra.mxu0 0.0
    %4788 = vmatprep.subr.mxu0 0.0
    %4789 = vmatpush1.msra.mxu0 0.0
    %4790 = vmatprep.subr.mxu0 0.0
    %4791 = vmatpush1.msra.mxu0 0.0
    %4792 = vmatprep.subr.mxu0 0.0
    %4793 = vmatpush1.msra.mxu0 0.0
    %4794 = vmatprep.subr.mxu0 0.0
    %4795 = vmatpush1.msra.mxu0 0.0
    %4796 = vmatprep.subr.mxu0 0.0
    %4797 = vmatpush1.msra.mxu0 0.0
    %4798 = vmatprep.subr.mxu0 0.0
    %4799 = vmatpush1.msra.mxu0 0.0
    %4800 = vmatprep.subr.mxu0 0.0
    %4801 = vmatpush1.msra.mxu0 0.0
    %4802 = vmatprep.subr.mxu0 0.0
    %4803 = vmatpush1.msra.mxu0 0.0
    %4804 = vmatprep.subr.mxu0 0.0
    %4805 = vmatpush1.msra.mxu0 0.0
    %4806 = vmatprep.subr.mxu0 0.0
    %4807 = vmatpush1.msra.mxu0 0.0
    %4808 = vmatprep.subr.mxu0 0.0
    %4809 = vmatpush1.msra.mxu0 0.0
    %4810 = vmatprep.subr.mxu0 0.0
    %4811 = vmatpush1.msra.mxu0 0.0
    %4812 = vmatprep.subr.mxu0 0.0
    %4813 = vmatpush1.msra.mxu0 0.0
    %4814 = vmatprep.subr.mxu0 0.0
    %4815 = vmatpush1.msra.mxu0 0.0
    %4816 = vmatprep.subr.mxu0 0.0
    %4817 = vmatpush1.msra.mxu0 0.0
    %4818 = vmatprep.subr.mxu0 0.0
    %4819 = vmatpush1.msra.mxu0 0.0
    %4820 = vmatprep.subr.mxu0 0.0
    %4821 = vmatpush1.msra.mxu0 0.0
    %4822 = vmatprep.subr.mxu0 0.0
    %4823 = vmatpush1.msra.mxu0 0.0
    %4824 = vmatprep.subr.mxu0 0.0
    %4825 = vmatpush1.msra.mxu0 0.0
    %4826 = vmatprep.subr.mxu0 0.0
    %4827 = vmatpush1.msra.mxu0 0.0
    %4828 = vmatprep.subr.mxu0 0.0
    %4829 = vmatpush1.msra.mxu0 0.0
    %4830 = vmatprep.subr.mxu0 0.0
    %4831 = vmatpush1.msra.mxu0 0.0
    %4832 = vmatprep.subr.mxu0 0.0
    %4833 = vmatpush1.msra.mxu0 0.0
    %4834 = vmatprep.subr.mxu0 0.0
    %4835 = vmatpush1.msra.mxu0 0.0
    %4836 = vmatprep.subr.mxu0 0.0
    %4837 = vmatpush1.msra.mxu0 0.0
    %4838 = vmatprep.subr.mxu0 0.0
    %4839 = vmatpush1.msra.mxu0 0.0
    %4840 = vmatprep.subr.mxu0 0.0
    %4841 = vmatpush1.msra.mxu0 0.0
    %4842 = vmatprep.subr.mxu0 0.0
    %4843 = vmatpush1.msra.mxu0 0.0
    %4844 = vmatprep.subr.mxu0 0.0
    %4845 = vmatpush1.msra.mxu0 0.0
    %4846 = vmatprep.subr.mxu0 0.0
    %4847 = vmatpush1.msra.mxu0 0.0
    %4848 = vmatprep.mubr.f32.mxu0 0.0
    %4849 = vmatmul.mubr.f32.gmra.mrb[0].mxu0 %v4782
    %v4850 = vpop.f32.mrb[0].mxu0
    %v4851 = vadd.f32 0.0, %v4850
    %v4852 = vpop.f32.mrb[0].mxu0
    %4853 = vdwg.mxu0
    %v4855 = vsel %vm1069, %v4342, 0
    %4857 = vmatprep.subr.mxu0 0.0
    %4858 = vmatpush1.msra.mxu0 %v3644
    %4859 = vmatprep.subr.mxu0 0.0
    %4860 = vmatpush1.msra.mxu0 0.0
    %4861 = vmatprep.subr.mxu0 0.0
    %4862 = vmatpush1.msra.mxu0 0.0
    %4863 = vmatprep.subr.mxu0 0.0
    %4864 = vmatpush1.msra.mxu0 0.0
    %4865 = vmatprep.subr.mxu0 0.0
    %4866 = vmatpush1.msra.mxu0 0.0
    %4867 = vmatprep.subr.mxu0 0.0
    %4868 = vmatpush1.msra.mxu0 0.0
    %4869 = vmatprep.subr.mxu0 0.0
    %4870 = vmatpush1.msra.mxu0 0.0
    %4871 = vmatprep.subr.mxu0 0.0
    %4872 = vmatpush1.msra.mxu0 0.0
    %4873 = vmatprep.subr.mxu0 0.0
    %4874 = vmatpush1.msra.mxu0 0.0
    %4875 = vmatprep.subr.mxu0 0.0
    %4876 = vmatpush1.msra.mxu0 0.0
    %4877 = vmatprep.subr.mxu0 0.0
    %4878 = vmatpush1.msra.mxu0 0.0
    %4879 = vmatprep.subr.mxu0 0.0
    %4880 = vmatpush1.msra.mxu0 0.0
    %4881 = vmatprep.subr.mxu0 0.0
    %4882 = vmatpush1.msra.mxu0 0.0
    %4883 = vmatprep.subr.mxu0 0.0
    %4884 = vmatpush1.msra.mxu0 0.0
    %4885 = vmatprep.subr.mxu0 0.0
    %4886 = vmatpush1.msra.mxu0 0.0
    %4887 = vmatprep.subr.mxu0 0.0
    %4888 = vmatpush1.msra.mxu0 0.0
    %4889 = vmatprep.subr.mxu0 0.0
    %4890 = vmatpush1.msra.mxu0 0.0
    %4891 = vmatprep.subr.mxu0 0.0
    %4892 = vmatpush1.msra.mxu0 0.0
    %4893 = vmatprep.subr.mxu0 0.0
    %4894 = vmatpush1.msra.mxu0 0.0
    %4895 = vmatprep.subr.mxu0 0.0
    %4896 = vmatpush1.msra.mxu0 0.0
    %4897 = vmatprep.subr.mxu0 0.0
    %4898 = vmatpush1.msra.mxu0 0.0
    %4899 = vmatprep.subr.mxu0 0.0
    %4900 = vmatpush1.msra.mxu0 0.0
    %4901 = vmatprep.subr.mxu0 0.0
    %4902 = vmatpush1.msra.mxu0 0.0
    %4903 = vmatprep.subr.mxu0 0.0
    %4904 = vmatpush1.msra.mxu0 0.0
    %4905 = vmatprep.subr.mxu0 0.0
    %4906 = vmatpush1.msra.mxu0 0.0
    %4907 = vmatprep.subr.mxu0 0.0
    %4908 = vmatpush1.msra.mxu0 0.0
    %4909 = vmatprep.subr.mxu0 0.0
    %4910 = vmatpush1.msra.mxu0 0.0
    %4911 = vmatprep.subr.mxu0 0.0
    %4912 = vmatpush1.msra.mxu0 0.0
    %4913 = vmatprep.subr.mxu0 0.0
    %4914 = vmatpush1.msra.mxu0 0.0
    %4915 = vmatprep.subr.mxu0 0.0
    %4916 = vmatpush1.msra.mxu0 0.0
    %4917 = vmatprep.subr.mxu0 0.0
    %4918 = vmatpush1.msra.mxu0 0.0
    %4919 = vmatprep.subr.mxu0 0.0
    %4920 = vmatpush1.msra.mxu0 0.0
    %4921 = vmatprep.mubr.f32.mxu0 0.0
    %4922 = vmatmul.mubr.f32.gmra.mrb[0].mxu0 %v4855
    %v4923 = vpop.f32.mrb[0].mxu0
    %v4924 = vadd.f32 0.0, %v4923
    %v4925 = vpop.f32.mrb[0].mxu0
    %4926 = vdwg.mxu0
    %s4927 = scalar_lea.vmem %s4, 32
    %v4928 = vld [vmem:[%s4927] sm:$0xff]
    %v4929 = vld [vmem:[%s4927 + $0x8] sm:$0xff]
    %v4930 = vld [vmem:[%s4927 + $0x10] sm:$0xff]
    %v4931 = vld [vmem:[%s4927 + $0x18] sm:$0xff]
    %v4933 = vsel %vm1069, %v4413, 0
    %v4936 = vsel %vm1069, %v4486, 0
    %4938 = vmatprep.subr.mxu0 0.0
    %4939 = vmatpush1.msra.mxu0 %v4928
    %4940 = vmatprep.subr.mxu0 0.0
    %4941 = vmatpush1.msra.mxu0 0.0
    %4942 = vmatprep.subr.mxu0 0.0
    %4943 = vmatpush1.msra.mxu0 0.0
    %4944 = vmatprep.subr.mxu0 0.0
    %4945 = vmatpush1.msra.mxu0 0.0
    %4946 = vmatprep.subr.mxu0 0.0
    %4947 = vmatpush1.msra.mxu0 0.0
    %4948 = vmatprep.subr.mxu0 0.0
    %4949 = vmatpush1.msra.mxu0 0.0
    %4950 = vmatprep.subr.mxu0 0.0
    %4951 = vmatpush1.msra.mxu0 0.0
    %4952 = vmatprep.subr.mxu0 0.0
    %4953 = vmatpush1.msra.mxu0 0.0
    %4954 = vmatprep.subr.mxu0 0.0
    %4955 = vmatpush1.msra.mxu0 0.0
    %4956 = vmatprep.subr.mxu0 0.0
    %4957 = vmatpush1.msra.mxu0 0.0
    %4958 = vmatprep.subr.mxu0 0.0
    %4959 = vmatpush1.msra.mxu0 0.0
    %4960 = vmatprep.subr.mxu0 0.0
    %4961 = vmatpush1.msra.mxu0 0.0
    %4962 = vmatprep.subr.mxu0 0.0
    %4963 = vmatpush1.msra.mxu0 0.0
    %4964 = vmatprep.subr.mxu0 0.0
    %4965 = vmatpush1.msra.mxu0 0.0
    %4966 = vmatprep.subr.mxu0 0.0
    %4967 = vmatpush1.msra.mxu0 0.0
    %4968 = vmatprep.subr.mxu0 0.0
    %4969 = vmatpush1.msra.mxu0 0.0
    %4970 = vmatprep.subr.mxu0 0.0
    %4971 = vmatpush1.msra.mxu0 0.0
    %4972 = vmatprep.subr.mxu0 0.0
    %4973 = vmatpush1.msra.mxu0 0.0
    %4974 = vmatprep.subr.mxu0 0.0
    %4975 = vmatpush1.msra.mxu0 0.0
    %4976 = vmatprep.subr.mxu0 0.0
    %4977 = vmatpush1.msra.mxu0 0.0
    %4978 = vmatprep.subr.mxu0 0.0
    %4979 = vmatpush1.msra.mxu0 0.0
    %4980 = vmatprep.subr.mxu0 0.0
    %4981 = vmatpush1.msra.mxu0 0.0
    %4982 = vmatprep.subr.mxu0 0.0
    %4983 = vmatpush1.msra.mxu0 0.0
    %4984 = vmatprep.subr.mxu0 0.0
    %4985 = vmatpush1.msra.mxu0 0.0
    %4986 = vmatprep.subr.mxu0 0.0
    %4987 = vmatpush1.msra.mxu0 0.0
    %4988 = vmatprep.subr.mxu0 0.0
    %4989 = vmatpush1.msra.mxu0 0.0
    %4990 = vmatprep.subr.mxu0 0.0
    %4991 = vmatpush1.msra.mxu0 0.0
    %4992 = vmatprep.subr.mxu0 0.0
    %4993 = vmatpush1.msra.mxu0 0.0
    %4994 = vmatprep.subr.mxu0 0.0
    %4995 = vmatpush1.msra.mxu0 0.0
    %4996 = vmatprep.subr.mxu0 0.0
    %4997 = vmatpush1.msra.mxu0 0.0
    %4998 = vmatprep.subr.mxu0 0.0
    %4999 = vmatpush1.msra.mxu0 0.0
    %5000 = vmatprep.subr.mxu0 0.0
    %5001 = vmatpush1.msra.mxu0 0.0
    %5002 = vmatprep.mubr.f32.mxu0 0.0
    %5003 = vmatmul.mubr.f32.gmra.mrb[0].mxu0 %v4933
    %v5004 = vpop.f32.mrb[0].mxu0
    %v5005 = vadd.f32 0.0, %v5004
    %v5006 = vpop.f32.mrb[0].mxu0
    %5007 = vmatprep.mubr.f32.mxu0 0.0
    %5008 = vmatmul.mubr.f32.gmra.mrb[0].mxu0 %v4936
    %v5009 = vpop.f32.mrb[0].mxu0
    %v5010 = vadd.f32 0.0, %v5009
    %v5011 = vpop.f32.mrb[0].mxu0
    %5012 = vdwg.mxu0
    %v5014 = vsel %vm1069, %v4559, 0
    %v5017 = vsel %vm1069, %v4632, 0
    %5019 = vmatprep.subr.mxu0 0.0
    %5020 = vmatpush1.msra.mxu0 %v4929
    %5021 = vmatprep.subr.mxu0 0.0
    %5022 = vmatpush1.msra.mxu0 0.0
    %5023 = vmatprep.subr.mxu0 0.0
    %5024 = vmatpush1.msra.mxu0 0.0
    %5025 = vmatprep.subr.mxu0 0.0
    %5026 = vmatpush1.msra.mxu0 0.0
    %5027 = vmatprep.subr.mxu0 0.0
    %5028 = vmatpush1.msra.mxu0 0.0
    %5029 = vmatprep.subr.mxu0 0.0
    %5030 = vmatpush1.msra.mxu0 0.0
    %5031 = vmatprep.subr.mxu0 0.0
    %5032 = vmatpush1.msra.mxu0 0.0
    %5033 = vmatprep.subr.mxu0 0.0
    %5034 = vmatpush1.msra.mxu0 0.0
    %5035 = vmatprep.subr.mxu0 0.0
    %5036 = vmatpush1.msra.mxu0 0.0
    %5037 = vmatprep.subr.mxu0 0.0
    %5038 = vmatpush1.msra.mxu0 0.0
    %5039 = vmatprep.subr.mxu0 0.0
    %5040 = vmatpush1.msra.mxu0 0.0
    %5041 = vmatprep.subr.mxu0 0.0
    %5042 = vmatpush1.msra.mxu0 0.0
    %5043 = vmatprep.subr.mxu0 0.0
    %5044 = vmatpush1.msra.mxu0 0.0
    %5045 = vmatprep.subr.mxu0 0.0
    %5046 = vmatpush1.msra.mxu0 0.0
    %5047 = vmatprep.subr.mxu0 0.0
    %5048 = vmatpush1.msra.mxu0 0.0
    %5049 = vmatprep.subr.mxu0 0.0
    %5050 = vmatpush1.msra.mxu0 0.0
    %5051 = vmatprep.subr.mxu0 0.0
    %5052 = vmatpush1.msra.mxu0 0.0
    %5053 = vmatprep.subr.mxu0 0.0
    %5054 = vmatpush1.msra.mxu0 0.0
    %5055 = vmatprep.subr.mxu0 0.0
    %5056 = vmatpush1.msra.mxu0 0.0
    %5057 = vmatprep.subr.mxu0 0.0
    %5058 = vmatpush1.msra.mxu0 0.0
    %5059 = vmatprep.subr.mxu0 0.0
    %5060 = vmatpush1.msra.mxu0 0.0
    %5061 = vmatprep.subr.mxu0 0.0
    %5062 = vmatpush1.msra.mxu0 0.0
    %5063 = vmatprep.subr.mxu0 0.0
    %5064 = vmatpush1.msra.mxu0 0.0
    %5065 = vmatprep.subr.mxu0 0.0
    %5066 = vmatpush1.msra.mxu0 0.0
    %5067 = vmatprep.subr.mxu0 0.0
    %5068 = vmatpush1.msra.mxu0 0.0
    %5069 = vmatprep.subr.mxu0 0.0
    %5070 = vmatpush1.msra.mxu0 0.0
    %5071 = vmatprep.subr.mxu0 0.0
    %5072 = vmatpush1.msra.mxu0 0.0
    %5073 = vmatprep.subr.mxu0 0.0
    %5074 = vmatpush1.msra.mxu0 0.0
    %5075 = vmatprep.subr.mxu0 0.0
    %5076 = vmatpush1.msra.mxu0 0.0
    %5077 = vmatprep.subr.mxu0 0.0
    %5078 = vmatpush1.msra.mxu0 0.0
    %5079 = vmatprep.subr.mxu0 0.0
    %5080 = vmatpush1.msra.mxu0 0.0
    %5081 = vmatprep.subr.mxu0 0.0
    %5082 = vmatpush1.msra.mxu0 0.0
    %5083 = vmatprep.mubr.f32.mxu0 0.0
    %5084 = vmatmul.mubr.f32.gmra.mrb[0].mxu0 %v5014
    %v5085 = vpop.f32.mrb[0].mxu0
    %v5086 = vadd.f32 0.0, %v5085
    %v5087 = vpop.f32.mrb[0].mxu0
    %5088 = vmatprep.mubr.f32.mxu0 0.0
    %5089 = vmatmul.mubr.f32.gmra.mrb[0].mxu0 %v5017
    %v5090 = vpop.f32.mrb[0].mxu0
    %v5091 = vadd.f32 0.0, %v5090
    %v5092 = vpop.f32.mrb[0].mxu0
    %5093 = vdwg.mxu0
    %v5095 = vsel %vm1069, %v4705, 0
    %v5098 = vsel %vm1069, %v4778, 0
    %5100 = vmatprep.subr.mxu0 0.0
    %5101 = vmatpush1.msra.mxu0 %v4930
    %5102 = vmatprep.subr.mxu0 0.0
    %5103 = vmatpush1.msra.mxu0 0.0
    %5104 = vmatprep.subr.mxu0 0.0
    %5105 = vmatpush1.msra.mxu0 0.0
    %5106 = vmatprep.subr.mxu0 0.0
    %5107 = vmatpush1.msra.mxu0 0.0
    %5108 = vmatprep.subr.mxu0 0.0
    %5109 = vmatpush1.msra.mxu0 0.0
    %5110 = vmatprep.subr.mxu0 0.0
    %5111 = vmatpush1.msra.mxu0 0.0
    %5112 = vmatprep.subr.mxu0 0.0
    %5113 = vmatpush1.msra.mxu0 0.0
    %5114 = vmatprep.subr.mxu0 0.0
    %5115 = vmatpush1.msra.mxu0 0.0
    %5116 = vmatprep.subr.mxu0 0.0
    %5117 = vmatpush1.msra.mxu0 0.0
    %5118 = vmatprep.subr.mxu0 0.0
    %5119 = vmatpush1.msra.mxu0 0.0
    %5120 = vmatprep.subr.mxu0 0.0
    %5121 = vmatpush1.msra.mxu0 0.0
    %5122 = vmatprep.subr.mxu0 0.0
    %5123 = vmatpush1.msra.mxu0 0.0
    %5124 = vmatprep.subr.mxu0 0.0
    %5125 = vmatpush1.msra.mxu0 0.0
    %5126 = vmatprep.subr.mxu0 0.0
    %5127 = vmatpush1.msra.mxu0 0.0
    %5128 = vmatprep.subr.mxu0 0.0
    %5129 = vmatpush1.msra.mxu0 0.0
    %5130 = vmatprep.subr.mxu0 0.0
    %5131 = vmatpush1.msra.mxu0 0.0
    %5132 = vmatprep.subr.mxu0 0.0
    %5133 = vmatpush1.msra.mxu0 0.0
    %5134 = vmatprep.subr.mxu0 0.0
    %5135 = vmatpush1.msra.mxu0 0.0
    %5136 = vmatprep.subr.mxu0 0.0
    %5137 = vmatpush1.msra.mxu0 0.0
    %5138 = vmatprep.subr.mxu0 0.0
    %5139 = vmatpush1.msra.mxu0 0.0
    %5140 = vmatprep.subr.mxu0 0.0
    %5141 = vmatpush1.msra.mxu0 0.0
    %5142 = vmatprep.subr.mxu0 0.0
    %5143 = vmatpush1.msra.mxu0 0.0
    %5144 = vmatprep.subr.mxu0 0.0
    %5145 = vmatpush1.msra.mxu0 0.0
    %5146 = vmatprep.subr.mxu0 0.0
    %5147 = vmatpush1.msra.mxu0 0.0
    %5148 = vmatprep.subr.mxu0 0.0
    %5149 = vmatpush1.msra.mxu0 0.0
    %5150 = vmatprep.subr.mxu0 0.0
    %5151 = vmatpush1.msra.mxu0 0.0
    %5152 = vmatprep.subr.mxu0 0.0
    %5153 = vmatpush1.msra.mxu0 0.0
    %5154 = vmatprep.subr.mxu0 0.0
    %5155 = vmatpush1.msra.mxu0 0.0
    %5156 = vmatprep.subr.mxu0 0.0
    %5157 = vmatpush1.msra.mxu0 0.0
    %5158 = vmatprep.subr.mxu0 0.0
    %5159 = vmatpush1.msra.mxu0 0.0
    %5160 = vmatprep.subr.mxu0 0.0
    %5161 = vmatpush1.msra.mxu0 0.0
    %5162 = vmatprep.subr.mxu0 0.0
    %5163 = vmatpush1.msra.mxu0 0.0
    %5164 = vmatprep.mubr.f32.mxu0 0.0
    %5165 = vmatmul.mubr.f32.gmra.mrb[0].mxu0 %v5095
    %v5166 = vpop.f32.mrb[0].mxu0
    %v5167 = vadd.f32 0.0, %v5166
    %v5168 = vpop.f32.mrb[0].mxu0
    %5169 = vmatprep.mubr.f32.mxu0 0.0
    %5170 = vmatmul.mubr.f32.gmra.mrb[0].mxu0 %v5098
    %v5171 = vpop.f32.mrb[0].mxu0
    %v5172 = vadd.f32 0.0, %v5171
    %v5173 = vpop.f32.mrb[0].mxu0
    %5174 = vdwg.mxu0
    %v5176 = vsel %vm1069, %v4851, 0
    %v5179 = vsel %vm1069, %v4924, 0
    %5181 = vmatprep.subr.mxu0 0.0
    %5182 = vmatpush1.msra.mxu0 %v4931
    %5183 = vmatprep.subr.mxu0 0.0
    %5184 = vmatpush1.msra.mxu0 0.0
    %5185 = vmatprep.subr.mxu0 0.0
    %5186 = vmatpush1.msra.mxu0 0.0
    %5187 = vmatprep.subr.mxu0 0.0
    %5188 = vmatpush1.msra.mxu0 0.0
    %5189 = vmatprep.subr.mxu0 0.0
    %5190 = vmatpush1.msra.mxu0 0.0
    %5191 = vmatprep.subr.mxu0 0.0
    %5192 = vmatpush1.msra.mxu0 0.0
    %5193 = vmatprep.subr.mxu0 0.0
    %5194 = vmatpush1.msra.mxu0 0.0
    %5195 = vmatprep.subr.mxu0 0.0
    %5196 = vmatpush1.msra.mxu0 0.0
    %5197 = vmatprep.subr.mxu0 0.0
    %5198 = vmatpush1.msra.mxu0 0.0
    %5199 = vmatprep.subr.mxu0 0.0
    %5200 = vmatpush1.msra.mxu0 0.0
    %5201 = vmatprep.subr.mxu0 0.0
    %5202 = vmatpush1.msra.mxu0 0.0
    %5203 = vmatprep.subr.mxu0 0.0
    %5204 = vmatpush1.msra.mxu0 0.0
    %5205 = vmatprep.subr.mxu0 0.0
    %5206 = vmatpush1.msra.mxu0 0.0
    %5207 = vmatprep.subr.mxu0 0.0
    %5208 = vmatpush1.msra.mxu0 0.0
    %5209 = vmatprep.subr.mxu0 0.0
    %5210 = vmatpush1.msra.mxu0 0.0
    %5211 = vmatprep.subr.mxu0 0.0
    %5212 = vmatpush1.msra.mxu0 0.0
    %5213 = vmatprep.subr.mxu0 0.0
    %5214 = vmatpush1.msra.mxu0 0.0
    %5215 = vmatprep.subr.mxu0 0.0
    %5216 = vmatpush1.msra.mxu0 0.0
    %5217 = vmatprep.subr.mxu0 0.0
    %5218 = vmatpush1.msra.mxu0 0.0
    %5219 = vmatprep.subr.mxu0 0.0
    %5220 = vmatpush1.msra.mxu0 0.0
    %5221 = vmatprep.subr.mxu0 0.0
    %5222 = vmatpush1.msra.mxu0 0.0
    %5223 = vmatprep.subr.mxu0 0.0
    %5224 = vmatpush1.msra.mxu0 0.0
    %5225 = vmatprep.subr.mxu0 0.0
    %5226 = vmatpush1.msra.mxu0 0.0
    %5227 = vmatprep.subr.mxu0 0.0
    %5228 = vmatpush1.msra.mxu0 0.0
    %5229 = vmatprep.subr.mxu0 0.0
    %5230 = vmatpush1.msra.mxu0 0.0
    %5231 = vmatprep.subr.mxu0 0.0
    %5232 = vmatpush1.msra.mxu0 0.0
    %5233 = vmatprep.subr.mxu0 0.0
    %5234 = vmatpush1.msra.mxu0 0.0
    %5235 = vmatprep.subr.mxu0 0.0
    %5236 = vmatpush1.msra.mxu0 0.0
    %5237 = vmatprep.subr.mxu0 0.0
    %5238 = vmatpush1.msra.mxu0 0.0
    %5239 = vmatprep.subr.mxu0 0.0
    %5240 = vmatpush1.msra.mxu0 0.0
    %5241 = vmatprep.subr.mxu0 0.0
    %5242 = vmatpush1.msra.mxu0 0.0
    %5243 = vmatprep.subr.mxu0 0.0
    %5244 = vmatpush1.msra.mxu0 0.0
    %5245 = vmatprep.mubr.f32.mxu0 0.0
    %5246 = vmatmul.mubr.f32.gmra.mrb[0].mxu0 %v5176
    %v5247 = vpop.f32.mrb[0].mxu0
    %v5248 = vadd.f32 0.0, %v5247
    %v5249 = vpop.f32.mrb[0].mxu0
    %5250 = vmatprep.mubr.f32.mxu0 0.0
    %5251 = vmatmul.mubr.f32.gmra.mrb[0].mxu0 %v5179
    %v5252 = vpop.f32.mrb[0].mxu0
    %v5253 = vadd.f32 0.0, %v5252
    %v5254 = vpop.f32.mrb[0].mxu0
    %5255 = vdwg.mxu0
    %v5256 = vsel %vm30, %v5005, 0.0
    %v5257 = vsel %vm30, %v5086, 0.0
    %v5258 = vadd.f32 %v5256, %v5257
    %v5259 = vsel %vm30, %v5167, 0.0
    %v5260 = vadd.f32 %v5258, %v5259
    %v5261 = vsel %vm30, %v5248, 0.0
    %v5262 = vadd.f32 %v5260, %v5261
    %v5263 = vsel %vm30, %v5010, 0.0
    %v5264 = vsel %vm30, %v5091, 0.0
    %v5265 = vadd.f32 %v5263, %v5264
    %v5266 = vsel %vm30, %v5172, 0.0
    %v5267 = vadd.f32 %v5265, %v5266
    %v5268 = vsel %vm30, %v5253, 0.0
    %v5269 = vadd.f32 %v5267, %v5268
    %v5270 = vld [vmem:[%s5] sm:$0xff]
    %v5271 = vld [vmem:[%s5 + $0x8] sm:$0xff]
    %v5272 = vld [vmem:[%s5 + $0x10] sm:$0xff]
    %v5273 = vld [vmem:[%s5 + $0x18] sm:$0xff]
    %v5275 = vsel %vm30, %v5262, 0
    %v5278 = vsel %vm30, %v5269, 0
    %5280 = vmatprep.subr.mxu0 0.0
    %5281 = vmatpush1.msra.mxu0 %v5270
    %5282 = vmatprep.subr.mxu0 0.0
    %5283 = vmatpush1.msra.mxu0 %v5271
    %5284 = vmatprep.subr.mxu0 0.0
    %5285 = vmatpush1.msra.mxu0 %v5272
    %5286 = vmatprep.subr.mxu0 0.0
    %5287 = vmatpush1.msra.mxu0 %v5273
    %5288 = vmatprep.subr.mxu0 0.0
    %5289 = vmatpush1.msra.mxu0 0.0
    %5290 = vmatprep.subr.mxu0 0.0
    %5291 = vmatpush1.msra.mxu0 0.0
    %5292 = vmatprep.subr.mxu0 0.0
    %5293 = vmatpush1.msra.mxu0 0.0
    %5294 = vmatprep.subr.mxu0 0.0
    %5295 = vmatpush1.msra.mxu0 0.0
    %5296 = vmatprep.subr.mxu0 0.0
    %5297 = vmatpush1.msra.mxu0 0.0
    %5298 = vmatprep.subr.mxu0 0.0
    %5299 = vmatpush1.msra.mxu0 0.0
    %5300 = vmatprep.subr.mxu0 0.0
    %5301 = vmatpush1.msra.mxu0 0.0
    %5302 = vmatprep.subr.mxu0 0.0
    %5303 = vmatpush1.msra.mxu0 0.0
    %5304 = vmatprep.subr.mxu0 0.0
    %5305 = vmatpush1.msra.mxu0 0.0
    %5306 = vmatprep.subr.mxu0 0.0
    %5307 = vmatpush1.msra.mxu0 0.0
    %5308 = vmatprep.subr.mxu0 0.0
    %5309 = vmatpush1.msra.mxu0 0.0
    %5310 = vmatprep.subr.mxu0 0.0
    %5311 = vmatpush1.msra.mxu0 0.0
    %5312 = vmatprep.subr.mxu0 0.0
    %5313 = vmatpush1.msra.mxu0 0.0
    %5314 = vmatprep.subr.mxu0 0.0
    %5315 = vmatpush1.msra.mxu0 0.0
    %5316 = vmatprep.subr.mxu0 0.0
    %5317 = vmatpush1.msra.mxu0 0.0
    %5318 = vmatprep.subr.mxu0 0.0
    %5319 = vmatpush1.msra.mxu0 0.0
    %5320 = vmatprep.subr.mxu0 0.0
    %5321 = vmatpush1.msra.mxu0 0.0
    %5322 = vmatprep.subr.mxu0 0.0
    %5323 = vmatpush1.msra.mxu0 0.0
    %5324 = vmatprep.subr.mxu0 0.0
    %5325 = vmatpush1.msra.mxu0 0.0
    %5326 = vmatprep.subr.mxu0 0.0
    %5327 = vmatpush1.msra.mxu0 0.0
    %5328 = vmatprep.subr.mxu0 0.0
    %5329 = vmatpush1.msra.mxu0 0.0
    %5330 = vmatprep.subr.mxu0 0.0
    %5331 = vmatpush1.msra.mxu0 0.0
    %5332 = vmatprep.subr.mxu0 0.0
    %5333 = vmatpush1.msra.mxu0 0.0
    %5334 = vmatprep.subr.mxu0 0.0
    %5335 = vmatpush1.msra.mxu0 0.0
    %5336 = vmatprep.subr.mxu0 0.0
    %5337 = vmatpush1.msra.mxu0 0.0
    %5338 = vmatprep.subr.mxu0 0.0
    %5339 = vmatpush1.msra.mxu0 0.0
    %5340 = vmatprep.subr.mxu0 0.0
    %5341 = vmatpush1.msra.mxu0 0.0
    %5342 = vmatprep.subr.mxu0 0.0
    %5343 = vmatpush1.msra.mxu0 0.0
    %5344 = vmatprep.mubr.f32.mxu0 0.0
    %5345 = vmatmul.mubr.f32.gmra.mrb[0].mxu0 %v5275
    %v5346 = vpop.f32.mrb[0].mxu0
    %v5347 = vadd.f32 0.0, %v5346
    %v5348 = vpop.f32.mrb[0].mxu0
    %5349 = vmatprep.mubr.f32.mxu0 0.0
    %5350 = vmatmul.mubr.f32.gmra.mrb[0].mxu0 %v5278
    %v5351 = vpop.f32.mrb[0].mxu0
    %v5352 = vadd.f32 0.0, %v5351
    %v5353 = vpop.f32.mrb[0].mxu0
    %5354 = vdwg.mxu0
    %5355 = vst.msk [vmem:[#allocation2] sm:$0xff] %vm30, %v5347
    %5356 = vst.msk [vmem:[#allocation2 + $0x8] sm:$0xff] %vm30, %v5352
    // Predicated region
    $region26: #{tpu_custom_call.1} parent=1 // pred_check
      _
    $region27: #{tpu_custom_call.1} parent=1 // pred_check_branch
      %5358 = sbr.rel (0) target = $region29
    $region28: #{tpu_custom_call.1} parent=1 // pred_region
      %s5360 = ssub.s32 256, 256
      %5361 = vsyncadd [#allocation3], %s5360
      %s5362 = sshll.u32 [#allocation2], 4
      %s5363 = int_to_ptr.vmem [resolvable:$true] %s5362
      %5368 = dma.vmem_to_hbm [thread:$0]  %s5363, 256, %s6, [#allocation3], 128, 128, 8
    $region29: #{tpu_custom_call.1} parent=1 // pred_fallthru
      _
    // Predicated region
    $region30: #{tpu_custom_call.1} parent=1 // pred_check
      _
    $region31: #{tpu_custom_call.1} parent=1 // pred_check_branch
      %5370 = sbr.rel (0) target = $region33
    $region32: #{tpu_custom_call.1} parent=1 // pred_region
      %5371 = dma.done [#allocation3], 256
    $region33: #{tpu_custom_call.1} parent=1 // pred_fallthru
      _
    %5372 = vsyncpa [#allocation3], 1

</llo_original>
